<compile_context>
chip_gen: v7x
topology: tpu7x:2x2x1
jax: 0.10.0
libtpu: 0.0.40
codegen_flags: <defaults>
</compile_context>

<pallas_src>
import jax
import jax.numpy as jnp
from jax.experimental import pallas as pl
from jax.experimental.pallas import tpu as pltpu

# ----- model hyper-parameters (small, consistent with the module) -----
NUM_NODES = 8        # num_nodes  (input size of smt2vector LSTM)
INPUT_DIMS = 16      # input_dims (features per node; sequence length of small LSTM)
NUM_SPLITS = 4       # num_temporal_split
GCN_HIDDEN = 16      # gcn_hidden_dims
NODE_EMB = 16        # node_emb_dims
GRAPH_EMB = NODE_EMB # graph_emb_dims must equal node_emb_dims for the torch.cat to work
WINDOW_EMB = 32      # window_emb_dims
SEQ_EMB = 32         # sequence_emb_dims
NUM_CLASSES = 8      # num_classes
FOUR_H = 4 * SEQ_EMB # 128 — LSTM gate width (PyTorch gate order i, f, g, o)

# ----- weight-slab row offsets (all row starts 8-aligned where it matters) -----
W_IH1_R0 = 0                          # (N, 4H)         rows   0:8
W_HH1_R0 = W_IH1_R0 + NUM_NODES       # (H, 4H)         rows   8:40
W_IH2_R0 = W_HH1_R0 + SEQ_EMB         # (WINDOW, 4H)    rows  40:72
W_HH2_R0 = W_IH2_R0 + WINDOW_EMB      # (H, 4H)         rows  72:104
W_C_R0 = W_HH2_R0 + SEQ_EMB           # (H, 128)        rows 104:136 (zero-pad past C)
BIAS_R0 = W_C_R0 + SEQ_EMB            # (8, 128)        rows 136:144 (packed biases)
W_G1_R0 = BIAS_R0 + 8                 # (F, GCN_H)      rows 144:160
W_G2_R0 = W_G1_R0 + INPUT_DIMS        # (GCN_H, NODE)   rows 160:176
W_LS_R0 = W_G2_R0 + GCN_HIDDEN        # (H, WINDOW)     rows 176:208
W_LG_R0 = W_LS_R0 + SEQ_EMB           # (GRAPH, WINDOW) rows 208:224
W_ROWS = W_LG_R0 + GRAPH_EMB          # 224

# ----- activation-slab row offsets -----
A_R0 = 0                                       # (TN, TN)  block-diag A_hat^T, rows 0:32
XN_R0 = A_R0 + NUM_SPLITS * NUM_NODES          # (TN, F)   node features,      rows 32:64
XT_R0 = XN_R0 + NUM_SPLITS * NUM_NODES         # (F*T, N)  time-major feats,   rows 64:128
POOL_R0 = XT_R0 + INPUT_DIMS * NUM_SPLITS      # (T, TN)   mean-pool matrix,   rows 128:132
ACT_ROWS = POOL_R0 + 8                         # 136 (pool padded to 8 rows)


def _lstm_cell(gates, c):
    """One LSTM cell update from pre-activation gates (B, 4H) and cell state (B, H).

    Uses 2 full-width EUP pushes (sigmoid / tanh of the whole gate row) + 1 for
    tanh(c_new), with cheap static lane slices for the gate quarters.
    """
    H = SEQ_EMB
    sg = jax.nn.sigmoid(gates)
    th = jnp.tanh(gates)
    i_g = sg[:, 0:H]
    f_g = sg[:, H:2 * H]
    g_g = th[:, 2 * H:3 * H]
    o_g = sg[:, 3 * H:4 * H]
    c_new = f_g * c + i_g * g_g
    h_new = o_g * jnp.tanh(c_new)
    return h_new, c_new


def mvts_kernel(w_ref,     # (224, 128) packed parameter slab
                act_ref,   # (136, 128) packed activation / layout-constant slab
                out_ref):  # (8, 128)   broadcast log-prob row (real classes in lanes 0:C)
    T, N, F_, H = NUM_SPLITS, NUM_NODES, INPUT_DIMS, SEQ_EMB
    TN = T * N

    # bias block: one aligned (8,128) tile, value-sliced below
    b = w_ref[BIAS_R0:BIAS_R0 + 8, :]
    b1 = b[0:1, :]                       # smt2vector b_ih + b_hh          (1, 4H)
    b2 = b[1:2, :]                       # window2sequence b_ih + b_hh     (1, 4H)
    bg1 = b[2:3, 0:GCN_HIDDEN]           # GCNConv1 bias
    bg2 = b[3:4, 0:NODE_EMB]             # GCNConv2 bias
    bl = b[4:5, 0:WINDOW_EMB]            # seqGraph2window bias
    bc = b[5:6, :]                       # classifier bias, -1e30 past NUM_CLASSES

    # ---------- small LSTM over transposed node attrs, batched over T splits ----------
    # pre1[f*T + t, :] = x[t, :, f] @ W_ih1.T + b ; recurrence carries (T, H) state.
    pre1 = jnp.dot(act_ref[XT_R0:XT_R0 + F_ * T, 0:N],
                   w_ref[W_IH1_R0:W_IH1_R0 + N, :],
                   preferred_element_type=jnp.float32) + b1                  # (F*T, 4H)
    whh1 = w_ref[W_HH1_R0:W_HH1_R0 + H, :]                                   # (H, 4H)
    h1s = jnp.zeros((T, H), jnp.float32)
    c1s = jnp.zeros((T, H), jnp.float32)
    for f in range(F_):                                    # unrolled: static trip count
        gates = pre1[f * T:(f + 1) * T, :] + jnp.dot(
            h1s, whh1, preferred_element_type=jnp.float32)
        h1s, c1s = _lstm_cell(gates, c1s)
    # h1s: (T, H) last hidden per split

    # ------------- GCN batched over splits via block-diagonal A_hat^T -------------
    # A_hat (self-loops folded) is prepared pre-transposed in the wrapper; only the
    # symmetric degree normalization is computed here, factored as
    #   norm_t @ xw = dinv * (A_hat^T @ (dinv * xw)),  dinv = D^{-1/2}.
    a_hat_t = act_ref[A_R0:A_R0 + TN, 0:TN]                                  # (TN, TN)
    deg = jnp.sum(a_hat_t, axis=1, keepdims=True)                            # (TN, 1)
    dinv = jnp.where(deg > 0, jax.lax.rsqrt(deg), 0.0)

    xn = act_ref[XN_R0:XN_R0 + TN, 0:F_]                                     # (TN, F)
    xw1 = dinv * jnp.dot(xn, w_ref[W_G1_R0:W_G1_R0 + F_, 0:GCN_HIDDEN],
                         preferred_element_type=jnp.float32)
    g1 = jnp.maximum(
        dinv * jnp.dot(a_hat_t, xw1, preferred_element_type=jnp.float32) + bg1, 0.0)
    # dropout: identity in eval mode
    xw2 = dinv * jnp.dot(g1, w_ref[W_G2_R0:W_G2_R0 + GCN_HIDDEN, 0:NODE_EMB],
                         preferred_element_type=jnp.float32)
    g2 = jnp.maximum(
        dinv * jnp.dot(a_hat_t, xw2, preferred_element_type=jnp.float32) + bg2, 0.0)

    # per-split mean pool via a single (T, TN) matmul (pool matrix prebuilt in wrapper)
    graph_vecs = jnp.dot(act_ref[POOL_R0:POOL_R0 + T, 0:TN], g2,
                         preferred_element_type=jnp.float32)                 # (T, GRAPH_EMB)

    # ---------- cat(h_small, graph_vec) @ W + b, ReLU (batched over T) ----------
    win = jnp.maximum(
        jnp.dot(h1s, w_ref[W_LS_R0:W_LS_R0 + SEQ_EMB, 0:WINDOW_EMB],
                preferred_element_type=jnp.float32)
        + jnp.dot(graph_vecs, w_ref[W_LG_R0:W_LG_R0 + GRAPH_EMB, 0:WINDOW_EMB],
                  preferred_element_type=jnp.float32)
        + bl, 0.0)                                                           # (T, WINDOW_EMB)

    # ---------------- outer LSTM over the T window vectors ----------------
    pre2 = jnp.dot(win, w_ref[W_IH2_R0:W_IH2_R0 + WINDOW_EMB, :],
                   preferred_element_type=jnp.float32) + b2                  # (T, 4H)
    whh2 = w_ref[W_HH2_R0:W_HH2_R0 + H, :]
    h2s = jnp.zeros((1, H), jnp.float32)
    c2s = jnp.zeros((1, H), jnp.float32)
    for t in range(T):                                     # unrolled: static trip count
        gates = pre2[t:t + 1, :] + jnp.dot(
            h2s, whh2, preferred_element_type=jnp.float32)
        h2s, c2s = _lstm_cell(gates, c2s)

    # ---------------- classifier + log_softmax (lane-padded to 128) ----------------
    logits = jnp.dot(h2s, w_ref[W_C_R0:W_C_R0 + SEQ_EMB, :],
                     preferred_element_type=jnp.float32) + bc                # (1, 128)
    m = jnp.max(logits, axis=1, keepdims=True)
    z = logits - m
    lse = jnp.log(jnp.sum(jnp.exp(z), axis=1, keepdims=True))
    out_ref[...] = jnp.broadcast_to(z - lse, (8, 128))      # lane/sublane-dense store


def mvts_forward_pallas(adj, x, params):
    (wih1, whh1, b1, wg1, bg1, wg2, bg2, wls, wlg, bl,
     wih2, whh2, b2, wc, bc) = params
    T, N, _ = adj.shape
    F_ = x.shape[2]
    TN = T * N

    # ---- weight slab (pure layout plumbing, outside the kernel) ----
    w = jnp.zeros((W_ROWS, 128), jnp.float32)
    w = w.at[W_IH1_R0:W_IH1_R0 + N, :].set(wih1)
    w = w.at[W_HH1_R0:W_HH1_R0 + SEQ_EMB, :].set(whh1)
    w = w.at[W_IH2_R0:W_IH2_R0 + WINDOW_EMB, :].set(wih2)
    w = w.at[W_HH2_R0:W_HH2_R0 + SEQ_EMB, :].set(whh2)
    w = w.at[W_C_R0:W_C_R0 + SEQ_EMB, 0:NUM_CLASSES].set(wc)
    w = w.at[BIAS_R0 + 0, :].set(b1[0])
    w = w.at[BIAS_R0 + 1, :].set(b2[0])
    w = w.at[BIAS_R0 + 2, 0:GCN_HIDDEN].set(bg1[0])
    w = w.at[BIAS_R0 + 3, 0:NODE_EMB].set(bg2[0])
    w = w.at[BIAS_R0 + 4, 0:WINDOW_EMB].set(bl[0])
    w = w.at[BIAS_R0 + 5, :].set(
        jnp.full((128,), -1e30, jnp.float32).at[:NUM_CLASSES].set(bc[0]))
    w = w.at[W_G1_R0:W_G1_R0 + INPUT_DIMS, 0:GCN_HIDDEN].set(wg1)
    w = w.at[W_G2_R0:W_G2_R0 + GCN_HIDDEN, 0:NODE_EMB].set(wg2)
    w = w.at[W_LS_R0:W_LS_R0 + SEQ_EMB, 0:WINDOW_EMB].set(wls)
    w = w.at[W_LG_R0:W_LG_R0 + GRAPH_EMB, 0:WINDOW_EMB].set(wlg)

    # ---- activation slab: block-diag self-looped A_hat^T, node feats, time-major feats, pool ----
    a_pos = jnp.where(adj > 0, adj, 0.0)                                 # (T, N, N)
    diag = jnp.diagonal(a_pos, axis1=1, axis2=2)                         # (T, N)
    a_hat = a_pos + (jnp.eye(N, dtype=jnp.float32)[None]
                     * jnp.where(diag > 0, 0.0, 1.0)[:, :, None])        # add_remaining_self_loops
    a_bd_t = jnp.zeros((TN, TN), jnp.float32)
    pool = jnp.zeros((T, TN), jnp.float32)
    for t in range(T):
        a_bd_t = a_bd_t.at[t * N:(t + 1) * N, t * N:(t + 1) * N].set(a_hat[t].T)
        pool = pool.at[t, t * N:(t + 1) * N].set(1.0 / N)

    act = jnp.zeros((ACT_ROWS, 128), jnp.float32)
    act = act.at[A_R0:A_R0 + TN, 0:TN].set(a_bd_t)
    act = act.at[XN_R0:XN_R0 + TN, 0:F_].set(x.reshape(TN, F_))
    act = act.at[XT_R0:XT_R0 + F_ * T, 0:N].set(
        jnp.transpose(x, (2, 0, 1)).reshape(F_ * T, N))
    act = act.at[POOL_R0:POOL_R0 + T, 0:TN].set(pool)

    out = pl.pallas_call(
        mvts_kernel,
        out_shape=jax.ShapeDtypeStruct((8, 128), jnp.float32),
        grid=(1,),
        in_specs=[pl.BlockSpec((W_ROWS, 128), lambda i: (0, 0)),
                  pl.BlockSpec((ACT_ROWS, 128), lambda i: (0, 0))],
        out_specs=pl.BlockSpec((8, 128), lambda i: (0, 0)),
        compiler_params=pltpu.CompilerParams(
            dimension_semantics=("arbitrary",)),
    )(w, act)
    return out[0:1, :NUM_CLASSES]


# ------------------------- deterministic parameter init -------------------------
def init_params(key):
    ks = jax.random.split(key, 15)

    def w(k, shape, scale=0.1):
        return scale * jax.random.normal(k, shape, jnp.float32)

    four_s = 4 * SEQ_EMB
    return [
        w(ks[0], (NUM_NODES, four_s)),       # smt2vector  W_ih.T
        w(ks[1], (SEQ_EMB, four_s)),         # smt2vector  W_hh.T
        w(ks[2], (1, four_s)),               # smt2vector  b_ih + b_hh
        w(ks[3], (INPUT_DIMS, GCN_HIDDEN)),  # GCNConv1 weight (in, out)
        w(ks[4], (1, GCN_HIDDEN)),           # GCNConv1 bias
        w(ks[5], (GCN_HIDDEN, NODE_EMB)),    # GCNConv2 weight
        w(ks[6], (1, NODE_EMB)),             # GCNConv2 bias
        w(ks[7], (SEQ_EMB, WINDOW_EMB)),     # seqGraph2window W.T, sequence half
        w(ks[8], (GRAPH_EMB, WINDOW_EMB)),   # seqGraph2window W.T, graph half
        w(ks[9], (1, WINDOW_EMB)),           # seqGraph2window bias
        w(ks[10], (WINDOW_EMB, four_s)),     # window2sequence W_ih.T
        w(ks[11], (SEQ_EMB, four_s)),        # window2sequence W_hh.T
        w(ks[12], (1, four_s)),              # window2sequence b_ih + b_hh
        w(ks[13], (SEQ_EMB, NUM_CLASSES)),   # sequence2class_space W.T
        w(ks[14], (1, NUM_CLASSES)),         # sequence2class_space bias
    ]


# --------------------------- plain-JAX reference check ---------------------------
def reference_forward(adj, x, params):
    (wih1, whh1, b1, wg1, bg1, wg2, bg2, wls, wlg, bl,
     wih2, whh2, b2, wc, bc) = params
    T = adj.shape[0]
    hp = jax.lax.Precision.HIGHEST

    def lstm_last(pre, whh):
        hidden = whh.shape[0]

        def step(carry, pre_t):
            h, c = carry
            gates = pre_t + jnp.dot(h, whh, precision=hp)
            i = jax.nn.sigmoid(gates[:, :hidden])
            f = jax.nn.sigmoid(gates[:, hidden:2 * hidden])
            g = jnp.tanh(gates[:, 2 * hidden:3 * hidden])
            o = jax.nn.sigmoid(gates[:, 3 * hidden:])
            c = f * c + i * g
            h = o * jnp.tanh(c)
            return (h, c), None

        init = (jnp.zeros((1, hidden), jnp.float32),
                jnp.zeros((1, hidden), jnp.float32))
        (h, _), _ = jax.lax.scan(step, init, pre[:, None, :])
        return h

    windows = []
    for j in range(T):
        a = adj[j]
        xj = x[j]
        pre1 = jnp.dot(xj.T, wih1, precision=hp) + b1
        h_small = lstm_last(pre1, whh1)
        a_m = jnp.where(a > 0, a, 0.0)
        diag = jnp.diag(a_m)
        a_hat = a_m + jnp.diag(jnp.where(diag > 0, 0.0, 1.0))
        deg = jnp.sum(a_hat, axis=0)
        dinv = jnp.where(deg > 0, 1.0 / jnp.sqrt(deg), 0.0)
        norm_t = (dinv[:, None] * a_hat * dinv[None, :]).T
        h1 = jax.nn.relu(jnp.dot(norm_t, jnp.dot(xj, wg1, precision=hp), precision=hp) + bg1)
        h2 = jax.nn.relu(jnp.dot(norm_t, jnp.dot(h1, wg2, precision=hp), precision=hp) + bg2)
        gv = jnp.mean(h2, axis=0, keepdims=True)
        win = jax.nn.relu(jnp.dot(h_small, wls, precision=hp)
                          + jnp.dot(gv, wlg, precision=hp) + bl)
        windows.append(win[0])
    seqvec = jnp.stack(windows, axis=0)
    pre2 = jnp.dot(seqvec, wih2, precision=hp) + b2
    h_seq = lstm_last(pre2, whh2)
    logits = jnp.dot(h_seq, wc, precision=hp) + bc
    return jax.nn.log_softmax(logits, axis=1)


if __name__ == "__main__":
    key = jax.random.PRNGKey(0)
    k_adj, k_x, k_p = jax.random.split(key, 3)

    # sparse-ish positive adjacency, zero diagonal (self loops added inside the GCN)
    u = jax.random.uniform(k_adj, (NUM_SPLITS, NUM_NODES, NUM_NODES), jnp.float32)
    adj = jnp.where(u > 0.5, u, 0.0)
    adj = adj * (1.0 - jnp.eye(NUM_NODES, dtype=jnp.float32)[None])
    node_att = jax.random.normal(k_x, (NUM_SPLITS, NUM_NODES, INPUT_DIMS), jnp.float32)

    params = init_params(k_p)

    fwd = jax.jit(mvts_forward_pallas)
    out = jax.block_until_ready(fwd(adj, node_att, params))
    ref = jax.block_until_ready(reference_forward(adj, node_att, params))

    assert out.shape == (1, NUM_CLASSES)
    assert bool(jnp.all(jnp.isfinite(out)))
    assert bool(jnp.allclose(out, ref, atol=5e-2, rtol=5e-2)), (out, ref)
    print("KERNEL_OK")
</pallas_src>

<mosaic_0001>
module attributes {stable_mosaic.version = 11 : i64} {
  func.func @mvts_kernel(%arg0: i32, %arg1: memref<224x128xf32, #tpu.memory_space<vmem>>, %arg2: memref<136x128xf32, #tpu.memory_space<vmem>>, %arg3: memref<8x128xf32, #tpu.memory_space<vmem>>) attributes {dimension_semantics = [#tpu.dimension_semantics<arbitrary>], iteration_bounds = array<i64: 1>, scalar_prefetch = 0 : i64, scratch_operands = 0 : i64, tpu.core_type = #tpu.core_type<tc>, window_params = [{pipeline_mode = #tpu.pipeline_mode<synchronous>, transform_indices = @transform_0, window_bounds = array<i64: 224, 128>}, {pipeline_mode = #tpu.pipeline_mode<synchronous>, transform_indices = @transform_1, window_bounds = array<i64: 136, 128>}, {pipeline_mode = #tpu.pipeline_mode<synchronous>, transform_indices = @transform_2, window_bounds = array<i64: 8, 128>}]} {
    %c136 = arith.constant 136 : index
    %c0 = arith.constant 0 : index
    %0 = vector.load %arg1[%c136, %c0] : memref<224x128xf32, #tpu.memory_space<vmem>>, vector<8x128xf32>
    %1 = vector.extract_strided_slice %0 {offsets = [0, 0], sizes = [1, 128], strides = [1, 1]} : vector<8x128xf32> to vector<1x128xf32>
    %2 = vector.extract_strided_slice %0 {offsets = [1, 0], sizes = [1, 128], strides = [1, 1]} : vector<8x128xf32> to vector<1x128xf32>
    %3 = vector.extract_strided_slice %0 {offsets = [2, 0], sizes = [1, 16], strides = [1, 1]} : vector<8x128xf32> to vector<1x16xf32>
    %4 = vector.extract_strided_slice %0 {offsets = [3, 0], sizes = [1, 16], strides = [1, 1]} : vector<8x128xf32> to vector<1x16xf32>
    %5 = vector.extract_strided_slice %0 {offsets = [4, 0], sizes = [1, 32], strides = [1, 1]} : vector<8x128xf32> to vector<1x32xf32>
    %6 = vector.extract_strided_slice %0 {offsets = [5, 0], sizes = [1, 128], strides = [1, 1]} : vector<8x128xf32> to vector<1x128xf32>
    %c64 = arith.constant 64 : index
    %c0_0 = arith.constant 0 : index
    %7 = vector.load %arg2[%c64, %c0_0] : memref<136x128xf32, #tpu.memory_space<vmem>>, vector<64x8xf32>
    %c0_1 = arith.constant 0 : index
    %c0_2 = arith.constant 0 : index
    %8 = vector.load %arg1[%c0_1, %c0_2] : memref<224x128xf32, #tpu.memory_space<vmem>>, vector<8x128xf32>
    %cst = arith.constant dense<0.000000e+00> : vector<64x128xf32>
    %9 = tpu.matmul %7, %8, %cst {dimension_numbers = #tpu.dot_dimension_numbers<[1], [0], [0], [1], [0, 0, 1, 1], [], []>} : vector<64x8xf32>, vector<8x128xf32>, vector<64x128xf32> -> vector<64x128xf32>
    %10 = vector.broadcast %1 : vector<1x128xf32> to vector<64x128xf32>
    %11 = arith.addf %9, %10 : vector<64x128xf32>
    %c8 = arith.constant 8 : index
    %c0_3 = arith.constant 0 : index
    %12 = vector.load %arg1[%c8, %c0_3] : memref<224x128xf32, #tpu.memory_space<vmem>>, vector<32x128xf32>
    %cst_4 = arith.constant 0.000000e+00 : f32
    %13 = vector.broadcast %cst_4 : f32 to vector<4x32xf32>
    %cst_5 = arith.constant 0.000000e+00 : f32
    %14 = vector.broadcast %cst_5 : f32 to vector<4x32xf32>
    %15 = vector.extract_strided_slice %11 {offsets = [0, 0], sizes = [4, 128], strides = [1, 1]} : vector<64x128xf32> to vector<4x128xf32>
    %cst_6 = arith.constant dense<0.000000e+00> : vector<4x128xf32>
    %16 = tpu.matmul %13, %12, %cst_6 {dimension_numbers = #tpu.dot_dimension_numbers<[1], [0], [0], [1], [0, 0, 1, 1], [], []>} : vector<4x32xf32>, vector<32x128xf32>, vector<4x128xf32> -> vector<4x128xf32>
    %17 = arith.addf %15, %16 : vector<4x128xf32>
    %18 = arith.negf %17 : vector<4x128xf32>
    %19 = math.exp %18 : vector<4x128xf32>
    %cst_7 = arith.constant 1.000000e+00 : f32
    %20 = vector.broadcast %cst_7 : f32 to vector<4x128xf32>
    %21 = arith.addf %20, %19 : vector<4x128xf32>
    %22 = arith.divf %20, %21 : vector<4x128xf32>
    %23 = math.tanh %17 : vector<4x128xf32>
    %24 = vector.extract_strided_slice %22 {offsets = [0, 0], sizes = [4, 32], strides = [1, 1]} : vector<4x128xf32> to vector<4x32xf32>
    %25 = vector.extract_strided_slice %22 {offsets = [0, 32], sizes = [4, 32], strides = [1, 1]} : vector<4x128xf32> to vector<4x32xf32>
    %26 = vector.extract_strided_slice %23 {offsets = [0, 64], sizes = [4, 32], strides = [1, 1]} : vector<4x128xf32> to vector<4x32xf32>
    %27 = vector.extract_strided_slice %22 {offsets = [0, 96], sizes = [4, 32], strides = [1, 1]} : vector<4x128xf32> to vector<4x32xf32>
    %28 = arith.mulf %25, %14 : vector<4x32xf32>
    %29 = arith.mulf %24, %26 : vector<4x32xf32>
    %30 = arith.addf %28, %29 : vector<4x32xf32>
    %31 = math.tanh %30 : vector<4x32xf32>
    %32 = arith.mulf %27, %31 : vector<4x32xf32>
    %33 = vector.extract_strided_slice %11 {offsets = [4, 0], sizes = [4, 128], strides = [1, 1]} : vector<64x128xf32> to vector<4x128xf32>
    %cst_8 = arith.constant dense<0.000000e+00> : vector<4x128xf32>
    %34 = tpu.matmul %32, %12, %cst_8 {dimension_numbers = #tpu.dot_dimension_numbers<[1], [0], [0], [1], [0, 0, 1, 1], [], []>} : vector<4x32xf32>, vector<32x128xf32>, vector<4x128xf32> -> vector<4x128xf32>
    %35 = arith.addf %33, %34 : vector<4x128xf32>
    %36 = arith.negf %35 : vector<4x128xf32>
    %37 = math.exp %36 : vector<4x128xf32>
    %cst_9 = arith.constant 1.000000e+00 : f32
    %38 = vector.broadcast %cst_9 : f32 to vector<4x128xf32>
    %39 = arith.addf %38, %37 : vector<4x128xf32>
    %40 = arith.divf %38, %39 : vector<4x128xf32>
    %41 = math.tanh %35 : vector<4x128xf32>
    %42 = vector.extract_strided_slice %40 {offsets = [0, 0], sizes = [4, 32], strides = [1, 1]} : vector<4x128xf32> to vector<4x32xf32>
    %43 = vector.extract_strided_slice %40 {offsets = [0, 32], sizes = [4, 32], strides = [1, 1]} : vector<4x128xf32> to vector<4x32xf32>
    %44 = vector.extract_strided_slice %41 {offsets = [0, 64], sizes = [4, 32], strides = [1, 1]} : vector<4x128xf32> to vector<4x32xf32>
    %45 = vector.extract_strided_slice %40 {offsets = [0, 96], sizes = [4, 32], strides = [1, 1]} : vector<4x128xf32> to vector<4x32xf32>
    %46 = arith.mulf %43, %30 : vector<4x32xf32>
    %47 = arith.mulf %42, %44 : vector<4x32xf32>
    %48 = arith.addf %46, %47 : vector<4x32xf32>
    %49 = math.tanh %48 : vector<4x32xf32>
    %50 = arith.mulf %45, %49 : vector<4x32xf32>
    %51 = vector.extract_strided_slice %11 {offsets = [8, 0], sizes = [4, 128], strides = [1, 1]} : vector<64x128xf32> to vector<4x128xf32>
    %cst_10 = arith.constant dense<0.000000e+00> : vector<4x128xf32>
    %52 = tpu.matmul %50, %12, %cst_10 {dimension_numbers = #tpu.dot_dimension_numbers<[1], [0], [0], [1], [0, 0, 1, 1], [], []>} : vector<4x32xf32>, vector<32x128xf32>, vector<4x128xf32> -> vector<4x128xf32>
    %53 = arith.addf %51, %52 : vector<4x128xf32>
    %54 = arith.negf %53 : vector<4x128xf32>
    %55 = math.exp %54 : vector<4x128xf32>
    %cst_11 = arith.constant 1.000000e+00 : f32
    %56 = vector.broadcast %cst_11 : f32 to vector<4x128xf32>
    %57 = arith.addf %56, %55 : vector<4x128xf32>
    %58 = arith.divf %56, %57 : vector<4x128xf32>
    %59 = math.tanh %53 : vector<4x128xf32>
    %60 = vector.extract_strided_slice %58 {offsets = [0, 0], sizes = [4, 32], strides = [1, 1]} : vector<4x128xf32> to vector<4x32xf32>
    %61 = vector.extract_strided_slice %58 {offsets = [0, 32], sizes = [4, 32], strides = [1, 1]} : vector<4x128xf32> to vector<4x32xf32>
    %62 = vector.extract_strided_slice %59 {offsets = [0, 64], sizes = [4, 32], strides = [1, 1]} : vector<4x128xf32> to vector<4x32xf32>
    %63 = vector.extract_strided_slice %58 {offsets = [0, 96], sizes = [4, 32], strides = [1, 1]} : vector<4x128xf32> to vector<4x32xf32>
    %64 = arith.mulf %61, %48 : vector<4x32xf32>
    %65 = arith.mulf %60, %62 : vector<4x32xf32>
    %66 = arith.addf %64, %65 : vector<4x32xf32>
    %67 = math.tanh %66 : vector<4x32xf32>
    %68 = arith.mulf %63, %67 : vector<4x32xf32>
    %69 = vector.extract_strided_slice %11 {offsets = [12, 0], sizes = [4, 128], strides = [1, 1]} : vector<64x128xf32> to vector<4x128xf32>
    %cst_12 = arith.constant dense<0.000000e+00> : vector<4x128xf32>
    %70 = tpu.matmul %68, %12, %cst_12 {dimension_numbers = #tpu.dot_dimension_numbers<[1], [0], [0], [1], [0, 0, 1, 1], [], []>} : vector<4x32xf32>, vector<32x128xf32>, vector<4x128xf32> -> vector<4x128xf32>
    %71 = arith.addf %69, %70 : vector<4x128xf32>
    %72 = arith.negf %71 : vector<4x128xf32>
    %73 = math.exp %72 : vector<4x128xf32>
    %cst_13 = arith.constant 1.000000e+00 : f32
    %74 = vector.broadcast %cst_13 : f32 to vector<4x128xf32>
    %75 = arith.addf %74, %73 : vector<4x128xf32>
    %76 = arith.divf %74, %75 : vector<4x128xf32>
    %77 = math.tanh %71 : vector<4x128xf32>
    %78 = vector.extract_strided_slice %76 {offsets = [0, 0], sizes = [4, 32], strides = [1, 1]} : vector<4x128xf32> to vector<4x32xf32>
    %79 = vector.extract_strided_slice %76 {offsets = [0, 32], sizes = [4, 32], strides = [1, 1]} : vector<4x128xf32> to vector<4x32xf32>
    %80 = vector.extract_strided_slice %77 {offsets = [0, 64], sizes = [4, 32], strides = [1, 1]} : vector<4x128xf32> to vector<4x32xf32>
    %81 = vector.extract_strided_slice %76 {offsets = [0, 96], sizes = [4, 32], strides = [1, 1]} : vector<4x128xf32> to vector<4x32xf32>
    %82 = arith.mulf %79, %66 : vector<4x32xf32>
    %83 = arith.mulf %78, %80 : vector<4x32xf32>
    %84 = arith.addf %82, %83 : vector<4x32xf32>
    %85 = math.tanh %84 : vector<4x32xf32>
    %86 = arith.mulf %81, %85 : vector<4x32xf32>
    %87 = vector.extract_strided_slice %11 {offsets = [16, 0], sizes = [4, 128], strides = [1, 1]} : vector<64x128xf32> to vector<4x128xf32>
    %cst_14 = arith.constant dense<0.000000e+00> : vector<4x128xf32>
    %88 = tpu.matmul %86, %12, %cst_14 {dimension_numbers = #tpu.dot_dimension_numbers<[1], [0], [0], [1], [0, 0, 1, 1], [], []>} : vector<4x32xf32>, vector<32x128xf32>, vector<4x128xf32> -> vector<4x128xf32>
    %89 = arith.addf %87, %88 : vector<4x128xf32>
    %90 = arith.negf %89 : vector<4x128xf32>
    %91 = math.exp %90 : vector<4x128xf32>
    %cst_15 = arith.constant 1.000000e+00 : f32
    %92 = vector.broadcast %cst_15 : f32 to vector<4x128xf32>
    %93 = arith.addf %92, %91 : vector<4x128xf32>
    %94 = arith.divf %92, %93 : vector<4x128xf32>
    %95 = math.tanh %89 : vector<4x128xf32>
    %96 = vector.extract_strided_slice %94 {offsets = [0, 0], sizes = [4, 32], strides = [1, 1]} : vector<4x128xf32> to vector<4x32xf32>
    %97 = vector.extract_strided_slice %94 {offsets = [0, 32], sizes = [4, 32], strides = [1, 1]} : vector<4x128xf32> to vector<4x32xf32>
    %98 = vector.extract_strided_slice %95 {offsets = [0, 64], sizes = [4, 32], strides = [1, 1]} : vector<4x128xf32> to vector<4x32xf32>
    %99 = vector.extract_strided_slice %94 {offsets = [0, 96], sizes = [4, 32], strides = [1, 1]} : vector<4x128xf32> to vector<4x32xf32>
    %100 = arith.mulf %97, %84 : vector<4x32xf32>
    %101 = arith.mulf %96, %98 : vector<4x32xf32>
    %102 = arith.addf %100, %101 : vector<4x32xf32>
    %103 = math.tanh %102 : vector<4x32xf32>
    %104 = arith.mulf %99, %103 : vector<4x32xf32>
    %105 = vector.extract_strided_slice %11 {offsets = [20, 0], sizes = [4, 128], strides = [1, 1]} : vector<64x128xf32> to vector<4x128xf32>
    %cst_16 = arith.constant dense<0.000000e+00> : vector<4x128xf32>
    %106 = tpu.matmul %104, %12, %cst_16 {dimension_numbers = #tpu.dot_dimension_numbers<[1], [0], [0], [1], [0, 0, 1, 1], [], []>} : vector<4x32xf32>, vector<32x128xf32>, vector<4x128xf32> -> vector<4x128xf32>
    %107 = arith.addf %105, %106 : vector<4x128xf32>
    %108 = arith.negf %107 : vector<4x128xf32>
    %109 = math.exp %108 : vector<4x128xf32>
    %cst_17 = arith.constant 1.000000e+00 : f32
    %110 = vector.broadcast %cst_17 : f32 to vector<4x128xf32>
    %111 = arith.addf %110, %109 : vector<4x128xf32>
    %112 = arith.divf %110, %111 : vector<4x128xf32>
    %113 = math.tanh %107 : vector<4x128xf32>
    %114 = vector.extract_strided_slice %112 {offsets = [0, 0], sizes = [4, 32], strides = [1, 1]} : vector<4x128xf32> to vector<4x32xf32>
    %115 = vector.extract_strided_slice %112 {offsets = [0, 32], sizes = [4, 32], strides = [1, 1]} : vector<4x128xf32> to vector<4x32xf32>
    %116 = vector.extract_strided_slice %113 {offsets = [0, 64], sizes = [4, 32], strides = [1, 1]} : vector<4x128xf32> to vector<4x32xf32>
    %117 = vector.extract_strided_slice %112 {offsets = [0, 96], sizes = [4, 32], strides = [1, 1]} : vector<4x128xf32> to vector<4x32xf32>
    %118 = arith.mulf %115, %102 : vector<4x32xf32>
    %119 = arith.mulf %114, %116 : vector<4x32xf32>
    %120 = arith.addf %118, %119 : vector<4x32xf32>
    %121 = math.tanh %120 : vector<4x32xf32>
    %122 = arith.mulf %117, %121 : vector<4x32xf32>
    %123 = vector.extract_strided_slice %11 {offsets = [24, 0], sizes = [4, 128], strides = [1, 1]} : vector<64x128xf32> to vector<4x128xf32>
    %cst_18 = arith.constant dense<0.000000e+00> : vector<4x128xf32>
    %124 = tpu.matmul %122, %12, %cst_18 {dimension_numbers = #tpu.dot_dimension_numbers<[1], [0], [0], [1], [0, 0, 1, 1], [], []>} : vector<4x32xf32>, vector<32x128xf32>, vector<4x128xf32> -> vector<4x128xf32>
    %125 = arith.addf %123, %124 : vector<4x128xf32>
    %126 = arith.negf %125 : vector<4x128xf32>
    %127 = math.exp %126 : vector<4x128xf32>
    %cst_19 = arith.constant 1.000000e+00 : f32
    %128 = vector.broadcast %cst_19 : f32 to vector<4x128xf32>
    %129 = arith.addf %128, %127 : vector<4x128xf32>
    %130 = arith.divf %128, %129 : vector<4x128xf32>
    %131 = math.tanh %125 : vector<4x128xf32>
    %132 = vector.extract_strided_slice %130 {offsets = [0, 0], sizes = [4, 32], strides = [1, 1]} : vector<4x128xf32> to vector<4x32xf32>
    %133 = vector.extract_strided_slice %130 {offsets = [0, 32], sizes = [4, 32], strides = [1, 1]} : vector<4x128xf32> to vector<4x32xf32>
    %134 = vector.extract_strided_slice %131 {offsets = [0, 64], sizes = [4, 32], strides = [1, 1]} : vector<4x128xf32> to vector<4x32xf32>
    %135 = vector.extract_strided_slice %130 {offsets = [0, 96], sizes = [4, 32], strides = [1, 1]} : vector<4x128xf32> to vector<4x32xf32>
    %136 = arith.mulf %133, %120 : vector<4x32xf32>
    %137 = arith.mulf %132, %134 : vector<4x32xf32>
    %138 = arith.addf %136, %137 : vector<4x32xf32>
    %139 = math.tanh %138 : vector<4x32xf32>
    %140 = arith.mulf %135, %139 : vector<4x32xf32>
    %141 = vector.extract_strided_slice %11 {offsets = [28, 0], sizes = [4, 128], strides = [1, 1]} : vector<64x128xf32> to vector<4x128xf32>
    %cst_20 = arith.constant dense<0.000000e+00> : vector<4x128xf32>
    %142 = tpu.matmul %140, %12, %cst_20 {dimension_numbers = #tpu.dot_dimension_numbers<[1], [0], [0], [1], [0, 0, 1, 1], [], []>} : vector<4x32xf32>, vector<32x128xf32>, vector<4x128xf32> -> vector<4x128xf32>
    %143 = arith.addf %141, %142 : vector<4x128xf32>
    %144 = arith.negf %143 : vector<4x128xf32>
    %145 = math.exp %144 : vector<4x128xf32>
    %cst_21 = arith.constant 1.000000e+00 : f32
    %146 = vector.broadcast %cst_21 : f32 to vector<4x128xf32>
    %147 = arith.addf %146, %145 : vector<4x128xf32>
    %148 = arith.divf %146, %147 : vector<4x128xf32>
    %149 = math.tanh %143 : vector<4x128xf32>
    %150 = vector.extract_strided_slice %148 {offsets = [0, 0], sizes = [4, 32], strides = [1, 1]} : vector<4x128xf32> to vector<4x32xf32>
    %151 = vector.extract_strided_slice %148 {offsets = [0, 32], sizes = [4, 32], strides = [1, 1]} : vector<4x128xf32> to vector<4x32xf32>
    %152 = vector.extract_strided_slice %149 {offsets = [0, 64], sizes = [4, 32], strides = [1, 1]} : vector<4x128xf32> to vector<4x32xf32>
    %153 = vector.extract_strided_slice %148 {offsets = [0, 96], sizes = [4, 32], strides = [1, 1]} : vector<4x128xf32> to vector<4x32xf32>
    %154 = arith.mulf %151, %138 : vector<4x32xf32>
    %155 = arith.mulf %150, %152 : vector<4x32xf32>
    %156 = arith.addf %154, %155 : vector<4x32xf32>
    %157 = math.tanh %156 : vector<4x32xf32>
    %158 = arith.mulf %153, %157 : vector<4x32xf32>
    %159 = vector.extract_strided_slice %11 {offsets = [32, 0], sizes = [4, 128], strides = [1, 1]} : vector<64x128xf32> to vector<4x128xf32>
    %cst_22 = arith.constant dense<0.000000e+00> : vector<4x128xf32>
    %160 = tpu.matmul %158, %12, %cst_22 {dimension_numbers = #tpu.dot_dimension_numbers<[1], [0], [0], [1], [0, 0, 1, 1], [], []>} : vector<4x32xf32>, vector<32x128xf32>, vector<4x128xf32> -> vector<4x128xf32>
    %161 = arith.addf %159, %160 : vector<4x128xf32>
    %162 = arith.negf %161 : vector<4x128xf32>
    %163 = math.exp %162 : vector<4x128xf32>
    %cst_23 = arith.constant 1.000000e+00 : f32
    %164 = vector.broadcast %cst_23 : f32 to vector<4x128xf32>
    %165 = arith.addf %164, %163 : vector<4x128xf32>
    %166 = arith.divf %164, %165 : vector<4x128xf32>
    %167 = math.tanh %161 : vector<4x128xf32>
    %168 = vector.extract_strided_slice %166 {offsets = [0, 0], sizes = [4, 32], strides = [1, 1]} : vector<4x128xf32> to vector<4x32xf32>
    %169 = vector.extract_strided_slice %166 {offsets = [0, 32], sizes = [4, 32], strides = [1, 1]} : vector<4x128xf32> to vector<4x32xf32>
    %170 = vector.extract_strided_slice %167 {offsets = [0, 64], sizes = [4, 32], strides = [1, 1]} : vector<4x128xf32> to vector<4x32xf32>
    %171 = vector.extract_strided_slice %166 {offsets = [0, 96], sizes = [4, 32], strides = [1, 1]} : vector<4x128xf32> to vector<4x32xf32>
    %172 = arith.mulf %169, %156 : vector<4x32xf32>
    %173 = arith.mulf %168, %170 : vector<4x32xf32>
    %174 = arith.addf %172, %173 : vector<4x32xf32>
    %175 = math.tanh %174 : vector<4x32xf32>
    %176 = arith.mulf %171, %175 : vector<4x32xf32>
    %177 = vector.extract_strided_slice %11 {offsets = [36, 0], sizes = [4, 128], strides = [1, 1]} : vector<64x128xf32> to vector<4x128xf32>
    %cst_24 = arith.constant dense<0.000000e+00> : vector<4x128xf32>
    %178 = tpu.matmul %176, %12, %cst_24 {dimension_numbers = #tpu.dot_dimension_numbers<[1], [0], [0], [1], [0, 0, 1, 1], [], []>} : vector<4x32xf32>, vector<32x128xf32>, vector<4x128xf32> -> vector<4x128xf32>
    %179 = arith.addf %177, %178 : vector<4x128xf32>
    %180 = arith.negf %179 : vector<4x128xf32>
    %181 = math.exp %180 : vector<4x128xf32>
    %cst_25 = arith.constant 1.000000e+00 : f32
    %182 = vector.broadcast %cst_25 : f32 to vector<4x128xf32>
    %183 = arith.addf %182, %181 : vector<4x128xf32>
    %184 = arith.divf %182, %183 : vector<4x128xf32>
    %185 = math.tanh %179 : vector<4x128xf32>
    %186 = vector.extract_strided_slice %184 {offsets = [0, 0], sizes = [4, 32], strides = [1, 1]} : vector<4x128xf32> to vector<4x32xf32>
    %187 = vector.extract_strided_slice %184 {offsets = [0, 32], sizes = [4, 32], strides = [1, 1]} : vector<4x128xf32> to vector<4x32xf32>
    %188 = vector.extract_strided_slice %185 {offsets = [0, 64], sizes = [4, 32], strides = [1, 1]} : vector<4x128xf32> to vector<4x32xf32>
    %189 = vector.extract_strided_slice %184 {offsets = [0, 96], sizes = [4, 32], strides = [1, 1]} : vector<4x128xf32> to vector<4x32xf32>
    %190 = arith.mulf %187, %174 : vector<4x32xf32>
    %191 = arith.mulf %186, %188 : vector<4x32xf32>
    %192 = arith.addf %190, %191 : vector<4x32xf32>
    %193 = math.tanh %192 : vector<4x32xf32>
    %194 = arith.mulf %189, %193 : vector<4x32xf32>
    %195 = vector.extract_strided_slice %11 {offsets = [40, 0], sizes = [4, 128], strides = [1, 1]} : vector<64x128xf32> to vector<4x128xf32>
    %cst_26 = arith.constant dense<0.000000e+00> : vector<4x128xf32>
    %196 = tpu.matmul %194, %12, %cst_26 {dimension_numbers = #tpu.dot_dimension_numbers<[1], [0], [0], [1], [0, 0, 1, 1], [], []>} : vector<4x32xf32>, vector<32x128xf32>, vector<4x128xf32> -> vector<4x128xf32>
    %197 = arith.addf %195, %196 : vector<4x128xf32>
    %198 = arith.negf %197 : vector<4x128xf32>
    %199 = math.exp %198 : vector<4x128xf32>
    %cst_27 = arith.constant 1.000000e+00 : f32
    %200 = vector.broadcast %cst_27 : f32 to vector<4x128xf32>
    %201 = arith.addf %200, %199 : vector<4x128xf32>
    %202 = arith.divf %200, %201 : vector<4x128xf32>
    %203 = math.tanh %197 : vector<4x128xf32>
    %204 = vector.extract_strided_slice %202 {offsets = [0, 0], sizes = [4, 32], strides = [1, 1]} : vector<4x128xf32> to vector<4x32xf32>
    %205 = vector.extract_strided_slice %202 {offsets = [0, 32], sizes = [4, 32], strides = [1, 1]} : vector<4x128xf32> to vector<4x32xf32>
    %206 = vector.extract_strided_slice %203 {offsets = [0, 64], sizes = [4, 32], strides = [1, 1]} : vector<4x128xf32> to vector<4x32xf32>
    %207 = vector.extract_strided_slice %202 {offsets = [0, 96], sizes = [4, 32], strides = [1, 1]} : vector<4x128xf32> to vector<4x32xf32>
    %208 = arith.mulf %205, %192 : vector<4x32xf32>
    %209 = arith.mulf %204, %206 : vector<4x32xf32>
    %210 = arith.addf %208, %209 : vector<4x32xf32>
    %211 = math.tanh %210 : vector<4x32xf32>
    %212 = arith.mulf %207, %211 : vector<4x32xf32>
    %213 = vector.extract_strided_slice %11 {offsets = [44, 0], sizes = [4, 128], strides = [1, 1]} : vector<64x128xf32> to vector<4x128xf32>
    %cst_28 = arith.constant dense<0.000000e+00> : vector<4x128xf32>
    %214 = tpu.matmul %212, %12, %cst_28 {dimension_numbers = #tpu.dot_dimension_numbers<[1], [0], [0], [1], [0, 0, 1, 1], [], []>} : vector<4x32xf32>, vector<32x128xf32>, vector<4x128xf32> -> vector<4x128xf32>
    %215 = arith.addf %213, %214 : vector<4x128xf32>
    %216 = arith.negf %215 : vector<4x128xf32>
    %217 = math.exp %216 : vector<4x128xf32>
    %cst_29 = arith.constant 1.000000e+00 : f32
    %218 = vector.broadcast %cst_29 : f32 to vector<4x128xf32>
    %219 = arith.addf %218, %217 : vector<4x128xf32>
    %220 = arith.divf %218, %219 : vector<4x128xf32>
    %221 = math.tanh %215 : vector<4x128xf32>
    %222 = vector.extract_strided_slice %220 {offsets = [0, 0], sizes = [4, 32], strides = [1, 1]} : vector<4x128xf32> to vector<4x32xf32>
    %223 = vector.extract_strided_slice %220 {offsets = [0, 32], sizes = [4, 32], strides = [1, 1]} : vector<4x128xf32> to vector<4x32xf32>
    %224 = vector.extract_strided_slice %221 {offsets = [0, 64], sizes = [4, 32], strides = [1, 1]} : vector<4x128xf32> to vector<4x32xf32>
    %225 = vector.extract_strided_slice %220 {offsets = [0, 96], sizes = [4, 32], strides = [1, 1]} : vector<4x128xf32> to vector<4x32xf32>
    %226 = arith.mulf %223, %210 : vector<4x32xf32>
    %227 = arith.mulf %222, %224 : vector<4x32xf32>
    %228 = arith.addf %226, %227 : vector<4x32xf32>
    %229 = math.tanh %228 : vector<4x32xf32>
    %230 = arith.mulf %225, %229 : vector<4x32xf32>
    %231 = vector.extract_strided_slice %11 {offsets = [48, 0], sizes = [4, 128], strides = [1, 1]} : vector<64x128xf32> to vector<4x128xf32>
    %cst_30 = arith.constant dense<0.000000e+00> : vector<4x128xf32>
    %232 = tpu.matmul %230, %12, %cst_30 {dimension_numbers = #tpu.dot_dimension_numbers<[1], [0], [0], [1], [0, 0, 1, 1], [], []>} : vector<4x32xf32>, vector<32x128xf32>, vector<4x128xf32> -> vector<4x128xf32>
    %233 = arith.addf %231, %232 : vector<4x128xf32>
    %234 = arith.negf %233 : vector<4x128xf32>
    %235 = math.exp %234 : vector<4x128xf32>
    %cst_31 = arith.constant 1.000000e+00 : f32
    %236 = vector.broadcast %cst_31 : f32 to vector<4x128xf32>
    %237 = arith.addf %236, %235 : vector<4x128xf32>
    %238 = arith.divf %236, %237 : vector<4x128xf32>
    %239 = math.tanh %233 : vector<4x128xf32>
    %240 = vector.extract_strided_slice %238 {offsets = [0, 0], sizes = [4, 32], strides = [1, 1]} : vector<4x128xf32> to vector<4x32xf32>
    %241 = vector.extract_strided_slice %238 {offsets = [0, 32], sizes = [4, 32], strides = [1, 1]} : vector<4x128xf32> to vector<4x32xf32>
    %242 = vector.extract_strided_slice %239 {offsets = [0, 64], sizes = [4, 32], strides = [1, 1]} : vector<4x128xf32> to vector<4x32xf32>
    %243 = vector.extract_strided_slice %238 {offsets = [0, 96], sizes = [4, 32], strides = [1, 1]} : vector<4x128xf32> to vector<4x32xf32>
    %244 = arith.mulf %241, %228 : vector<4x32xf32>
    %245 = arith.mulf %240, %242 : vector<4x32xf32>
    %246 = arith.addf %244, %245 : vector<4x32xf32>
    %247 = math.tanh %246 : vector<4x32xf32>
    %248 = arith.mulf %243, %247 : vector<4x32xf32>
    %249 = vector.extract_strided_slice %11 {offsets = [52, 0], sizes = [4, 128], strides = [1, 1]} : vector<64x128xf32> to vector<4x128xf32>
    %cst_32 = arith.constant dense<0.000000e+00> : vector<4x128xf32>
    %250 = tpu.matmul %248, %12, %cst_32 {dimension_numbers = #tpu.dot_dimension_numbers<[1], [0], [0], [1], [0, 0, 1, 1], [], []>} : vector<4x32xf32>, vector<32x128xf32>, vector<4x128xf32> -> vector<4x128xf32>
    %251 = arith.addf %249, %250 : vector<4x128xf32>
    %252 = arith.negf %251 : vector<4x128xf32>
    %253 = math.exp %252 : vector<4x128xf32>
    %cst_33 = arith.constant 1.000000e+00 : f32
    %254 = vector.broadcast %cst_33 : f32 to vector<4x128xf32>
    %255 = arith.addf %254, %253 : vector<4x128xf32>
    %256 = arith.divf %254, %255 : vector<4x128xf32>
    %257 = math.tanh %251 : vector<4x128xf32>
    %258 = vector.extract_strided_slice %256 {offsets = [0, 0], sizes = [4, 32], strides = [1, 1]} : vector<4x128xf32> to vector<4x32xf32>
    %259 = vector.extract_strided_slice %256 {offsets = [0, 32], sizes = [4, 32], strides = [1, 1]} : vector<4x128xf32> to vector<4x32xf32>
    %260 = vector.extract_strided_slice %257 {offsets = [0, 64], sizes = [4, 32], strides = [1, 1]} : vector<4x128xf32> to vector<4x32xf32>
    %261 = vector.extract_strided_slice %256 {offsets = [0, 96], sizes = [4, 32], strides = [1, 1]} : vector<4x128xf32> to vector<4x32xf32>
    %262 = arith.mulf %259, %246 : vector<4x32xf32>
    %263 = arith.mulf %258, %260 : vector<4x32xf32>
    %264 = arith.addf %262, %263 : vector<4x32xf32>
    %265 = math.tanh %264 : vector<4x32xf32>
    %266 = arith.mulf %261, %265 : vector<4x32xf32>
    %267 = vector.extract_strided_slice %11 {offsets = [56, 0], sizes = [4, 128], strides = [1, 1]} : vector<64x128xf32> to vector<4x128xf32>
    %cst_34 = arith.constant dense<0.000000e+00> : vector<4x128xf32>
    %268 = tpu.matmul %266, %12, %cst_34 {dimension_numbers = #tpu.dot_dimension_numbers<[1], [0], [0], [1], [0, 0, 1, 1], [], []>} : vector<4x32xf32>, vector<32x128xf32>, vector<4x128xf32> -> vector<4x128xf32>
    %269 = arith.addf %267, %268 : vector<4x128xf32>
    %270 = arith.negf %269 : vector<4x128xf32>
    %271 = math.exp %270 : vector<4x128xf32>
    %cst_35 = arith.constant 1.000000e+00 : f32
    %272 = vector.broadcast %cst_35 : f32 to vector<4x128xf32>
    %273 = arith.addf %272, %271 : vector<4x128xf32>
    %274 = arith.divf %272, %273 : vector<4x128xf32>
    %275 = math.tanh %269 : vector<4x128xf32>
    %276 = vector.extract_strided_slice %274 {offsets = [0, 0], sizes = [4, 32], strides = [1, 1]} : vector<4x128xf32> to vector<4x32xf32>
    %277 = vector.extract_strided_slice %274 {offsets = [0, 32], sizes = [4, 32], strides = [1, 1]} : vector<4x128xf32> to vector<4x32xf32>
    %278 = vector.extract_strided_slice %275 {offsets = [0, 64], sizes = [4, 32], strides = [1, 1]} : vector<4x128xf32> to vector<4x32xf32>
    %279 = vector.extract_strided_slice %274 {offsets = [0, 96], sizes = [4, 32], strides = [1, 1]} : vector<4x128xf32> to vector<4x32xf32>
    %280 = arith.mulf %277, %264 : vector<4x32xf32>
    %281 = arith.mulf %276, %278 : vector<4x32xf32>
    %282 = arith.addf %280, %281 : vector<4x32xf32>
    %283 = math.tanh %282 : vector<4x32xf32>
    %284 = arith.mulf %279, %283 : vector<4x32xf32>
    %285 = vector.extract_strided_slice %11 {offsets = [60, 0], sizes = [4, 128], strides = [1, 1]} : vector<64x128xf32> to vector<4x128xf32>
    %cst_36 = arith.constant dense<0.000000e+00> : vector<4x128xf32>
    %286 = tpu.matmul %284, %12, %cst_36 {dimension_numbers = #tpu.dot_dimension_numbers<[1], [0], [0], [1], [0, 0, 1, 1], [], []>} : vector<4x32xf32>, vector<32x128xf32>, vector<4x128xf32> -> vector<4x128xf32>
    %287 = arith.addf %285, %286 : vector<4x128xf32>
    %288 = arith.negf %287 : vector<4x128xf32>
    %289 = math.exp %288 : vector<4x128xf32>
    %cst_37 = arith.constant 1.000000e+00 : f32
    %290 = vector.broadcast %cst_37 : f32 to vector<4x128xf32>
    %291 = arith.addf %290, %289 : vector<4x128xf32>
    %292 = arith.divf %290, %291 : vector<4x128xf32>
    %293 = math.tanh %287 : vector<4x128xf32>
    %294 = vector.extract_strided_slice %292 {offsets = [0, 0], sizes = [4, 32], strides = [1, 1]} : vector<4x128xf32> to vector<4x32xf32>
    %295 = vector.extract_strided_slice %292 {offsets = [0, 32], sizes = [4, 32], strides = [1, 1]} : vector<4x128xf32> to vector<4x32xf32>
    %296 = vector.extract_strided_slice %293 {offsets = [0, 64], sizes = [4, 32], strides = [1, 1]} : vector<4x128xf32> to vector<4x32xf32>
    %297 = vector.extract_strided_slice %292 {offsets = [0, 96], sizes = [4, 32], strides = [1, 1]} : vector<4x128xf32> to vector<4x32xf32>
    %298 = arith.mulf %295, %282 : vector<4x32xf32>
    %299 = arith.mulf %294, %296 : vector<4x32xf32>
    %300 = arith.addf %298, %299 : vector<4x32xf32>
    %301 = math.tanh %300 : vector<4x32xf32>
    %302 = arith.mulf %297, %301 : vector<4x32xf32>
    %c0_38 = arith.constant 0 : index
    %c0_39 = arith.constant 0 : index
    %303 = vector.load %arg2[%c0_38, %c0_39] : memref<136x128xf32, #tpu.memory_space<vmem>>, vector<32x32xf32>
    %cst_40 = arith.constant dense<0.000000e+00> : vector<32xf32>
    %304 = vector.multi_reduction <add>, %303, %cst_40 [1] : vector<32x32xf32> to vector<32xf32>
    %305 = vector.shape_cast %304 : vector<32xf32> to vector<32x1xf32>
    %cst_41 = arith.constant 0.000000e+00 : f32
    %306 = vector.broadcast %cst_41 : f32 to vector<32x1xf32>
    %307 = arith.cmpf ogt, %305, %306 : vector<32x1xf32>
    %308 = math.rsqrt %305 : vector<32x1xf32>
    %cst_42 = arith.constant 0.000000e+00 : f32
    %309 = vector.broadcast %cst_42 : f32 to vector<32x1xf32>
    %310 = arith.select %307, %308, %309 : vector<32x1xi1>, vector<32x1xf32>
    %c32 = arith.constant 32 : index
    %c0_43 = arith.constant 0 : index
    %311 = vector.load %arg2[%c32, %c0_43] : memref<136x128xf32, #tpu.memory_space<vmem>>, vector<32x16xf32>
    %c144 = arith.constant 144 : index
    %c0_44 = arith.constant 0 : index
    %312 = vector.load %arg1[%c144, %c0_44] : memref<224x128xf32, #tpu.memory_space<vmem>>, vector<16x16xf32>
    %cst_45 = arith.constant dense<0.000000e+00> : vector<32x16xf32>
    %313 = tpu.matmul %311, %312, %cst_45 {dimension_numbers = #tpu.dot_dimension_numbers<[1], [0], [0], [1], [0, 0, 1, 1], [], []>} : vector<32x16xf32>, vector<16x16xf32>, vector<32x16xf32> -> vector<32x16xf32>
    %314 = vector.broadcast %310 : vector<32x1xf32> to vector<32x16xf32>
    %315 = arith.mulf %314, %313 : vector<32x16xf32>
    %cst_46 = arith.constant dense<0.000000e+00> : vector<32x16xf32>
    %316 = tpu.matmul %303, %315, %cst_46 {dimension_numbers = #tpu.dot_dimension_numbers<[1], [0], [0], [1], [0, 0, 1, 1], [], []>} : vector<32x32xf32>, vector<32x16xf32>, vector<32x16xf32> -> vector<32x16xf32>
    %317 = vector.broadcast %310 : vector<32x1xf32> to vector<32x16xf32>
    %318 = arith.mulf %317, %316 : vector<32x16xf32>
    %319 = vector.broadcast %3 : vector<1x16xf32> to vector<32x16xf32>
    %320 = arith.addf %318, %319 : vector<32x16xf32>
    %cst_47 = arith.constant 0.000000e+00 : f32
    %321 = vector.broadcast %cst_47 : f32 to vector<32x16xf32>
    %322 = arith.maximumf %320, %321 : vector<32x16xf32>
    %c160 = arith.constant 160 : index
    %c0_48 = arith.constant 0 : index
    %323 = vector.load %arg1[%c160, %c0_48] : memref<224x128xf32, #tpu.memory_space<vmem>>, vector<16x16xf32>
    %cst_49 = arith.constant dense<0.000000e+00> : vector<32x16xf32>
    %324 = tpu.matmul %322, %323, %cst_49 {dimension_numbers = #tpu.dot_dimension_numbers<[1], [0], [0], [1], [0, 0, 1, 1], [], []>} : vector<32x16xf32>, vector<16x16xf32>, vector<32x16xf32> -> vector<32x16xf32>
    %325 = vector.broadcast %310 : vector<32x1xf32> to vector<32x16xf32>
    %326 = arith.mulf %325, %324 : vector<32x16xf32>
    %cst_50 = arith.constant dense<0.000000e+00> : vector<32x16xf32>
    %327 = tpu.matmul %303, %326, %cst_50 {dimension_numbers = #tpu.dot_dimension_numbers<[1], [0], [0], [1], [0, 0, 1, 1], [], []>} : vector<32x32xf32>, vector<32x16xf32>, vector<32x16xf32> -> vector<32x16xf32>
    %328 = vector.broadcast %310 : vector<32x1xf32> to vector<32x16xf32>
    %329 = arith.mulf %328, %327 : vector<32x16xf32>
    %330 = vector.broadcast %4 : vector<1x16xf32> to vector<32x16xf32>
    %331 = arith.addf %329, %330 : vector<32x16xf32>
    %cst_51 = arith.constant 0.000000e+00 : f32
    %332 = vector.broadcast %cst_51 : f32 to vector<32x16xf32>
    %333 = arith.maximumf %331, %332 : vector<32x16xf32>
    %c128 = arith.constant 128 : index
    %c0_52 = arith.constant 0 : index
    %334 = vector.load %arg2[%c128, %c0_52] : memref<136x128xf32, #tpu.memory_space<vmem>>, vector<4x32xf32>
    %cst_53 = arith.constant dense<0.000000e+00> : vector<4x16xf32>
    %335 = tpu.matmul %334, %333, %cst_53 {dimension_numbers = #tpu.dot_dimension_numbers<[1], [0], [0], [1], [0, 0, 1, 1], [], []>} : vector<4x32xf32>, vector<32x16xf32>, vector<4x16xf32> -> vector<4x16xf32>
    %c176 = arith.constant 176 : index
    %c0_54 = arith.constant 0 : index
    %336 = vector.load %arg1[%c176, %c0_54] : memref<224x128xf32, #tpu.memory_space<vmem>>, vector<32x32xf32>
    %cst_55 = arith.constant dense<0.000000e+00> : vector<4x32xf32>
    %337 = tpu.matmul %302, %336, %cst_55 {dimension_numbers = #tpu.dot_dimension_numbers<[1], [0], [0], [1], [0, 0, 1, 1], [], []>} : vector<4x32xf32>, vector<32x32xf32>, vector<4x32xf32> -> vector<4x32xf32>
    %c208 = arith.constant 208 : index
    %c0_56 = arith.constant 0 : index
    %338 = vector.load %arg1[%c208, %c0_56] : memref<224x128xf32, #tpu.memory_space<vmem>>, vector<16x32xf32>
    %cst_57 = arith.constant dense<0.000000e+00> : vector<4x32xf32>
    %339 = tpu.matmul %335, %338, %cst_57 {dimension_numbers = #tpu.dot_dimension_numbers<[1], [0], [0], [1], [0, 0, 1, 1], [], []>} : vector<4x16xf32>, vector<16x32xf32>, vector<4x32xf32> -> vector<4x32xf32>
    %340 = arith.addf %337, %339 : vector<4x32xf32>
    %341 = vector.broadcast %5 : vector<1x32xf32> to vector<4x32xf32>
    %342 = arith.addf %340, %341 : vector<4x32xf32>
    %cst_58 = arith.constant 0.000000e+00 : f32
    %343 = vector.broadcast %cst_58 : f32 to vector<4x32xf32>
    %344 = arith.maximumf %342, %343 : vector<4x32xf32>
    %c40 = arith.constant 40 : index
    %c0_59 = arith.constant 0 : index
    %345 = vector.load %arg1[%c40, %c0_59] : memref<224x128xf32, #tpu.memory_space<vmem>>, vector<32x128xf32>
    %cst_60 = arith.constant dense<0.000000e+00> : vector<4x128xf32>
    %346 = tpu.matmul %344, %345, %cst_60 {dimension_numbers = #tpu.dot_dimension_numbers<[1], [0], [0], [1], [0, 0, 1, 1], [], []>} : vector<4x32xf32>, vector<32x128xf32>, vector<4x128xf32> -> vector<4x128xf32>
    %347 = vector.broadcast %2 : vector<1x128xf32> to vector<4x128xf32>
    %348 = arith.addf %346, %347 : vector<4x128xf32>
    %c72 = arith.constant 72 : index
    %c0_61 = arith.constant 0 : index
    %349 = vector.load %arg1[%c72, %c0_61] : memref<224x128xf32, #tpu.memory_space<vmem>>, vector<32x128xf32>
    %cst_62 = arith.constant 0.000000e+00 : f32
    %350 = vector.broadcast %cst_62 : f32 to vector<1x32xf32>
    %cst_63 = arith.constant 0.000000e+00 : f32
    %351 = vector.broadcast %cst_63 : f32 to vector<1x32xf32>
    %352 = vector.extract_strided_slice %348 {offsets = [0, 0], sizes = [1, 128], strides = [1, 1]} : vector<4x128xf32> to vector<1x128xf32>
    %cst_64 = arith.constant dense<0.000000e+00> : vector<1x128xf32>
    %353 = tpu.matmul %350, %349, %cst_64 {dimension_numbers = #tpu.dot_dimension_numbers<[1], [0], [0], [1], [0, 0, 1, 1], [], []>} : vector<1x32xf32>, vector<32x128xf32>, vector<1x128xf32> -> vector<1x128xf32>
    %354 = arith.addf %352, %353 : vector<1x128xf32>
    %355 = arith.negf %354 : vector<1x128xf32>
    %356 = math.exp %355 : vector<1x128xf32>
    %cst_65 = arith.constant 1.000000e+00 : f32
    %357 = vector.broadcast %cst_65 : f32 to vector<1x128xf32>
    %358 = arith.addf %357, %356 : vector<1x128xf32>
    %359 = arith.divf %357, %358 : vector<1x128xf32>
    %360 = math.tanh %354 : vector<1x128xf32>
    %361 = vector.extract_strided_slice %359 {offsets = [0, 0], sizes = [1, 32], strides = [1, 1]} : vector<1x128xf32> to vector<1x32xf32>
    %362 = vector.extract_strided_slice %359 {offsets = [0, 32], sizes = [1, 32], strides = [1, 1]} : vector<1x128xf32> to vector<1x32xf32>
    %363 = vector.extract_strided_slice %360 {offsets = [0, 64], sizes = [1, 32], strides = [1, 1]} : vector<1x128xf32> to vector<1x32xf32>
    %364 = vector.extract_strided_slice %359 {offsets = [0, 96], sizes = [1, 32], strides = [1, 1]} : vector<1x128xf32> to vector<1x32xf32>
    %365 = arith.mulf %362, %351 : vector<1x32xf32>
    %366 = arith.mulf %361, %363 : vector<1x32xf32>
    %367 = arith.addf %365, %366 : vector<1x32xf32>
    %368 = math.tanh %367 : vector<1x32xf32>
    %369 = arith.mulf %364, %368 : vector<1x32xf32>
    %370 = vector.extract_strided_slice %348 {offsets = [1, 0], sizes = [1, 128], strides = [1, 1]} : vector<4x128xf32> to vector<1x128xf32>
    %cst_66 = arith.constant dense<0.000000e+00> : vector<1x128xf32>
    %371 = tpu.matmul %369, %349, %cst_66 {dimension_numbers = #tpu.dot_dimension_numbers<[1], [0], [0], [1], [0, 0, 1, 1], [], []>} : vector<1x32xf32>, vector<32x128xf32>, vector<1x128xf32> -> vector<1x128xf32>
    %372 = arith.addf %370, %371 : vector<1x128xf32>
    %373 = arith.negf %372 : vector<1x128xf32>
    %374 = math.exp %373 : vector<1x128xf32>
    %cst_67 = arith.constant 1.000000e+00 : f32
    %375 = vector.broadcast %cst_67 : f32 to vector<1x128xf32>
    %376 = arith.addf %375, %374 : vector<1x128xf32>
    %377 = arith.divf %375, %376 : vector<1x128xf32>
    %378 = math.tanh %372 : vector<1x128xf32>
    %379 = vector.extract_strided_slice %377 {offsets = [0, 0], sizes = [1, 32], strides = [1, 1]} : vector<1x128xf32> to vector<1x32xf32>
    %380 = vector.extract_strided_slice %377 {offsets = [0, 32], sizes = [1, 32], strides = [1, 1]} : vector<1x128xf32> to vector<1x32xf32>
    %381 = vector.extract_strided_slice %378 {offsets = [0, 64], sizes = [1, 32], strides = [1, 1]} : vector<1x128xf32> to vector<1x32xf32>
    %382 = vector.extract_strided_slice %377 {offsets = [0, 96], sizes = [1, 32], strides = [1, 1]} : vector<1x128xf32> to vector<1x32xf32>
    %383 = arith.mulf %380, %367 : vector<1x32xf32>
    %384 = arith.mulf %379, %381 : vector<1x32xf32>
    %385 = arith.addf %383, %384 : vector<1x32xf32>
    %386 = math.tanh %385 : vector<1x32xf32>
    %387 = arith.mulf %382, %386 : vector<1x32xf32>
    %388 = vector.extract_strided_slice %348 {offsets = [2, 0], sizes = [1, 128], strides = [1, 1]} : vector<4x128xf32> to vector<1x128xf32>
    %cst_68 = arith.constant dense<0.000000e+00> : vector<1x128xf32>
    %389 = tpu.matmul %387, %349, %cst_68 {dimension_numbers = #tpu.dot_dimension_numbers<[1], [0], [0], [1], [0, 0, 1, 1], [], []>} : vector<1x32xf32>, vector<32x128xf32>, vector<1x128xf32> -> vector<1x128xf32>
    %390 = arith.addf %388, %389 : vector<1x128xf32>
    %391 = arith.negf %390 : vector<1x128xf32>
    %392 = math.exp %391 : vector<1x128xf32>
    %cst_69 = arith.constant 1.000000e+00 : f32
    %393 = vector.broadcast %cst_69 : f32 to vector<1x128xf32>
    %394 = arith.addf %393, %392 : vector<1x128xf32>
    %395 = arith.divf %393, %394 : vector<1x128xf32>
    %396 = math.tanh %390 : vector<1x128xf32>
    %397 = vector.extract_strided_slice %395 {offsets = [0, 0], sizes = [1, 32], strides = [1, 1]} : vector<1x128xf32> to vector<1x32xf32>
    %398 = vector.extract_strided_slice %395 {offsets = [0, 32], sizes = [1, 32], strides = [1, 1]} : vector<1x128xf32> to vector<1x32xf32>
    %399 = vector.extract_strided_slice %396 {offsets = [0, 64], sizes = [1, 32], strides = [1, 1]} : vector<1x128xf32> to vector<1x32xf32>
    %400 = vector.extract_strided_slice %395 {offsets = [0, 96], sizes = [1, 32], strides = [1, 1]} : vector<1x128xf32> to vector<1x32xf32>
    %401 = arith.mulf %398, %385 : vector<1x32xf32>
    %402 = arith.mulf %397, %399 : vector<1x32xf32>
    %403 = arith.addf %401, %402 : vector<1x32xf32>
    %404 = math.tanh %403 : vector<1x32xf32>
    %405 = arith.mulf %400, %404 : vector<1x32xf32>
    %406 = vector.extract_strided_slice %348 {offsets = [3, 0], sizes = [1, 128], strides = [1, 1]} : vector<4x128xf32> to vector<1x128xf32>
    %cst_70 = arith.constant dense<0.000000e+00> : vector<1x128xf32>
    %407 = tpu.matmul %405, %349, %cst_70 {dimension_numbers = #tpu.dot_dimension_numbers<[1], [0], [0], [1], [0, 0, 1, 1], [], []>} : vector<1x32xf32>, vector<32x128xf32>, vector<1x128xf32> -> vector<1x128xf32>
    %408 = arith.addf %406, %407 : vector<1x128xf32>
    %409 = arith.negf %408 : vector<1x128xf32>
    %410 = math.exp %409 : vector<1x128xf32>
    %cst_71 = arith.constant 1.000000e+00 : f32
    %411 = vector.broadcast %cst_71 : f32 to vector<1x128xf32>
    %412 = arith.addf %411, %410 : vector<1x128xf32>
    %413 = arith.divf %411, %412 : vector<1x128xf32>
    %414 = math.tanh %408 : vector<1x128xf32>
    %415 = vector.extract_strided_slice %413 {offsets = [0, 0], sizes = [1, 32], strides = [1, 1]} : vector<1x128xf32> to vector<1x32xf32>
    %416 = vector.extract_strided_slice %413 {offsets = [0, 32], sizes = [1, 32], strides = [1, 1]} : vector<1x128xf32> to vector<1x32xf32>
    %417 = vector.extract_strided_slice %414 {offsets = [0, 64], sizes = [1, 32], strides = [1, 1]} : vector<1x128xf32> to vector<1x32xf32>
    %418 = vector.extract_strided_slice %413 {offsets = [0, 96], sizes = [1, 32], strides = [1, 1]} : vector<1x128xf32> to vector<1x32xf32>
    %419 = arith.mulf %416, %403 : vector<1x32xf32>
    %420 = arith.mulf %415, %417 : vector<1x32xf32>
    %421 = arith.addf %419, %420 : vector<1x32xf32>
    %422 = math.tanh %421 : vector<1x32xf32>
    %423 = arith.mulf %418, %422 : vector<1x32xf32>
    %c104 = arith.constant 104 : index
    %c0_72 = arith.constant 0 : index
    %424 = vector.load %arg1[%c104, %c0_72] : memref<224x128xf32, #tpu.memory_space<vmem>>, vector<32x128xf32>
    %cst_73 = arith.constant dense<0.000000e+00> : vector<1x128xf32>
    %425 = tpu.matmul %423, %424, %cst_73 {dimension_numbers = #tpu.dot_dimension_numbers<[1], [0], [0], [1], [0, 0, 1, 1], [], []>} : vector<1x32xf32>, vector<32x128xf32>, vector<1x128xf32> -> vector<1x128xf32>
    %426 = arith.addf %425, %6 : vector<1x128xf32>
    %cst_74 = arith.constant dense<0xFF800000> : vector<1xf32>
    %427 = vector.multi_reduction <maximumf>, %426, %cst_74 [1] : vector<1x128xf32> to vector<1xf32>
    %428 = vector.shape_cast %427 : vector<1xf32> to vector<1x1xf32>
    %429 = vector.broadcast %428 : vector<1x1xf32> to vector<1x128xf32>
    %430 = arith.subf %426, %429 : vector<1x128xf32>
    %431 = math.exp %430 : vector<1x128xf32>
    %cst_75 = arith.constant dense<0.000000e+00> : vector<1xf32>
    %432 = vector.multi_reduction <add>, %431, %cst_75 [1] : vector<1x128xf32> to vector<1xf32>
    %433 = vector.shape_cast %432 : vector<1xf32> to vector<1x1xf32>
    %434 = math.log %433 : vector<1x1xf32>
    %435 = vector.broadcast %434 : vector<1x1xf32> to vector<1x128xf32>
    %436 = arith.subf %430, %435 : vector<1x128xf32>
    %437 = vector.shape_cast %436 : vector<1x128xf32> to vector<1x128xf32>
    %438 = vector.broadcast %437 : vector<1x128xf32> to vector<8x128xf32>
    %c0_76 = arith.constant 0 : index
    %c0_77 = arith.constant 0 : index
    %439 = vector.load %arg3[%c0_76, %c0_77] : memref<8x128xf32, #tpu.memory_space<vmem>>, vector<8x128xf32>
    tpu.vector_store %arg3[%c0_76, %c0_77], %438 {strides = array<i32>} : memref<8x128xf32, #tpu.memory_space<vmem>>, vector<8x128xf32>,
    return
  }
  func.func @transform_0(%arg0: i32) -> (i32, i32) {
    %c0_i32 = arith.constant 0 : i32
    %c0_i32_0 = arith.constant 0 : i32
    %c0_i32_1 = arith.constant 0 : i32
    return %c0_i32, %c0_i32_0 : i32, i32
  }
  func.func @transform_1(%arg0: i32) -> (i32, i32) {
    %c0_i32 = arith.constant 0 : i32
    %c0_i32_0 = arith.constant 0 : i32
    %c0_i32_1 = arith.constant 0 : i32
    return %c0_i32, %c0_i32_0 : i32, i32
  }
  func.func @transform_2(%arg0: i32) -> (i32, i32) {
    %c0_i32 = arith.constant 0 : i32
    %c0_i32_0 = arith.constant 0 : i32
    %c0_i32_1 = arith.constant 0 : i32
    return %c0_i32, %c0_i32_0 : i32, i32
  }
}

</mosaic_0001>

<llo_original>
// kernel: mvts_forward_pallas.1
$region0: #{mvts_forward_pallas.1}
  #allocation0 [shape = 'u32[]', space=smem, size = 0x4, offset = 0x4, fixed_abs, tag = 'smem constant byte address 0x4 - core index']
  #allocation1 [shape = 'u32[144,128]{1,0:T(1,128)}', space=vmem, size = 0x12000, scoped, tag = 'internal scratch']
  %s0 = inlined_call_operand.vmem [shape: f32[224,128], index: 0, kind: input, shape index: {}]
  %s1 = inlined_call_operand.vmem [shape: f32[136,128], index: 1, kind: input, shape index: {}]
  %s2 = inlined_call_operand.vmem [shape: f32[8,128], index: 2, kind: output, shape index: {}]
  %s3 = sld [smem:[#allocation0]]
  $region18: #{mvts_forward_pallas.1} parent=0
    _
  %s5 = ssub.s32 1, %s3
  %s6 = scalar_select 0, %s5, %s3
  // Predicated region
  $region2: #{mvts_forward_pallas.1} parent=0 // pred_check
    _
  $region3: #{mvts_forward_pallas.1} parent=0 // pred_check_branch
    %8 = sbr.rel (0) target = $region5
  $region4: #{mvts_forward_pallas.1} parent=0 // pred_region
    _
  $region5: #{mvts_forward_pallas.1} parent=0 // pred_fallthru
    _
  // Predicated region
  $region6: #{mvts_forward_pallas.1} parent=0 // pred_check
    _
  $region7: #{mvts_forward_pallas.1} parent=0 // pred_check_branch
    %10 = sbr.rel (0) target = $region9
  $region8: #{mvts_forward_pallas.1} parent=0 // pred_region
    _
  $region9: #{mvts_forward_pallas.1} parent=0 // pred_fallthru
    _
  %v11 = vld [vmem:[%s0 + $0x88] sm:$0xff]
  %v12 = vld [vmem:[%s1 + $0x40] sm:$0xff]
  %v13 = vld [vmem:[%s1 + $0x48] sm:$0xff]
  %v14 = vld [vmem:[%s1 + $0x50] sm:$0xff]
  %v15 = vld [vmem:[%s1 + $0x58] sm:$0xff]
  %v16 = vld [vmem:[%s1 + $0x60] sm:$0xff]
  %v17 = vld [vmem:[%s1 + $0x68] sm:$0xff]
  %v18 = vld [vmem:[%s1 + $0x70] sm:$0xff]
  %v19 = vld [vmem:[%s1 + $0x78] sm:$0xff]
  %v20 = vld [vmem:[%s0] sm:$0xff]
  %v21 = vlaneseq
  %v22 = vshrl.u32 %v21, 7
  %v23 = vsub.s32 0, %v22
  %v24 = vrot.slane %v11, %v23
  %vm25 = vcmask 64512
  %v27 = vsel %vm25, %v12, 0
  %v30 = vsel %vm25, %v13, 0
  %v33 = vsel %vm25, %v14, 0
  %v36 = vsel %vm25, %v15, 0
  %v39 = vsel %vm25, %v16, 0
  %v42 = vsel %vm25, %v17, 0
  %v45 = vsel %vm25, %v18, 0
  %v48 = vsel %vm25, %v19, 0
  %50 = vmatprep.subr.mxu0 0.0
  %51 = vmatpush1.msra.mxu0 %v20
  %52 = vmatprep.subr.mxu0 0.0
  %53 = vmatpush1.msra.mxu0 0.0
  %54 = vmatprep.subr.mxu0 0.0
  %55 = vmatpush1.msra.mxu0 0.0
  %56 = vmatprep.subr.mxu0 0.0
  %57 = vmatpush1.msra.mxu0 0.0
  %58 = vmatprep.subr.mxu0 0.0
  %59 = vmatpush1.msra.mxu0 0.0
  %60 = vmatprep.subr.mxu0 0.0
  %61 = vmatpush1.msra.mxu0 0.0
  %62 = vmatprep.subr.mxu0 0.0
  %63 = vmatpush1.msra.mxu0 0.0
  %64 = vmatprep.subr.mxu0 0.0
  %65 = vmatpush1.msra.mxu0 0.0
  %66 = vmatprep.subr.mxu0 0.0
  %67 = vmatpush1.msra.mxu0 0.0
  %68 = vmatprep.subr.mxu0 0.0
  %69 = vmatpush1.msra.mxu0 0.0
  %70 = vmatprep.subr.mxu0 0.0
  %71 = vmatpush1.msra.mxu0 0.0
  %72 = vmatprep.subr.mxu0 0.0
  %73 = vmatpush1.msra.mxu0 0.0
  %74 = vmatprep.subr.mxu0 0.0
  %75 = vmatpush1.msra.mxu0 0.0
  %76 = vmatprep.subr.mxu0 0.0
  %77 = vmatpush1.msra.mxu0 0.0
  %78 = vmatprep.subr.mxu0 0.0
  %79 = vmatpush1.msra.mxu0 0.0
  %80 = vmatprep.subr.mxu0 0.0
  %81 = vmatpush1.msra.mxu0 0.0
  %82 = vmatprep.subr.mxu0 0.0
  %83 = vmatpush1.msra.mxu0 0.0
  %84 = vmatprep.subr.mxu0 0.0
  %85 = vmatpush1.msra.mxu0 0.0
  %86 = vmatprep.subr.mxu0 0.0
  %87 = vmatpush1.msra.mxu0 0.0
  %88 = vmatprep.subr.mxu0 0.0
  %89 = vmatpush1.msra.mxu0 0.0
  %90 = vmatprep.subr.mxu0 0.0
  %91 = vmatpush1.msra.mxu0 0.0
  %92 = vmatprep.subr.mxu0 0.0
  %93 = vmatpush1.msra.mxu0 0.0
  %94 = vmatprep.subr.mxu0 0.0
  %95 = vmatpush1.msra.mxu0 0.0
  %96 = vmatprep.subr.mxu0 0.0
  %97 = vmatpush1.msra.mxu0 0.0
  %98 = vmatprep.subr.mxu0 0.0
  %99 = vmatpush1.msra.mxu0 0.0
  %100 = vmatprep.subr.mxu0 0.0
  %101 = vmatpush1.msra.mxu0 0.0
  %102 = vmatprep.subr.mxu0 0.0
  %103 = vmatpush1.msra.mxu0 0.0
  %104 = vmatprep.subr.mxu0 0.0
  %105 = vmatpush1.msra.mxu0 0.0
  %106 = vmatprep.subr.mxu0 0.0
  %107 = vmatpush1.msra.mxu0 0.0
  %108 = vmatprep.subr.mxu0 0.0
  %109 = vmatpush1.msra.mxu0 0.0
  %110 = vmatprep.subr.mxu0 0.0
  %111 = vmatpush1.msra.mxu0 0.0
  %112 = vmatprep.subr.mxu0 0.0
  %113 = vmatpush1.msra.mxu0 0.0
  %114 = vmatprep.mubr.f32.mxu0 0.0
  %115 = vmatmul.mubr.f32.gmra.mrb[0].mxu0 %v27
  %v116 = vpop.f32.mrb[0].mxu0
  %v117 = vadd.f32 %v24, %v116
  %v118 = vpop.f32.mrb[0].mxu0
  %119 = vmatprep.mubr.f32.mxu0 0.0
  %120 = vmatmul.mubr.f32.gmra.mrb[0].mxu0 %v30
  %v121 = vpop.f32.mrb[0].mxu0
  %v122 = vadd.f32 %v24, %v121
  %v123 = vpop.f32.mrb[0].mxu0
  %124 = vmatprep.mubr.f32.mxu0 0.0
  %125 = vmatmul.mubr.f32.gmra.mrb[0].mxu0 %v33
  %v126 = vpop.f32.mrb[0].mxu0
  %v127 = vadd.f32 %v24, %v126
  %v128 = vpop.f32.mrb[0].mxu0
  %129 = vmatprep.mubr.f32.mxu0 0.0
  %130 = vmatmul.mubr.f32.gmra.mrb[0].mxu0 %v36
  %v131 = vpop.f32.mrb[0].mxu0
  %v132 = vadd.f32 %v24, %v131
  %v133 = vpop.f32.mrb[0].mxu0
  %134 = vmatprep.mubr.f32.mxu0 0.0
  %135 = vmatmul.mubr.f32.gmra.mrb[0].mxu0 %v39
  %v136 = vpop.f32.mrb[0].mxu0
  %v137 = vadd.f32 %v24, %v136
  %v138 = vpop.f32.mrb[0].mxu0
  %139 = vmatprep.mubr.f32.mxu0 0.0
  %140 = vmatmul.mubr.f32.gmra.mrb[0].mxu0 %v42
  %v141 = vpop.f32.mrb[0].mxu0
  %v142 = vadd.f32 %v24, %v141
  %v143 = vpop.f32.mrb[0].mxu0
  %144 = vmatprep.mubr.f32.mxu0 0.0
  %145 = vmatmul.mubr.f32.gmra.mrb[0].mxu0 %v45
  %v146 = vpop.f32.mrb[0].mxu0
  %v147 = vadd.f32 %v24, %v146
  %v148 = vpop.f32.mrb[0].mxu0
  %149 = vmatprep.mubr.f32.mxu0 0.0
  %150 = vmatmul.mubr.f32.gmra.mrb[0].mxu0 %v48
  %v151 = vpop.f32.mrb[0].mxu0
  %v152 = vadd.f32 %v24, %v151
  %v153 = vpop.f32.mrb[0].mxu0
  %154 = vdwg.mxu0
  %v155 = vld [vmem:[%s0 + $0x8] sm:$0xff]
  %v156 = vld [vmem:[%s0 + $0x10] sm:$0xff]
  %v157 = vld [vmem:[%s0 + $0x18] sm:$0xff]
  %v158 = vld [vmem:[%s0 + $0x20] sm:$0xff]
  %vm159 = vcmask 261120
  %v161 = vsel %vm159, 0.0, 0
  %163 = vmatprep.subr.mxu0 0.0
  %164 = vmatpush1.msra.mxu0 %v155
  %165 = vmatprep.subr.mxu0 0.0
  %166 = vmatpush1.msra.mxu0 %v156
  %167 = vmatprep.subr.mxu0 0.0
  %168 = vmatpush1.msra.mxu0 %v157
  %169 = vmatprep.subr.mxu0 0.0
  %170 = vmatpush1.msra.mxu0 %v158
  %171 = vmatprep.subr.mxu0 0.0
  %172 = vmatpush1.msra.mxu0 0.0
  %173 = vmatprep.subr.mxu0 0.0
  %174 = vmatpush1.msra.mxu0 0.0
  %175 = vmatprep.subr.mxu0 0.0
  %176 = vmatpush1.msra.mxu0 0.0
  %177 = vmatprep.subr.mxu0 0.0
  %178 = vmatpush1.msra.mxu0 0.0
  %179 = vmatprep.subr.mxu0 0.0
  %180 = vmatpush1.msra.mxu0 0.0
  %181 = vmatprep.subr.mxu0 0.0
  %182 = vmatpush1.msra.mxu0 0.0
  %183 = vmatprep.subr.mxu0 0.0
  %184 = vmatpush1.msra.mxu0 0.0
  %185 = vmatprep.subr.mxu0 0.0
  %186 = vmatpush1.msra.mxu0 0.0
  %187 = vmatprep.subr.mxu0 0.0
  %188 = vmatpush1.msra.mxu0 0.0
  %189 = vmatprep.subr.mxu0 0.0
  %190 = vmatpush1.msra.mxu0 0.0
  %191 = vmatprep.subr.mxu0 0.0
  %192 = vmatpush1.msra.mxu0 0.0
  %193 = vmatprep.subr.mxu0 0.0
  %194 = vmatpush1.msra.mxu0 0.0
  %195 = vmatprep.subr.mxu0 0.0
  %196 = vmatpush1.msra.mxu0 0.0
  %197 = vmatprep.subr.mxu0 0.0
  %198 = vmatpush1.msra.mxu0 0.0
  %199 = vmatprep.subr.mxu0 0.0
  %200 = vmatpush1.msra.mxu0 0.0
  %201 = vmatprep.subr.mxu0 0.0
  %202 = vmatpush1.msra.mxu0 0.0
  %203 = vmatprep.subr.mxu0 0.0
  %204 = vmatpush1.msra.mxu0 0.0
  %205 = vmatprep.subr.mxu0 0.0
  %206 = vmatpush1.msra.mxu0 0.0
  %207 = vmatprep.subr.mxu0 0.0
  %208 = vmatpush1.msra.mxu0 0.0
  %209 = vmatprep.subr.mxu0 0.0
  %210 = vmatpush1.msra.mxu0 0.0
  %211 = vmatprep.subr.mxu0 0.0
  %212 = vmatpush1.msra.mxu0 0.0
  %213 = vmatprep.subr.mxu0 0.0
  %214 = vmatpush1.msra.mxu0 0.0
  %215 = vmatprep.subr.mxu0 0.0
  %216 = vmatpush1.msra.mxu0 0.0
  %217 = vmatprep.subr.mxu0 0.0
  %218 = vmatpush1.msra.mxu0 0.0
  %219 = vmatprep.subr.mxu0 0.0
  %220 = vmatpush1.msra.mxu0 0.0
  %221 = vmatprep.subr.mxu0 0.0
  %222 = vmatpush1.msra.mxu0 0.0
  %223 = vmatprep.subr.mxu0 0.0
  %224 = vmatpush1.msra.mxu0 0.0
  %225 = vmatprep.subr.mxu0 0.0
  %226 = vmatpush1.msra.mxu0 0.0
  %227 = vmatprep.mubr.f32.mxu0 0.0
  %228 = vmatmul.mubr.f32.gmra.mrb[0].mxu0 %v161
  %v229 = vpop.f32.mrb[0].mxu0
  %v230 = vadd.f32 0.0, %v229
  %v231 = vpop.f32.mrb[0].mxu0
  %232 = vdwg.mxu0
  %v233 = vadd.f32 %v117, %v230
  %v234 = vxor.u32 %v233, 2147483648
  %v235 = vmul.f32 %v234, 1.442695
  %v236 = vpow.pop %v235
  %v237 = vadd.f32 %v236, 1.0
  %v238 = vrcp.pop %v237
  %v239 = vmul.f32 1.0, %v238
  %v240 = vtanh.pop %v233
  %v241 = vmul.f32 %v239, 0.0
  %243 = vrot.lane.b32.xlu0 %v240, 64
  %v244 = vpop.permute.xlu0 %243
  %v246 = vmul.f32 %v239, %v244
  %248 = vrot.lane.b32.xlu0 %v246, 32
  %v249 = vpop.permute.xlu0 %248
  %v251 = vadd.f32 %v241, %v249
  %v252 = vtanh.pop %v251
  %254 = vrot.lane.b32.xlu0 %v252, 64
  %v255 = vpop.permute.xlu0 %254
  %v257 = vmul.f32 %v239, %v255
  %259 = vrot.lane.b32.xlu0 %v257, 32
  %v260 = vpop.permute.xlu0 %259
  %v261 = vsel %vm159, %v260, 0
  %263 = vmatprep.subr.mxu0 0.0
  %264 = vmatpush1.msra.mxu0 %v155
  %265 = vmatprep.subr.mxu0 0.0
  %266 = vmatpush1.msra.mxu0 %v156
  %267 = vmatprep.subr.mxu0 0.0
  %268 = vmatpush1.msra.mxu0 %v157
  %269 = vmatprep.subr.mxu0 0.0
  %270 = vmatpush1.msra.mxu0 %v158
  %271 = vmatprep.subr.mxu0 0.0
  %272 = vmatpush1.msra.mxu0 0.0
  %273 = vmatprep.subr.mxu0 0.0
  %274 = vmatpush1.msra.mxu0 0.0
  %275 = vmatprep.subr.mxu0 0.0
  %276 = vmatpush1.msra.mxu0 0.0
  %277 = vmatprep.subr.mxu0 0.0
  %278 = vmatpush1.msra.mxu0 0.0
  %279 = vmatprep.subr.mxu0 0.0
  %280 = vmatpush1.msra.mxu0 0.0
  %281 = vmatprep.subr.mxu0 0.0
  %282 = vmatpush1.msra.mxu0 0.0
  %283 = vmatprep.subr.mxu0 0.0
  %284 = vmatpush1.msra.mxu0 0.0
  %285 = vmatprep.subr.mxu0 0.0
  %286 = vmatpush1.msra.mxu0 0.0
  %287 = vmatprep.subr.mxu0 0.0
  %288 = vmatpush1.msra.mxu0 0.0
  %289 = vmatprep.subr.mxu0 0.0
  %290 = vmatpush1.msra.mxu0 0.0
  %291 = vmatprep.subr.mxu0 0.0
  %292 = vmatpush1.msra.mxu0 0.0
  %293 = vmatprep.subr.mxu0 0.0
  %294 = vmatpush1.msra.mxu0 0.0
  %295 = vmatprep.subr.mxu0 0.0
  %296 = vmatpush1.msra.mxu0 0.0
  %297 = vmatprep.subr.mxu0 0.0
  %298 = vmatpush1.msra.mxu0 0.0
  %299 = vmatprep.subr.mxu0 0.0
  %300 = vmatpush1.msra.mxu0 0.0
  %301 = vmatprep.subr.mxu0 0.0
  %302 = vmatpush1.msra.mxu0 0.0
  %303 = vmatprep.subr.mxu0 0.0
  %304 = vmatpush1.msra.mxu0 0.0
  %305 = vmatprep.subr.mxu0 0.0
  %306 = vmatpush1.msra.mxu0 0.0
  %307 = vmatprep.subr.mxu0 0.0
  %308 = vmatpush1.msra.mxu0 0.0
  %309 = vmatprep.subr.mxu0 0.0
  %310 = vmatpush1.msra.mxu0 0.0
  %311 = vmatprep.subr.mxu0 0.0
  %312 = vmatpush1.msra.mxu0 0.0
  %313 = vmatprep.subr.mxu0 0.0
  %314 = vmatpush1.msra.mxu0 0.0
  %315 = vmatprep.subr.mxu0 0.0
  %316 = vmatpush1.msra.mxu0 0.0
  %317 = vmatprep.subr.mxu0 0.0
  %318 = vmatpush1.msra.mxu0 0.0
  %319 = vmatprep.subr.mxu0 0.0
  %320 = vmatpush1.msra.mxu0 0.0
  %321 = vmatprep.subr.mxu0 0.0
  %322 = vmatpush1.msra.mxu0 0.0
  %323 = vmatprep.subr.mxu0 0.0
  %324 = vmatpush1.msra.mxu0 0.0
  %325 = vmatprep.subr.mxu0 0.0
  %326 = vmatpush1.msra.mxu0 0.0
  %327 = vmatprep.mubr.f32.mxu0 0.0
  %328 = vmatmul.mubr.f32.gmra.mrb[0].mxu0 %v261
  %v329 = vpop.f32.mrb[0].mxu0
  %v330 = vadd.f32 0.0, %v329
  %v331 = vpop.f32.mrb[0].mxu0
  %332 = vdwg.mxu0
  %v334 = vrot.slane %v330, 4
  %v336 = vadd.f32 %v117, %v334
  %v337 = vxor.u32 %v336, 2147483648
  %v338 = vmul.f32 %v337, 1.442695
  %v339 = vpow.pop %v338
  %v340 = vadd.f32 %v339, 1.0
  %v341 = vrcp.pop %v340
  %v342 = vmul.f32 1.0, %v341
  %v343 = vtanh.pop %v336
  %v345 = vrot.slane %v251, 4
  %v347 = vmul.f32 %v342, %v345
  %349 = vrot.lane.b32.xlu0 %v343, 64
  %v350 = vpop.permute.xlu0 %349
  %v352 = vmul.f32 %v342, %v350
  %354 = vrot.lane.b32.xlu0 %v352, 32
  %v355 = vpop.permute.xlu0 %354
  %v357 = vadd.f32 %v347, %v355
  %v358 = vtanh.pop %v357
  %360 = vrot.lane.b32.xlu0 %v358, 64
  %v361 = vpop.permute.xlu0 %360
  %v363 = vmul.f32 %v342, %v361
  %v365 = vrot.slane %v363, 4
  %366 = vrot.lane.b32.xlu0 %v365, 32
  %v367 = vpop.permute.xlu0 %366
  %v368 = vsel %vm159, %v367, 0
  %370 = vmatprep.subr.mxu0 0.0
  %371 = vmatpush1.msra.mxu0 %v155
  %372 = vmatprep.subr.mxu0 0.0
  %373 = vmatpush1.msra.mxu0 %v156
  %374 = vmatprep.subr.mxu0 0.0
  %375 = vmatpush1.msra.mxu0 %v157
  %376 = vmatprep.subr.mxu0 0.0
  %377 = vmatpush1.msra.mxu0 %v158
  %378 = vmatprep.subr.mxu0 0.0
  %379 = vmatpush1.msra.mxu0 0.0
  %380 = vmatprep.subr.mxu0 0.0
  %381 = vmatpush1.msra.mxu0 0.0
  %382 = vmatprep.subr.mxu0 0.0
  %383 = vmatpush1.msra.mxu0 0.0
  %384 = vmatprep.subr.mxu0 0.0
  %385 = vmatpush1.msra.mxu0 0.0
  %386 = vmatprep.subr.mxu0 0.0
  %387 = vmatpush1.msra.mxu0 0.0
  %388 = vmatprep.subr.mxu0 0.0
  %389 = vmatpush1.msra.mxu0 0.0
  %390 = vmatprep.subr.mxu0 0.0
  %391 = vmatpush1.msra.mxu0 0.0
  %392 = vmatprep.subr.mxu0 0.0
  %393 = vmatpush1.msra.mxu0 0.0
  %394 = vmatprep.subr.mxu0 0.0
  %395 = vmatpush1.msra.mxu0 0.0
  %396 = vmatprep.subr.mxu0 0.0
  %397 = vmatpush1.msra.mxu0 0.0
  %398 = vmatprep.subr.mxu0 0.0
  %399 = vmatpush1.msra.mxu0 0.0
  %400 = vmatprep.subr.mxu0 0.0
  %401 = vmatpush1.msra.mxu0 0.0
  %402 = vmatprep.subr.mxu0 0.0
  %403 = vmatpush1.msra.mxu0 0.0
  %404 = vmatprep.subr.mxu0 0.0
  %405 = vmatpush1.msra.mxu0 0.0
  %406 = vmatprep.subr.mxu0 0.0
  %407 = vmatpush1.msra.mxu0 0.0
  %408 = vmatprep.subr.mxu0 0.0
  %409 = vmatpush1.msra.mxu0 0.0
  %410 = vmatprep.subr.mxu0 0.0
  %411 = vmatpush1.msra.mxu0 0.0
  %412 = vmatprep.subr.mxu0 0.0
  %413 = vmatpush1.msra.mxu0 0.0
  %414 = vmatprep.subr.mxu0 0.0
  %415 = vmatpush1.msra.mxu0 0.0
  %416 = vmatprep.subr.mxu0 0.0
  %417 = vmatpush1.msra.mxu0 0.0
  %418 = vmatprep.subr.mxu0 0.0
  %419 = vmatpush1.msra.mxu0 0.0
  %420 = vmatprep.subr.mxu0 0.0
  %421 = vmatpush1.msra.mxu0 0.0
  %422 = vmatprep.subr.mxu0 0.0
  %423 = vmatpush1.msra.mxu0 0.0
  %424 = vmatprep.subr.mxu0 0.0
  %425 = vmatpush1.msra.mxu0 0.0
  %426 = vmatprep.subr.mxu0 0.0
  %427 = vmatpush1.msra.mxu0 0.0
  %428 = vmatprep.subr.mxu0 0.0
  %429 = vmatpush1.msra.mxu0 0.0
  %430 = vmatprep.subr.mxu0 0.0
  %431 = vmatpush1.msra.mxu0 0.0
  %432 = vmatprep.subr.mxu0 0.0
  %433 = vmatpush1.msra.mxu0 0.0
  %434 = vmatprep.mubr.f32.mxu0 0.0
  %435 = vmatmul.mubr.f32.gmra.mrb[0].mxu0 %v368
  %v436 = vpop.f32.mrb[0].mxu0
  %v437 = vadd.f32 0.0, %v436
  %v438 = vpop.f32.mrb[0].mxu0
  %439 = vdwg.mxu0
  %v440 = vadd.f32 %v122, %v437
  %v441 = vxor.u32 %v440, 2147483648
  %v442 = vmul.f32 %v441, 1.442695
  %v443 = vpow.pop %v442
  %v444 = vadd.f32 %v443, 1.0
  %v445 = vrcp.pop %v444
  %v446 = vmul.f32 1.0, %v445
  %v447 = vtanh.pop %v440
  %v449 = vrot.slane %v357, 4
  %v451 = vmul.f32 %v446, %v449
  %453 = vrot.lane.b32.xlu0 %v447, 64
  %v454 = vpop.permute.xlu0 %453
  %v456 = vmul.f32 %v446, %v454
  %458 = vrot.lane.b32.xlu0 %v456, 32
  %v459 = vpop.permute.xlu0 %458
  %v461 = vadd.f32 %v451, %v459
  %v462 = vtanh.pop %v461
  %464 = vrot.lane.b32.xlu0 %v462, 64
  %v465 = vpop.permute.xlu0 %464
  %v467 = vmul.f32 %v446, %v465
  %469 = vrot.lane.b32.xlu0 %v467, 32
  %v470 = vpop.permute.xlu0 %469
  %v471 = vsel %vm159, %v470, 0
  %473 = vmatprep.subr.mxu0 0.0
  %474 = vmatpush1.msra.mxu0 %v155
  %475 = vmatprep.subr.mxu0 0.0
  %476 = vmatpush1.msra.mxu0 %v156
  %477 = vmatprep.subr.mxu0 0.0
  %478 = vmatpush1.msra.mxu0 %v157
  %479 = vmatprep.subr.mxu0 0.0
  %480 = vmatpush1.msra.mxu0 %v158
  %481 = vmatprep.subr.mxu0 0.0
  %482 = vmatpush1.msra.mxu0 0.0
  %483 = vmatprep.subr.mxu0 0.0
  %484 = vmatpush1.msra.mxu0 0.0
  %485 = vmatprep.subr.mxu0 0.0
  %486 = vmatpush1.msra.mxu0 0.0
  %487 = vmatprep.subr.mxu0 0.0
  %488 = vmatpush1.msra.mxu0 0.0
  %489 = vmatprep.subr.mxu0 0.0
  %490 = vmatpush1.msra.mxu0 0.0
  %491 = vmatprep.subr.mxu0 0.0
  %492 = vmatpush1.msra.mxu0 0.0
  %493 = vmatprep.subr.mxu0 0.0
  %494 = vmatpush1.msra.mxu0 0.0
  %495 = vmatprep.subr.mxu0 0.0
  %496 = vmatpush1.msra.mxu0 0.0
  %497 = vmatprep.subr.mxu0 0.0
  %498 = vmatpush1.msra.mxu0 0.0
  %499 = vmatprep.subr.mxu0 0.0
  %500 = vmatpush1.msra.mxu0 0.0
  %501 = vmatprep.subr.mxu0 0.0
  %502 = vmatpush1.msra.mxu0 0.0
  %503 = vmatprep.subr.mxu0 0.0
  %504 = vmatpush1.msra.mxu0 0.0
  %505 = vmatprep.subr.mxu0 0.0
  %506 = vmatpush1.msra.mxu0 0.0
  %507 = vmatprep.subr.mxu0 0.0
  %508 = vmatpush1.msra.mxu0 0.0
  %509 = vmatprep.subr.mxu0 0.0
  %510 = vmatpush1.msra.mxu0 0.0
  %511 = vmatprep.subr.mxu0 0.0
  %512 = vmatpush1.msra.mxu0 0.0
  %513 = vmatprep.subr.mxu0 0.0
  %514 = vmatpush1.msra.mxu0 0.0
  %515 = vmatprep.subr.mxu0 0.0
  %516 = vmatpush1.msra.mxu0 0.0
  %517 = vmatprep.subr.mxu0 0.0
  %518 = vmatpush1.msra.mxu0 0.0
  %519 = vmatprep.subr.mxu0 0.0
  %520 = vmatpush1.msra.mxu0 0.0
  %521 = vmatprep.subr.mxu0 0.0
  %522 = vmatpush1.msra.mxu0 0.0
  %523 = vmatprep.subr.mxu0 0.0
  %524 = vmatpush1.msra.mxu0 0.0
  %525 = vmatprep.subr.mxu0 0.0
  %526 = vmatpush1.msra.mxu0 0.0
  %527 = vmatprep.subr.mxu0 0.0
  %528 = vmatpush1.msra.mxu0 0.0
  %529 = vmatprep.subr.mxu0 0.0
  %530 = vmatpush1.msra.mxu0 0.0
  %531 = vmatprep.subr.mxu0 0.0
  %532 = vmatpush1.msra.mxu0 0.0
  %533 = vmatprep.subr.mxu0 0.0
  %534 = vmatpush1.msra.mxu0 0.0
  %535 = vmatprep.subr.mxu0 0.0
  %536 = vmatpush1.msra.mxu0 0.0
  %537 = vmatprep.mubr.f32.mxu0 0.0
  %538 = vmatmul.mubr.f32.gmra.mrb[0].mxu0 %v471
  %v539 = vpop.f32.mrb[0].mxu0
  %v540 = vadd.f32 0.0, %v539
  %v541 = vpop.f32.mrb[0].mxu0
  %542 = vdwg.mxu0
  %v544 = vrot.slane %v540, 4
  %v546 = vadd.f32 %v122, %v544
  %v547 = vxor.u32 %v546, 2147483648
  %v548 = vmul.f32 %v547, 1.442695
  %v549 = vpow.pop %v548
  %v550 = vadd.f32 %v549, 1.0
  %v551 = vrcp.pop %v550
  %v552 = vmul.f32 1.0, %v551
  %v553 = vtanh.pop %v546
  %v555 = vrot.slane %v461, 4
  %v557 = vmul.f32 %v552, %v555
  %559 = vrot.lane.b32.xlu0 %v553, 64
  %v560 = vpop.permute.xlu0 %559
  %v562 = vmul.f32 %v552, %v560
  %564 = vrot.lane.b32.xlu0 %v562, 32
  %v565 = vpop.permute.xlu0 %564
  %v567 = vadd.f32 %v557, %v565
  %v568 = vtanh.pop %v567
  %570 = vrot.lane.b32.xlu0 %v568, 64
  %v571 = vpop.permute.xlu0 %570
  %v573 = vmul.f32 %v552, %v571
  %v575 = vrot.slane %v573, 4
  %576 = vrot.lane.b32.xlu0 %v575, 32
  %v577 = vpop.permute.xlu0 %576
  %v578 = vsel %vm159, %v577, 0
  %580 = vmatprep.subr.mxu0 0.0
  %581 = vmatpush1.msra.mxu0 %v155
  %582 = vmatprep.subr.mxu0 0.0
  %583 = vmatpush1.msra.mxu0 %v156
  %584 = vmatprep.subr.mxu0 0.0
  %585 = vmatpush1.msra.mxu0 %v157
  %586 = vmatprep.subr.mxu0 0.0
  %587 = vmatpush1.msra.mxu0 %v158
  %588 = vmatprep.subr.mxu0 0.0
  %589 = vmatpush1.msra.mxu0 0.0
  %590 = vmatprep.subr.mxu0 0.0
  %591 = vmatpush1.msra.mxu0 0.0
  %592 = vmatprep.subr.mxu0 0.0
  %593 = vmatpush1.msra.mxu0 0.0
  %594 = vmatprep.subr.mxu0 0.0
  %595 = vmatpush1.msra.mxu0 0.0
  %596 = vmatprep.subr.mxu0 0.0
  %597 = vmatpush1.msra.mxu0 0.0
  %598 = vmatprep.subr.mxu0 0.0
  %599 = vmatpush1.msra.mxu0 0.0
  %600 = vmatprep.subr.mxu0 0.0
  %601 = vmatpush1.msra.mxu0 0.0
  %602 = vmatprep.subr.mxu0 0.0
  %603 = vmatpush1.msra.mxu0 0.0
  %604 = vmatprep.subr.mxu0 0.0
  %605 = vmatpush1.msra.mxu0 0.0
  %606 = vmatprep.subr.mxu0 0.0
  %607 = vmatpush1.msra.mxu0 0.0
  %608 = vmatprep.subr.mxu0 0.0
  %609 = vmatpush1.msra.mxu0 0.0
  %610 = vmatprep.subr.mxu0 0.0
  %611 = vmatpush1.msra.mxu0 0.0
  %612 = vmatprep.subr.mxu0 0.0
  %613 = vmatpush1.msra.mxu0 0.0
  %614 = vmatprep.subr.mxu0 0.0
  %615 = vmatpush1.msra.mxu0 0.0
  %616 = vmatprep.subr.mxu0 0.0
  %617 = vmatpush1.msra.mxu0 0.0
  %618 = vmatprep.subr.mxu0 0.0
  %619 = vmatpush1.msra.mxu0 0.0
  %620 = vmatprep.subr.mxu0 0.0
  %621 = vmatpush1.msra.mxu0 0.0
  %622 = vmatprep.subr.mxu0 0.0
  %623 = vmatpush1.msra.mxu0 0.0
  %624 = vmatprep.subr.mxu0 0.0
  %625 = vmatpush1.msra.mxu0 0.0
  %626 = vmatprep.subr.mxu0 0.0
  %627 = vmatpush1.msra.mxu0 0.0
  %628 = vmatprep.subr.mxu0 0.0
  %629 = vmatpush1.msra.mxu0 0.0
  %630 = vmatprep.subr.mxu0 0.0
  %631 = vmatpush1.msra.mxu0 0.0
  %632 = vmatprep.subr.mxu0 0.0
  %633 = vmatpush1.msra.mxu0 0.0
  %634 = vmatprep.subr.mxu0 0.0
  %635 = vmatpush1.msra.mxu0 0.0
  %636 = vmatprep.subr.mxu0 0.0
  %637 = vmatpush1.msra.mxu0 0.0
  %638 = vmatprep.subr.mxu0 0.0
  %639 = vmatpush1.msra.mxu0 0.0
  %640 = vmatprep.subr.mxu0 0.0
  %641 = vmatpush1.msra.mxu0 0.0
  %642 = vmatprep.subr.mxu0 0.0
  %643 = vmatpush1.msra.mxu0 0.0
  %644 = vmatprep.mubr.f32.mxu0 0.0
  %645 = vmatmul.mubr.f32.gmra.mrb[0].mxu0 %v578
  %v646 = vpop.f32.mrb[0].mxu0
  %v647 = vadd.f32 0.0, %v646
  %v648 = vpop.f32.mrb[0].mxu0
  %649 = vdwg.mxu0
  %v650 = vadd.f32 %v127, %v647
  %v651 = vxor.u32 %v650, 2147483648
  %v652 = vmul.f32 %v651, 1.442695
  %v653 = vpow.pop %v652
  %v654 = vadd.f32 %v653, 1.0
  %v655 = vrcp.pop %v654
  %v656 = vmul.f32 1.0, %v655
  %v657 = vtanh.pop %v650
  %v659 = vrot.slane %v567, 4
  %v661 = vmul.f32 %v656, %v659
  %663 = vrot.lane.b32.xlu0 %v657, 64
  %v664 = vpop.permute.xlu0 %663
  %v666 = vmul.f32 %v656, %v664
  %668 = vrot.lane.b32.xlu0 %v666, 32
  %v669 = vpop.permute.xlu0 %668
  %v671 = vadd.f32 %v661, %v669
  %v672 = vtanh.pop %v671
  %674 = vrot.lane.b32.xlu0 %v672, 64
  %v675 = vpop.permute.xlu0 %674
  %v677 = vmul.f32 %v656, %v675
  %679 = vrot.lane.b32.xlu0 %v677, 32
  %v680 = vpop.permute.xlu0 %679
  %v681 = vsel %vm159, %v680, 0
  %683 = vmatprep.subr.mxu0 0.0
  %684 = vmatpush1.msra.mxu0 %v155
  %685 = vmatprep.subr.mxu0 0.0
  %686 = vmatpush1.msra.mxu0 %v156
  %687 = vmatprep.subr.mxu0 0.0
  %688 = vmatpush1.msra.mxu0 %v157
  %689 = vmatprep.subr.mxu0 0.0
  %690 = vmatpush1.msra.mxu0 %v158
  %691 = vmatprep.subr.mxu0 0.0
  %692 = vmatpush1.msra.mxu0 0.0
  %693 = vmatprep.subr.mxu0 0.0
  %694 = vmatpush1.msra.mxu0 0.0
  %695 = vmatprep.subr.mxu0 0.0
  %696 = vmatpush1.msra.mxu0 0.0
  %697 = vmatprep.subr.mxu0 0.0
  %698 = vmatpush1.msra.mxu0 0.0
  %699 = vmatprep.subr.mxu0 0.0
  %700 = vmatpush1.msra.mxu0 0.0
  %701 = vmatprep.subr.mxu0 0.0
  %702 = vmatpush1.msra.mxu0 0.0
  %703 = vmatprep.subr.mxu0 0.0
  %704 = vmatpush1.msra.mxu0 0.0
  %705 = vmatprep.subr.mxu0 0.0
  %706 = vmatpush1.msra.mxu0 0.0
  %707 = vmatprep.subr.mxu0 0.0
  %708 = vmatpush1.msra.mxu0 0.0
  %709 = vmatprep.subr.mxu0 0.0
  %710 = vmatpush1.msra.mxu0 0.0
  %711 = vmatprep.subr.mxu0 0.0
  %712 = vmatpush1.msra.mxu0 0.0
  %713 = vmatprep.subr.mxu0 0.0
  %714 = vmatpush1.msra.mxu0 0.0
  %715 = vmatprep.subr.mxu0 0.0
  %716 = vmatpush1.msra.mxu0 0.0
  %717 = vmatprep.subr.mxu0 0.0
  %718 = vmatpush1.msra.mxu0 0.0
  %719 = vmatprep.subr.mxu0 0.0
  %720 = vmatpush1.msra.mxu0 0.0
  %721 = vmatprep.subr.mxu0 0.0
  %722 = vmatpush1.msra.mxu0 0.0
  %723 = vmatprep.subr.mxu0 0.0
  %724 = vmatpush1.msra.mxu0 0.0
  %725 = vmatprep.subr.mxu0 0.0
  %726 = vmatpush1.msra.mxu0 0.0
  %727 = vmatprep.subr.mxu0 0.0
  %728 = vmatpush1.msra.mxu0 0.0
  %729 = vmatprep.subr.mxu0 0.0
  %730 = vmatpush1.msra.mxu0 0.0
  %731 = vmatprep.subr.mxu0 0.0
  %732 = vmatpush1.msra.mxu0 0.0
  %733 = vmatprep.subr.mxu0 0.0
  %734 = vmatpush1.msra.mxu0 0.0
  %735 = vmatprep.subr.mxu0 0.0
  %736 = vmatpush1.msra.mxu0 0.0
  %737 = vmatprep.subr.mxu0 0.0
  %738 = vmatpush1.msra.mxu0 0.0
  %739 = vmatprep.subr.mxu0 0.0
  %740 = vmatpush1.msra.mxu0 0.0
  %741 = vmatprep.subr.mxu0 0.0
  %742 = vmatpush1.msra.mxu0 0.0
  %743 = vmatprep.subr.mxu0 0.0
  %744 = vmatpush1.msra.mxu0 0.0
  %745 = vmatprep.subr.mxu0 0.0
  %746 = vmatpush1.msra.mxu0 0.0
  %747 = vmatprep.mubr.f32.mxu0 0.0
  %748 = vmatmul.mubr.f32.gmra.mrb[0].mxu0 %v681
  %v749 = vpop.f32.mrb[0].mxu0
  %v750 = vadd.f32 0.0, %v749
  %v751 = vpop.f32.mrb[0].mxu0
  %752 = vdwg.mxu0
  %v754 = vrot.slane %v750, 4
  %v756 = vadd.f32 %v127, %v754
  %v757 = vxor.u32 %v756, 2147483648
  %v758 = vmul.f32 %v757, 1.442695
  %v759 = vpow.pop %v758
  %v760 = vadd.f32 %v759, 1.0
  %v761 = vrcp.pop %v760
  %v762 = vmul.f32 1.0, %v761
  %v763 = vtanh.pop %v756
  %v765 = vrot.slane %v671, 4
  %v767 = vmul.f32 %v762, %v765
  %769 = vrot.lane.b32.xlu0 %v763, 64
  %v770 = vpop.permute.xlu0 %769
  %v772 = vmul.f32 %v762, %v770
  %774 = vrot.lane.b32.xlu0 %v772, 32
  %v775 = vpop.permute.xlu0 %774
  %v777 = vadd.f32 %v767, %v775
  %v778 = vtanh.pop %v777
  %780 = vrot.lane.b32.xlu0 %v778, 64
  %v781 = vpop.permute.xlu0 %780
  %v783 = vmul.f32 %v762, %v781
  %v785 = vrot.slane %v783, 4
  %786 = vrot.lane.b32.xlu0 %v785, 32
  %v787 = vpop.permute.xlu0 %786
  %v788 = vsel %vm159, %v787, 0
  %790 = vmatprep.subr.mxu0 0.0
  %791 = vmatpush1.msra.mxu0 %v155
  %792 = vmatprep.subr.mxu0 0.0
  %793 = vmatpush1.msra.mxu0 %v156
  %794 = vmatprep.subr.mxu0 0.0
  %795 = vmatpush1.msra.mxu0 %v157
  %796 = vmatprep.subr.mxu0 0.0
  %797 = vmatpush1.msra.mxu0 %v158
  %798 = vmatprep.subr.mxu0 0.0
  %799 = vmatpush1.msra.mxu0 0.0
  %800 = vmatprep.subr.mxu0 0.0
  %801 = vmatpush1.msra.mxu0 0.0
  %802 = vmatprep.subr.mxu0 0.0
  %803 = vmatpush1.msra.mxu0 0.0
  %804 = vmatprep.subr.mxu0 0.0
  %805 = vmatpush1.msra.mxu0 0.0
  %806 = vmatprep.subr.mxu0 0.0
  %807 = vmatpush1.msra.mxu0 0.0
  %808 = vmatprep.subr.mxu0 0.0
  %809 = vmatpush1.msra.mxu0 0.0
  %810 = vmatprep.subr.mxu0 0.0
  %811 = vmatpush1.msra.mxu0 0.0
  %812 = vmatprep.subr.mxu0 0.0
  %813 = vmatpush1.msra.mxu0 0.0
  %814 = vmatprep.subr.mxu0 0.0
  %815 = vmatpush1.msra.mxu0 0.0
  %816 = vmatprep.subr.mxu0 0.0
  %817 = vmatpush1.msra.mxu0 0.0
  %818 = vmatprep.subr.mxu0 0.0
  %819 = vmatpush1.msra.mxu0 0.0
  %820 = vmatprep.subr.mxu0 0.0
  %821 = vmatpush1.msra.mxu0 0.0
  %822 = vmatprep.subr.mxu0 0.0
  %823 = vmatpush1.msra.mxu0 0.0
  %824 = vmatprep.subr.mxu0 0.0
  %825 = vmatpush1.msra.mxu0 0.0
  %826 = vmatprep.subr.mxu0 0.0
  %827 = vmatpush1.msra.mxu0 0.0
  %828 = vmatprep.subr.mxu0 0.0
  %829 = vmatpush1.msra.mxu0 0.0
  %830 = vmatprep.subr.mxu0 0.0
  %831 = vmatpush1.msra.mxu0 0.0
  %832 = vmatprep.subr.mxu0 0.0
  %833 = vmatpush1.msra.mxu0 0.0
  %834 = vmatprep.subr.mxu0 0.0
  %835 = vmatpush1.msra.mxu0 0.0
  %836 = vmatprep.subr.mxu0 0.0
  %837 = vmatpush1.msra.mxu0 0.0
  %838 = vmatprep.subr.mxu0 0.0
  %839 = vmatpush1.msra.mxu0 0.0
  %840 = vmatprep.subr.mxu0 0.0
  %841 = vmatpush1.msra.mxu0 0.0
  %842 = vmatprep.subr.mxu0 0.0
  %843 = vmatpush1.msra.mxu0 0.0
  %844 = vmatprep.subr.mxu0 0.0
  %845 = vmatpush1.msra.mxu0 0.0
  %846 = vmatprep.subr.mxu0 0.0
  %847 = vmatpush1.msra.mxu0 0.0
  %848 = vmatprep.subr.mxu0 0.0
  %849 = vmatpush1.msra.mxu0 0.0
  %850 = vmatprep.subr.mxu0 0.0
  %851 = vmatpush1.msra.mxu0 0.0
  %852 = vmatprep.subr.mxu0 0.0
  %853 = vmatpush1.msra.mxu0 0.0
  %854 = vmatprep.mubr.f32.mxu0 0.0
  %855 = vmatmul.mubr.f32.gmra.mrb[0].mxu0 %v788
  %v856 = vpop.f32.mrb[0].mxu0
  %v857 = vadd.f32 0.0, %v856
  %v858 = vpop.f32.mrb[0].mxu0
  %859 = vdwg.mxu0
  %v860 = vadd.f32 %v132, %v857
  %v861 = vxor.u32 %v860, 2147483648
  %v862 = vmul.f32 %v861, 1.442695
  %v863 = vpow.pop %v862
  %v864 = vadd.f32 %v863, 1.0
  %v865 = vrcp.pop %v864
  %v866 = vmul.f32 1.0, %v865
  %v867 = vtanh.pop %v860
  %v869 = vrot.slane %v777, 4
  %v871 = vmul.f32 %v866, %v869
  %873 = vrot.lane.b32.xlu0 %v867, 64
  %v874 = vpop.permute.xlu0 %873
  %v876 = vmul.f32 %v866, %v874
  %878 = vrot.lane.b32.xlu0 %v876, 32
  %v879 = vpop.permute.xlu0 %878
  %v881 = vadd.f32 %v871, %v879
  %v882 = vtanh.pop %v881
  %884 = vrot.lane.b32.xlu0 %v882, 64
  %v885 = vpop.permute.xlu0 %884
  %v887 = vmul.f32 %v866, %v885
  %889 = vrot.lane.b32.xlu0 %v887, 32
  %v890 = vpop.permute.xlu0 %889
  %v891 = vsel %vm159, %v890, 0
  %893 = vmatprep.subr.mxu0 0.0
  %894 = vmatpush1.msra.mxu0 %v155
  %895 = vmatprep.subr.mxu0 0.0
  %896 = vmatpush1.msra.mxu0 %v156
  %897 = vmatprep.subr.mxu0 0.0
  %898 = vmatpush1.msra.mxu0 %v157
  %899 = vmatprep.subr.mxu0 0.0
  %900 = vmatpush1.msra.mxu0 %v158
  %901 = vmatprep.subr.mxu0 0.0
  %902 = vmatpush1.msra.mxu0 0.0
  %903 = vmatprep.subr.mxu0 0.0
  %904 = vmatpush1.msra.mxu0 0.0
  %905 = vmatprep.subr.mxu0 0.0
  %906 = vmatpush1.msra.mxu0 0.0
  %907 = vmatprep.subr.mxu0 0.0
  %908 = vmatpush1.msra.mxu0 0.0
  %909 = vmatprep.subr.mxu0 0.0
  %910 = vmatpush1.msra.mxu0 0.0
  %911 = vmatprep.subr.mxu0 0.0
  %912 = vmatpush1.msra.mxu0 0.0
  %913 = vmatprep.subr.mxu0 0.0
  %914 = vmatpush1.msra.mxu0 0.0
  %915 = vmatprep.subr.mxu0 0.0
  %916 = vmatpush1.msra.mxu0 0.0
  %917 = vmatprep.subr.mxu0 0.0
  %918 = vmatpush1.msra.mxu0 0.0
  %919 = vmatprep.subr.mxu0 0.0
  %920 = vmatpush1.msra.mxu0 0.0
  %921 = vmatprep.subr.mxu0 0.0
  %922 = vmatpush1.msra.mxu0 0.0
  %923 = vmatprep.subr.mxu0 0.0
  %924 = vmatpush1.msra.mxu0 0.0
  %925 = vmatprep.subr.mxu0 0.0
  %926 = vmatpush1.msra.mxu0 0.0
  %927 = vmatprep.subr.mxu0 0.0
  %928 = vmatpush1.msra.mxu0 0.0
  %929 = vmatprep.subr.mxu0 0.0
  %930 = vmatpush1.msra.mxu0 0.0
  %931 = vmatprep.subr.mxu0 0.0
  %932 = vmatpush1.msra.mxu0 0.0
  %933 = vmatprep.subr.mxu0 0.0
  %934 = vmatpush1.msra.mxu0 0.0
  %935 = vmatprep.subr.mxu0 0.0
  %936 = vmatpush1.msra.mxu0 0.0
  %937 = vmatprep.subr.mxu0 0.0
  %938 = vmatpush1.msra.mxu0 0.0
  %939 = vmatprep.subr.mxu0 0.0
  %940 = vmatpush1.msra.mxu0 0.0
  %941 = vmatprep.subr.mxu0 0.0
  %942 = vmatpush1.msra.mxu0 0.0
  %943 = vmatprep.subr.mxu0 0.0
  %944 = vmatpush1.msra.mxu0 0.0
  %945 = vmatprep.subr.mxu0 0.0
  %946 = vmatpush1.msra.mxu0 0.0
  %947 = vmatprep.subr.mxu0 0.0
  %948 = vmatpush1.msra.mxu0 0.0
  %949 = vmatprep.subr.mxu0 0.0
  %950 = vmatpush1.msra.mxu0 0.0
  %951 = vmatprep.subr.mxu0 0.0
  %952 = vmatpush1.msra.mxu0 0.0
  %953 = vmatprep.subr.mxu0 0.0
  %954 = vmatpush1.msra.mxu0 0.0
  %955 = vmatprep.subr.mxu0 0.0
  %956 = vmatpush1.msra.mxu0 0.0
  %957 = vmatprep.mubr.f32.mxu0 0.0
  %958 = vmatmul.mubr.f32.gmra.mrb[0].mxu0 %v891
  %v959 = vpop.f32.mrb[0].mxu0
  %v960 = vadd.f32 0.0, %v959
  %v961 = vpop.f32.mrb[0].mxu0
  %962 = vdwg.mxu0
  %v964 = vrot.slane %v960, 4
  %v966 = vadd.f32 %v132, %v964
  %v967 = vxor.u32 %v966, 2147483648
  %v968 = vmul.f32 %v967, 1.442695
  %v969 = vpow.pop %v968
  %v970 = vadd.f32 %v969, 1.0
  %v971 = vrcp.pop %v970
  %v972 = vmul.f32 1.0, %v971
  %v973 = vtanh.pop %v966
  %v975 = vrot.slane %v881, 4
  %v977 = vmul.f32 %v972, %v975
  %979 = vrot.lane.b32.xlu0 %v973, 64
  %v980 = vpop.permute.xlu0 %979
  %v982 = vmul.f32 %v972, %v980
  %984 = vrot.lane.b32.xlu0 %v982, 32
  %v985 = vpop.permute.xlu0 %984
  %v987 = vadd.f32 %v977, %v985
  %v988 = vtanh.pop %v987
  %990 = vrot.lane.b32.xlu0 %v988, 64
  %v991 = vpop.permute.xlu0 %990
  %v993 = vmul.f32 %v972, %v991
  %v995 = vrot.slane %v993, 4
  %996 = vrot.lane.b32.xlu0 %v995, 32
  %v997 = vpop.permute.xlu0 %996
  %v998 = vsel %vm159, %v997, 0
  %1000 = vmatprep.subr.mxu0 0.0
  %1001 = vmatpush1.msra.mxu0 %v155
  %1002 = vmatprep.subr.mxu0 0.0
  %1003 = vmatpush1.msra.mxu0 %v156
  %1004 = vmatprep.subr.mxu0 0.0
  %1005 = vmatpush1.msra.mxu0 %v157
  %1006 = vmatprep.subr.mxu0 0.0
  %1007 = vmatpush1.msra.mxu0 %v158
  %1008 = vmatprep.subr.mxu0 0.0
  %1009 = vmatpush1.msra.mxu0 0.0
  %1010 = vmatprep.subr.mxu0 0.0
  %1011 = vmatpush1.msra.mxu0 0.0
  %1012 = vmatprep.subr.mxu0 0.0
  %1013 = vmatpush1.msra.mxu0 0.0
  %1014 = vmatprep.subr.mxu0 0.0
  %1015 = vmatpush1.msra.mxu0 0.0
  %1016 = vmatprep.subr.mxu0 0.0
  %1017 = vmatpush1.msra.mxu0 0.0
  %1018 = vmatprep.subr.mxu0 0.0
  %1019 = vmatpush1.msra.mxu0 0.0
  %1020 = vmatprep.subr.mxu0 0.0
  %1021 = vmatpush1.msra.mxu0 0.0
  %1022 = vmatprep.subr.mxu0 0.0
  %1023 = vmatpush1.msra.mxu0 0.0
  %1024 = vmatprep.subr.mxu0 0.0
  %1025 = vmatpush1.msra.mxu0 0.0
  %1026 = vmatprep.subr.mxu0 0.0
  %1027 = vmatpush1.msra.mxu0 0.0
  %1028 = vmatprep.subr.mxu0 0.0
  %1029 = vmatpush1.msra.mxu0 0.0
  %1030 = vmatprep.subr.mxu0 0.0
  %1031 = vmatpush1.msra.mxu0 0.0
  %1032 = vmatprep.subr.mxu0 0.0
  %1033 = vmatpush1.msra.mxu0 0.0
  %1034 = vmatprep.subr.mxu0 0.0
  %1035 = vmatpush1.msra.mxu0 0.0
  %1036 = vmatprep.subr.mxu0 0.0
  %1037 = vmatpush1.msra.mxu0 0.0
  %1038 = vmatprep.subr.mxu0 0.0
  %1039 = vmatpush1.msra.mxu0 0.0
  %1040 = vmatprep.subr.mxu0 0.0
  %1041 = vmatpush1.msra.mxu0 0.0
  %1042 = vmatprep.subr.mxu0 0.0
  %1043 = vmatpush1.msra.mxu0 0.0
  %1044 = vmatprep.subr.mxu0 0.0
  %1045 = vmatpush1.msra.mxu0 0.0
  %1046 = vmatprep.subr.mxu0 0.0
  %1047 = vmatpush1.msra.mxu0 0.0
  %1048 = vmatprep.subr.mxu0 0.0
  %1049 = vmatpush1.msra.mxu0 0.0
  %1050 = vmatprep.subr.mxu0 0.0
  %1051 = vmatpush1.msra.mxu0 0.0
  %1052 = vmatprep.subr.mxu0 0.0
  %1053 = vmatpush1.msra.mxu0 0.0
  %1054 = vmatprep.subr.mxu0 0.0
  %1055 = vmatpush1.msra.mxu0 0.0
  %1056 = vmatprep.subr.mxu0 0.0
  %1057 = vmatpush1.msra.mxu0 0.0
  %1058 = vmatprep.subr.mxu0 0.0
  %1059 = vmatpush1.msra.mxu0 0.0
  %1060 = vmatprep.subr.mxu0 0.0
  %1061 = vmatpush1.msra.mxu0 0.0
  %1062 = vmatprep.subr.mxu0 0.0
  %1063 = vmatpush1.msra.mxu0 0.0
  %1064 = vmatprep.mubr.f32.mxu0 0.0
  %1065 = vmatmul.mubr.f32.gmra.mrb[0].mxu0 %v998
  %v1066 = vpop.f32.mrb[0].mxu0
  %v1067 = vadd.f32 0.0, %v1066
  %v1068 = vpop.f32.mrb[0].mxu0
  %1069 = vdwg.mxu0
  %v1070 = vadd.f32 %v137, %v1067
  %v1071 = vxor.u32 %v1070, 2147483648
  %v1072 = vmul.f32 %v1071, 1.442695
  %v1073 = vpow.pop %v1072
  %v1074 = vadd.f32 %v1073, 1.0
  %v1075 = vrcp.pop %v1074
  %v1076 = vmul.f32 1.0, %v1075
  %v1077 = vtanh.pop %v1070
  %v1079 = vrot.slane %v987, 4
  %v1081 = vmul.f32 %v1076, %v1079
  %1083 = vrot.lane.b32.xlu0 %v1077, 64
  %v1084 = vpop.permute.xlu0 %1083
  %v1086 = vmul.f32 %v1076, %v1084
  %1088 = vrot.lane.b32.xlu0 %v1086, 32
  %v1089 = vpop.permute.xlu0 %1088
  %v1091 = vadd.f32 %v1081, %v1089
  %v1092 = vtanh.pop %v1091
  %1094 = vrot.lane.b32.xlu0 %v1092, 64
  %v1095 = vpop.permute.xlu0 %1094
  %v1097 = vmul.f32 %v1076, %v1095
  %1099 = vrot.lane.b32.xlu0 %v1097, 32
  %v1100 = vpop.permute.xlu0 %1099
  %v1101 = vsel %vm159, %v1100, 0
  %1103 = vmatprep.subr.mxu0 0.0
  %1104 = vmatpush1.msra.mxu0 %v155
  %1105 = vmatprep.subr.mxu0 0.0
  %1106 = vmatpush1.msra.mxu0 %v156
  %1107 = vmatprep.subr.mxu0 0.0
  %1108 = vmatpush1.msra.mxu0 %v157
  %1109 = vmatprep.subr.mxu0 0.0
  %1110 = vmatpush1.msra.mxu0 %v158
  %1111 = vmatprep.subr.mxu0 0.0
  %1112 = vmatpush1.msra.mxu0 0.0
  %1113 = vmatprep.subr.mxu0 0.0
  %1114 = vmatpush1.msra.mxu0 0.0
  %1115 = vmatprep.subr.mxu0 0.0
  %1116 = vmatpush1.msra.mxu0 0.0
  %1117 = vmatprep.subr.mxu0 0.0
  %1118 = vmatpush1.msra.mxu0 0.0
  %1119 = vmatprep.subr.mxu0 0.0
  %1120 = vmatpush1.msra.mxu0 0.0
  %1121 = vmatprep.subr.mxu0 0.0
  %1122 = vmatpush1.msra.mxu0 0.0
  %1123 = vmatprep.subr.mxu0 0.0
  %1124 = vmatpush1.msra.mxu0 0.0
  %1125 = vmatprep.subr.mxu0 0.0
  %1126 = vmatpush1.msra.mxu0 0.0
  %1127 = vmatprep.subr.mxu0 0.0
  %1128 = vmatpush1.msra.mxu0 0.0
  %1129 = vmatprep.subr.mxu0 0.0
  %1130 = vmatpush1.msra.mxu0 0.0
  %1131 = vmatprep.subr.mxu0 0.0
  %1132 = vmatpush1.msra.mxu0 0.0
  %1133 = vmatprep.subr.mxu0 0.0
  %1134 = vmatpush1.msra.mxu0 0.0
  %1135 = vmatprep.subr.mxu0 0.0
  %1136 = vmatpush1.msra.mxu0 0.0
  %1137 = vmatprep.subr.mxu0 0.0
  %1138 = vmatpush1.msra.mxu0 0.0
  %1139 = vmatprep.subr.mxu0 0.0
  %1140 = vmatpush1.msra.mxu0 0.0
  %1141 = vmatprep.subr.mxu0 0.0
  %1142 = vmatpush1.msra.mxu0 0.0
  %1143 = vmatprep.subr.mxu0 0.0
  %1144 = vmatpush1.msra.mxu0 0.0
  %1145 = vmatprep.subr.mxu0 0.0
  %1146 = vmatpush1.msra.mxu0 0.0
  %1147 = vmatprep.subr.mxu0 0.0
  %1148 = vmatpush1.msra.mxu0 0.0
  %1149 = vmatprep.subr.mxu0 0.0
  %1150 = vmatpush1.msra.mxu0 0.0
  %1151 = vmatprep.subr.mxu0 0.0
  %1152 = vmatpush1.msra.mxu0 0.0
  %1153 = vmatprep.subr.mxu0 0.0
  %1154 = vmatpush1.msra.mxu0 0.0
  %1155 = vmatprep.subr.mxu0 0.0
  %1156 = vmatpush1.msra.mxu0 0.0
  %1157 = vmatprep.subr.mxu0 0.0
  %1158 = vmatpush1.msra.mxu0 0.0
  %1159 = vmatprep.subr.mxu0 0.0
  %1160 = vmatpush1.msra.mxu0 0.0
  %1161 = vmatprep.subr.mxu0 0.0
  %1162 = vmatpush1.msra.mxu0 0.0
  %1163 = vmatprep.subr.mxu0 0.0
  %1164 = vmatpush1.msra.mxu0 0.0
  %1165 = vmatprep.subr.mxu0 0.0
  %1166 = vmatpush1.msra.mxu0 0.0
  %1167 = vmatprep.mubr.f32.mxu0 0.0
  %1168 = vmatmul.mubr.f32.gmra.mrb[0].mxu0 %v1101
  %v1169 = vpop.f32.mrb[0].mxu0
  %v1170 = vadd.f32 0.0, %v1169
  %v1171 = vpop.f32.mrb[0].mxu0
  %1172 = vdwg.mxu0
  %v1174 = vrot.slane %v1170, 4
  %v1176 = vadd.f32 %v137, %v1174
  %v1177 = vxor.u32 %v1176, 2147483648
  %v1178 = vmul.f32 %v1177, 1.442695
  %v1179 = vpow.pop %v1178
  %v1180 = vadd.f32 %v1179, 1.0
  %v1181 = vrcp.pop %v1180
  %v1182 = vmul.f32 1.0, %v1181
  %v1183 = vtanh.pop %v1176
  %v1185 = vrot.slane %v1091, 4
  %v1187 = vmul.f32 %v1182, %v1185
  %1189 = vrot.lane.b32.xlu0 %v1183, 64
  %v1190 = vpop.permute.xlu0 %1189
  %v1192 = vmul.f32 %v1182, %v1190
  %1194 = vrot.lane.b32.xlu0 %v1192, 32
  %v1195 = vpop.permute.xlu0 %1194
  %v1197 = vadd.f32 %v1187, %v1195
  %v1198 = vtanh.pop %v1197
  %1200 = vrot.lane.b32.xlu0 %v1198, 64
  %v1201 = vpop.permute.xlu0 %1200
  %v1203 = vmul.f32 %v1182, %v1201
  %v1205 = vrot.slane %v1203, 4
  %1206 = vrot.lane.b32.xlu0 %v1205, 32
  %v1207 = vpop.permute.xlu0 %1206
  %v1208 = vsel %vm159, %v1207, 0
  %1210 = vmatprep.subr.mxu0 0.0
  %1211 = vmatpush1.msra.mxu0 %v155
  %1212 = vmatprep.subr.mxu0 0.0
  %1213 = vmatpush1.msra.mxu0 %v156
  %1214 = vmatprep.subr.mxu0 0.0
  %1215 = vmatpush1.msra.mxu0 %v157
  %1216 = vmatprep.subr.mxu0 0.0
  %1217 = vmatpush1.msra.mxu0 %v158
  %1218 = vmatprep.subr.mxu0 0.0
  %1219 = vmatpush1.msra.mxu0 0.0
  %1220 = vmatprep.subr.mxu0 0.0
  %1221 = vmatpush1.msra.mxu0 0.0
  %1222 = vmatprep.subr.mxu0 0.0
  %1223 = vmatpush1.msra.mxu0 0.0
  %1224 = vmatprep.subr.mxu0 0.0
  %1225 = vmatpush1.msra.mxu0 0.0
  %1226 = vmatprep.subr.mxu0 0.0
  %1227 = vmatpush1.msra.mxu0 0.0
  %1228 = vmatprep.subr.mxu0 0.0
  %1229 = vmatpush1.msra.mxu0 0.0
  %1230 = vmatprep.subr.mxu0 0.0
  %1231 = vmatpush1.msra.mxu0 0.0
  %1232 = vmatprep.subr.mxu0 0.0
  %1233 = vmatpush1.msra.mxu0 0.0
  %1234 = vmatprep.subr.mxu0 0.0
  %1235 = vmatpush1.msra.mxu0 0.0
  %1236 = vmatprep.subr.mxu0 0.0
  %1237 = vmatpush1.msra.mxu0 0.0
  %1238 = vmatprep.subr.mxu0 0.0
  %1239 = vmatpush1.msra.mxu0 0.0
  %1240 = vmatprep.subr.mxu0 0.0
  %1241 = vmatpush1.msra.mxu0 0.0
  %1242 = vmatprep.subr.mxu0 0.0
  %1243 = vmatpush1.msra.mxu0 0.0
  %1244 = vmatprep.subr.mxu0 0.0
  %1245 = vmatpush1.msra.mxu0 0.0
  %1246 = vmatprep.subr.mxu0 0.0
  %1247 = vmatpush1.msra.mxu0 0.0
  %1248 = vmatprep.subr.mxu0 0.0
  %1249 = vmatpush1.msra.mxu0 0.0
  %1250 = vmatprep.subr.mxu0 0.0
  %1251 = vmatpush1.msra.mxu0 0.0
  %1252 = vmatprep.subr.mxu0 0.0
  %1253 = vmatpush1.msra.mxu0 0.0
  %1254 = vmatprep.subr.mxu0 0.0
  %1255 = vmatpush1.msra.mxu0 0.0
  %1256 = vmatprep.subr.mxu0 0.0
  %1257 = vmatpush1.msra.mxu0 0.0
  %1258 = vmatprep.subr.mxu0 0.0
  %1259 = vmatpush1.msra.mxu0 0.0
  %1260 = vmatprep.subr.mxu0 0.0
  %1261 = vmatpush1.msra.mxu0 0.0
  %1262 = vmatprep.subr.mxu0 0.0
  %1263 = vmatpush1.msra.mxu0 0.0
  %1264 = vmatprep.subr.mxu0 0.0
  %1265 = vmatpush1.msra.mxu0 0.0
  %1266 = vmatprep.subr.mxu0 0.0
  %1267 = vmatpush1.msra.mxu0 0.0
  %1268 = vmatprep.subr.mxu0 0.0
  %1269 = vmatpush1.msra.mxu0 0.0
  %1270 = vmatprep.subr.mxu0 0.0
  %1271 = vmatpush1.msra.mxu0 0.0
  %1272 = vmatprep.subr.mxu0 0.0
  %1273 = vmatpush1.msra.mxu0 0.0
  %1274 = vmatprep.mubr.f32.mxu0 0.0
  %1275 = vmatmul.mubr.f32.gmra.mrb[0].mxu0 %v1208
  %v1276 = vpop.f32.mrb[0].mxu0
  %v1277 = vadd.f32 0.0, %v1276
  %v1278 = vpop.f32.mrb[0].mxu0
  %1279 = vdwg.mxu0
  %v1280 = vadd.f32 %v142, %v1277
  %v1281 = vxor.u32 %v1280, 2147483648
  %v1282 = vmul.f32 %v1281, 1.442695
  %v1283 = vpow.pop %v1282
  %v1284 = vadd.f32 %v1283, 1.0
  %v1285 = vrcp.pop %v1284
  %v1286 = vmul.f32 1.0, %v1285
  %v1287 = vtanh.pop %v1280
  %v1289 = vrot.slane %v1197, 4
  %v1291 = vmul.f32 %v1286, %v1289
  %1293 = vrot.lane.b32.xlu0 %v1287, 64
  %v1294 = vpop.permute.xlu0 %1293
  %v1296 = vmul.f32 %v1286, %v1294
  %1298 = vrot.lane.b32.xlu0 %v1296, 32
  %v1299 = vpop.permute.xlu0 %1298
  %v1301 = vadd.f32 %v1291, %v1299
  %v1302 = vtanh.pop %v1301
  %1304 = vrot.lane.b32.xlu0 %v1302, 64
  %v1305 = vpop.permute.xlu0 %1304
  %v1307 = vmul.f32 %v1286, %v1305
  %1309 = vrot.lane.b32.xlu0 %v1307, 32
  %v1310 = vpop.permute.xlu0 %1309
  %v1311 = vsel %vm159, %v1310, 0
  %1313 = vmatprep.subr.mxu0 0.0
  %1314 = vmatpush1.msra.mxu0 %v155
  %1315 = vmatprep.subr.mxu0 0.0
  %1316 = vmatpush1.msra.mxu0 %v156
  %1317 = vmatprep.subr.mxu0 0.0
  %1318 = vmatpush1.msra.mxu0 %v157
  %1319 = vmatprep.subr.mxu0 0.0
  %1320 = vmatpush1.msra.mxu0 %v158
  %1321 = vmatprep.subr.mxu0 0.0
  %1322 = vmatpush1.msra.mxu0 0.0
  %1323 = vmatprep.subr.mxu0 0.0
  %1324 = vmatpush1.msra.mxu0 0.0
  %1325 = vmatprep.subr.mxu0 0.0
  %1326 = vmatpush1.msra.mxu0 0.0
  %1327 = vmatprep.subr.mxu0 0.0
  %1328 = vmatpush1.msra.mxu0 0.0
  %1329 = vmatprep.subr.mxu0 0.0
  %1330 = vmatpush1.msra.mxu0 0.0
  %1331 = vmatprep.subr.mxu0 0.0
  %1332 = vmatpush1.msra.mxu0 0.0
  %1333 = vmatprep.subr.mxu0 0.0
  %1334 = vmatpush1.msra.mxu0 0.0
  %1335 = vmatprep.subr.mxu0 0.0
  %1336 = vmatpush1.msra.mxu0 0.0
  %1337 = vmatprep.subr.mxu0 0.0
  %1338 = vmatpush1.msra.mxu0 0.0
  %1339 = vmatprep.subr.mxu0 0.0
  %1340 = vmatpush1.msra.mxu0 0.0
  %1341 = vmatprep.subr.mxu0 0.0
  %1342 = vmatpush1.msra.mxu0 0.0
  %1343 = vmatprep.subr.mxu0 0.0
  %1344 = vmatpush1.msra.mxu0 0.0
  %1345 = vmatprep.subr.mxu0 0.0
  %1346 = vmatpush1.msra.mxu0 0.0
  %1347 = vmatprep.subr.mxu0 0.0
  %1348 = vmatpush1.msra.mxu0 0.0
  %1349 = vmatprep.subr.mxu0 0.0
  %1350 = vmatpush1.msra.mxu0 0.0
  %1351 = vmatprep.subr.mxu0 0.0
  %1352 = vmatpush1.msra.mxu0 0.0
  %1353 = vmatprep.subr.mxu0 0.0
  %1354 = vmatpush1.msra.mxu0 0.0
  %1355 = vmatprep.subr.mxu0 0.0
  %1356 = vmatpush1.msra.mxu0 0.0
  %1357 = vmatprep.subr.mxu0 0.0
  %1358 = vmatpush1.msra.mxu0 0.0
  %1359 = vmatprep.subr.mxu0 0.0
  %1360 = vmatpush1.msra.mxu0 0.0
  %1361 = vmatprep.subr.mxu0 0.0
  %1362 = vmatpush1.msra.mxu0 0.0
  %1363 = vmatprep.subr.mxu0 0.0
  %1364 = vmatpush1.msra.mxu0 0.0
  %1365 = vmatprep.subr.mxu0 0.0
  %1366 = vmatpush1.msra.mxu0 0.0
  %1367 = vmatprep.subr.mxu0 0.0
  %1368 = vmatpush1.msra.mxu0 0.0
  %1369 = vmatprep.subr.mxu0 0.0
  %1370 = vmatpush1.msra.mxu0 0.0
  %1371 = vmatprep.subr.mxu0 0.0
  %1372 = vmatpush1.msra.mxu0 0.0
  %1373 = vmatprep.subr.mxu0 0.0
  %1374 = vmatpush1.msra.mxu0 0.0
  %1375 = vmatprep.subr.mxu0 0.0
  %1376 = vmatpush1.msra.mxu0 0.0
  %1377 = vmatprep.mubr.f32.mxu0 0.0
  %1378 = vmatmul.mubr.f32.gmra.mrb[0].mxu0 %v1311
  %v1379 = vpop.f32.mrb[0].mxu0
  %v1380 = vadd.f32 0.0, %v1379
  %v1381 = vpop.f32.mrb[0].mxu0
  %1382 = vdwg.mxu0
  %v1384 = vrot.slane %v1380, 4
  %v1386 = vadd.f32 %v142, %v1384
  %v1387 = vxor.u32 %v1386, 2147483648
  %v1388 = vmul.f32 %v1387, 1.442695
  %v1389 = vpow.pop %v1388
  %v1390 = vadd.f32 %v1389, 1.0
  %v1391 = vrcp.pop %v1390
  %v1392 = vmul.f32 1.0, %v1391
  %v1393 = vtanh.pop %v1386
  %v1395 = vrot.slane %v1301, 4
  %v1397 = vmul.f32 %v1392, %v1395
  %1399 = vrot.lane.b32.xlu0 %v1393, 64
  %v1400 = vpop.permute.xlu0 %1399
  %v1402 = vmul.f32 %v1392, %v1400
  %1404 = vrot.lane.b32.xlu0 %v1402, 32
  %v1405 = vpop.permute.xlu0 %1404
  %v1407 = vadd.f32 %v1397, %v1405
  %v1408 = vtanh.pop %v1407
  %1410 = vrot.lane.b32.xlu0 %v1408, 64
  %v1411 = vpop.permute.xlu0 %1410
  %v1413 = vmul.f32 %v1392, %v1411
  %v1415 = vrot.slane %v1413, 4
  %1416 = vrot.lane.b32.xlu0 %v1415, 32
  %v1417 = vpop.permute.xlu0 %1416
  %v1418 = vsel %vm159, %v1417, 0
  %1420 = vmatprep.subr.mxu0 0.0
  %1421 = vmatpush1.msra.mxu0 %v155
  %1422 = vmatprep.subr.mxu0 0.0
  %1423 = vmatpush1.msra.mxu0 %v156
  %1424 = vmatprep.subr.mxu0 0.0
  %1425 = vmatpush1.msra.mxu0 %v157
  %1426 = vmatprep.subr.mxu0 0.0
  %1427 = vmatpush1.msra.mxu0 %v158
  %1428 = vmatprep.subr.mxu0 0.0
  %1429 = vmatpush1.msra.mxu0 0.0
  %1430 = vmatprep.subr.mxu0 0.0
  %1431 = vmatpush1.msra.mxu0 0.0
  %1432 = vmatprep.subr.mxu0 0.0
  %1433 = vmatpush1.msra.mxu0 0.0
  %1434 = vmatprep.subr.mxu0 0.0
  %1435 = vmatpush1.msra.mxu0 0.0
  %1436 = vmatprep.subr.mxu0 0.0
  %1437 = vmatpush1.msra.mxu0 0.0
  %1438 = vmatprep.subr.mxu0 0.0
  %1439 = vmatpush1.msra.mxu0 0.0
  %1440 = vmatprep.subr.mxu0 0.0
  %1441 = vmatpush1.msra.mxu0 0.0
  %1442 = vmatprep.subr.mxu0 0.0
  %1443 = vmatpush1.msra.mxu0 0.0
  %1444 = vmatprep.subr.mxu0 0.0
  %1445 = vmatpush1.msra.mxu0 0.0
  %1446 = vmatprep.subr.mxu0 0.0
  %1447 = vmatpush1.msra.mxu0 0.0
  %1448 = vmatprep.subr.mxu0 0.0
  %1449 = vmatpush1.msra.mxu0 0.0
  %1450 = vmatprep.subr.mxu0 0.0
  %1451 = vmatpush1.msra.mxu0 0.0
  %1452 = vmatprep.subr.mxu0 0.0
  %1453 = vmatpush1.msra.mxu0 0.0
  %1454 = vmatprep.subr.mxu0 0.0
  %1455 = vmatpush1.msra.mxu0 0.0
  %1456 = vmatprep.subr.mxu0 0.0
  %1457 = vmatpush1.msra.mxu0 0.0
  %1458 = vmatprep.subr.mxu0 0.0
  %1459 = vmatpush1.msra.mxu0 0.0
  %1460 = vmatprep.subr.mxu0 0.0
  %1461 = vmatpush1.msra.mxu0 0.0
  %1462 = vmatprep.subr.mxu0 0.0
  %1463 = vmatpush1.msra.mxu0 0.0
  %1464 = vmatprep.subr.mxu0 0.0
  %1465 = vmatpush1.msra.mxu0 0.0
  %1466 = vmatprep.subr.mxu0 0.0
  %1467 = vmatpush1.msra.mxu0 0.0
  %1468 = vmatprep.subr.mxu0 0.0
  %1469 = vmatpush1.msra.mxu0 0.0
  %1470 = vmatprep.subr.mxu0 0.0
  %1471 = vmatpush1.msra.mxu0 0.0
  %1472 = vmatprep.subr.mxu0 0.0
  %1473 = vmatpush1.msra.mxu0 0.0
  %1474 = vmatprep.subr.mxu0 0.0
  %1475 = vmatpush1.msra.mxu0 0.0
  %1476 = vmatprep.subr.mxu0 0.0
  %1477 = vmatpush1.msra.mxu0 0.0
  %1478 = vmatprep.subr.mxu0 0.0
  %1479 = vmatpush1.msra.mxu0 0.0
  %1480 = vmatprep.subr.mxu0 0.0
  %1481 = vmatpush1.msra.mxu0 0.0
  %1482 = vmatprep.subr.mxu0 0.0
  %1483 = vmatpush1.msra.mxu0 0.0
  %1484 = vmatprep.mubr.f32.mxu0 0.0
  %1485 = vmatmul.mubr.f32.gmra.mrb[0].mxu0 %v1418
  %v1486 = vpop.f32.mrb[0].mxu0
  %v1487 = vadd.f32 0.0, %v1486
  %v1488 = vpop.f32.mrb[0].mxu0
  %1489 = vdwg.mxu0
  %v1490 = vadd.f32 %v147, %v1487
  %v1491 = vxor.u32 %v1490, 2147483648
  %v1492 = vmul.f32 %v1491, 1.442695
  %v1493 = vpow.pop %v1492
  %v1494 = vadd.f32 %v1493, 1.0
  %v1495 = vrcp.pop %v1494
  %v1496 = vmul.f32 1.0, %v1495
  %v1497 = vtanh.pop %v1490
  %v1499 = vrot.slane %v1407, 4
  %v1501 = vmul.f32 %v1496, %v1499
  %1503 = vrot.lane.b32.xlu0 %v1497, 64
  %v1504 = vpop.permute.xlu0 %1503
  %v1506 = vmul.f32 %v1496, %v1504
  %1508 = vrot.lane.b32.xlu0 %v1506, 32
  %v1509 = vpop.permute.xlu0 %1508
  %v1511 = vadd.f32 %v1501, %v1509
  %v1512 = vtanh.pop %v1511
  %1514 = vrot.lane.b32.xlu0 %v1512, 64
  %v1515 = vpop.permute.xlu0 %1514
  %v1517 = vmul.f32 %v1496, %v1515
  %1519 = vrot.lane.b32.xlu0 %v1517, 32
  %v1520 = vpop.permute.xlu0 %1519
  %v1521 = vsel %vm159, %v1520, 0
  %1523 = vmatprep.subr.mxu0 0.0
  %1524 = vmatpush1.msra.mxu0 %v155
  %1525 = vmatprep.subr.mxu0 0.0
  %1526 = vmatpush1.msra.mxu0 %v156
  %1527 = vmatprep.subr.mxu0 0.0
  %1528 = vmatpush1.msra.mxu0 %v157
  %1529 = vmatprep.subr.mxu0 0.0
  %1530 = vmatpush1.msra.mxu0 %v158
  %1531 = vmatprep.subr.mxu0 0.0
  %1532 = vmatpush1.msra.mxu0 0.0
  %1533 = vmatprep.subr.mxu0 0.0
  %1534 = vmatpush1.msra.mxu0 0.0
  %1535 = vmatprep.subr.mxu0 0.0
  %1536 = vmatpush1.msra.mxu0 0.0
  %1537 = vmatprep.subr.mxu0 0.0
  %1538 = vmatpush1.msra.mxu0 0.0
  %1539 = vmatprep.subr.mxu0 0.0
  %1540 = vmatpush1.msra.mxu0 0.0
  %1541 = vmatprep.subr.mxu0 0.0
  %1542 = vmatpush1.msra.mxu0 0.0
  %1543 = vmatprep.subr.mxu0 0.0
  %1544 = vmatpush1.msra.mxu0 0.0
  %1545 = vmatprep.subr.mxu0 0.0
  %1546 = vmatpush1.msra.mxu0 0.0
  %1547 = vmatprep.subr.mxu0 0.0
  %1548 = vmatpush1.msra.mxu0 0.0
  %1549 = vmatprep.subr.mxu0 0.0
  %1550 = vmatpush1.msra.mxu0 0.0
  %1551 = vmatprep.subr.mxu0 0.0
  %1552 = vmatpush1.msra.mxu0 0.0
  %1553 = vmatprep.subr.mxu0 0.0
  %1554 = vmatpush1.msra.mxu0 0.0
  %1555 = vmatprep.subr.mxu0 0.0
  %1556 = vmatpush1.msra.mxu0 0.0
  %1557 = vmatprep.subr.mxu0 0.0
  %1558 = vmatpush1.msra.mxu0 0.0
  %1559 = vmatprep.subr.mxu0 0.0
  %1560 = vmatpush1.msra.mxu0 0.0
  %1561 = vmatprep.subr.mxu0 0.0
  %1562 = vmatpush1.msra.mxu0 0.0
  %1563 = vmatprep.subr.mxu0 0.0
  %1564 = vmatpush1.msra.mxu0 0.0
  %1565 = vmatprep.subr.mxu0 0.0
  %1566 = vmatpush1.msra.mxu0 0.0
  %1567 = vmatprep.subr.mxu0 0.0
  %1568 = vmatpush1.msra.mxu0 0.0
  %1569 = vmatprep.subr.mxu0 0.0
  %1570 = vmatpush1.msra.mxu0 0.0
  %1571 = vmatprep.subr.mxu0 0.0
  %1572 = vmatpush1.msra.mxu0 0.0
  %1573 = vmatprep.subr.mxu0 0.0
  %1574 = vmatpush1.msra.mxu0 0.0
  %1575 = vmatprep.subr.mxu0 0.0
  %1576 = vmatpush1.msra.mxu0 0.0
  %1577 = vmatprep.subr.mxu0 0.0
  %1578 = vmatpush1.msra.mxu0 0.0
  %1579 = vmatprep.subr.mxu0 0.0
  %1580 = vmatpush1.msra.mxu0 0.0
  %1581 = vmatprep.subr.mxu0 0.0
  %1582 = vmatpush1.msra.mxu0 0.0
  %1583 = vmatprep.subr.mxu0 0.0
  %1584 = vmatpush1.msra.mxu0 0.0
  %1585 = vmatprep.subr.mxu0 0.0
  %1586 = vmatpush1.msra.mxu0 0.0
  %1587 = vmatprep.mubr.f32.mxu0 0.0
  %1588 = vmatmul.mubr.f32.gmra.mrb[0].mxu0 %v1521
  %v1589 = vpop.f32.mrb[0].mxu0
  %v1590 = vadd.f32 0.0, %v1589
  %v1591 = vpop.f32.mrb[0].mxu0
  %1592 = vdwg.mxu0
  %v1594 = vrot.slane %v1590, 4
  %v1596 = vadd.f32 %v147, %v1594
  %v1597 = vxor.u32 %v1596, 2147483648
  %v1598 = vmul.f32 %v1597, 1.442695
  %v1599 = vpow.pop %v1598
  %v1600 = vadd.f32 %v1599, 1.0
  %v1601 = vrcp.pop %v1600
  %v1602 = vmul.f32 1.0, %v1601
  %v1603 = vtanh.pop %v1596
  %v1605 = vrot.slane %v1511, 4
  %v1607 = vmul.f32 %v1602, %v1605
  %1609 = vrot.lane.b32.xlu0 %v1603, 64
  %v1610 = vpop.permute.xlu0 %1609
  %v1612 = vmul.f32 %v1602, %v1610
  %1614 = vrot.lane.b32.xlu0 %v1612, 32
  %v1615 = vpop.permute.xlu0 %1614
  %v1617 = vadd.f32 %v1607, %v1615
  %v1618 = vtanh.pop %v1617
  %1620 = vrot.lane.b32.xlu0 %v1618, 64
  %v1621 = vpop.permute.xlu0 %1620
  %v1623 = vmul.f32 %v1602, %v1621
  %v1625 = vrot.slane %v1623, 4
  %1626 = vrot.lane.b32.xlu0 %v1625, 32
  %v1627 = vpop.permute.xlu0 %1626
  %v1628 = vsel %vm159, %v1627, 0
  %1630 = vmatprep.subr.mxu0 0.0
  %1631 = vmatpush1.msra.mxu0 %v155
  %1632 = vmatprep.subr.mxu0 0.0
  %1633 = vmatpush1.msra.mxu0 %v156
  %1634 = vmatprep.subr.mxu0 0.0
  %1635 = vmatpush1.msra.mxu0 %v157
  %1636 = vmatprep.subr.mxu0 0.0
  %1637 = vmatpush1.msra.mxu0 %v158
  %1638 = vmatprep.subr.mxu0 0.0
  %1639 = vmatpush1.msra.mxu0 0.0
  %1640 = vmatprep.subr.mxu0 0.0
  %1641 = vmatpush1.msra.mxu0 0.0
  %1642 = vmatprep.subr.mxu0 0.0
  %1643 = vmatpush1.msra.mxu0 0.0
  %1644 = vmatprep.subr.mxu0 0.0
  %1645 = vmatpush1.msra.mxu0 0.0
  %1646 = vmatprep.subr.mxu0 0.0
  %1647 = vmatpush1.msra.mxu0 0.0
  %1648 = vmatprep.subr.mxu0 0.0
  %1649 = vmatpush1.msra.mxu0 0.0
  %1650 = vmatprep.subr.mxu0 0.0
  %1651 = vmatpush1.msra.mxu0 0.0
  %1652 = vmatprep.subr.mxu0 0.0
  %1653 = vmatpush1.msra.mxu0 0.0
  %1654 = vmatprep.subr.mxu0 0.0
  %1655 = vmatpush1.msra.mxu0 0.0
  %1656 = vmatprep.subr.mxu0 0.0
  %1657 = vmatpush1.msra.mxu0 0.0
  %1658 = vmatprep.subr.mxu0 0.0
  %1659 = vmatpush1.msra.mxu0 0.0
  %1660 = vmatprep.subr.mxu0 0.0
  %1661 = vmatpush1.msra.mxu0 0.0
  %1662 = vmatprep.subr.mxu0 0.0
  %1663 = vmatpush1.msra.mxu0 0.0
  %1664 = vmatprep.subr.mxu0 0.0
  %1665 = vmatpush1.msra.mxu0 0.0
  %1666 = vmatprep.subr.mxu0 0.0
  %1667 = vmatpush1.msra.mxu0 0.0
  %1668 = vmatprep.subr.mxu0 0.0
  %1669 = vmatpush1.msra.mxu0 0.0
  %1670 = vmatprep.subr.mxu0 0.0
  %1671 = vmatpush1.msra.mxu0 0.0
  %1672 = vmatprep.subr.mxu0 0.0
  %1673 = vmatpush1.msra.mxu0 0.0
  %1674 = vmatprep.subr.mxu0 0.0
  %1675 = vmatpush1.msra.mxu0 0.0
  %1676 = vmatprep.subr.mxu0 0.0
  %1677 = vmatpush1.msra.mxu0 0.0
  %1678 = vmatprep.subr.mxu0 0.0
  %1679 = vmatpush1.msra.mxu0 0.0
  %1680 = vmatprep.subr.mxu0 0.0
  %1681 = vmatpush1.msra.mxu0 0.0
  %1682 = vmatprep.subr.mxu0 0.0
  %1683 = vmatpush1.msra.mxu0 0.0
  %1684 = vmatprep.subr.mxu0 0.0
  %1685 = vmatpush1.msra.mxu0 0.0
  %1686 = vmatprep.subr.mxu0 0.0
  %1687 = vmatpush1.msra.mxu0 0.0
  %1688 = vmatprep.subr.mxu0 0.0
  %1689 = vmatpush1.msra.mxu0 0.0
  %1690 = vmatprep.subr.mxu0 0.0
  %1691 = vmatpush1.msra.mxu0 0.0
  %1692 = vmatprep.subr.mxu0 0.0
  %1693 = vmatpush1.msra.mxu0 0.0
  %1694 = vmatprep.mubr.f32.mxu0 0.0
  %1695 = vmatmul.mubr.f32.gmra.mrb[0].mxu0 %v1628
  %v1696 = vpop.f32.mrb[0].mxu0
  %v1697 = vadd.f32 0.0, %v1696
  %v1698 = vpop.f32.mrb[0].mxu0
  %1699 = vdwg.mxu0
  %v1700 = vadd.f32 %v152, %v1697
  %v1701 = vxor.u32 %v1700, 2147483648
  %v1702 = vmul.f32 %v1701, 1.442695
  %v1703 = vpow.pop %v1702
  %v1704 = vadd.f32 %v1703, 1.0
  %v1705 = vrcp.pop %v1704
  %v1706 = vmul.f32 1.0, %v1705
  %v1707 = vtanh.pop %v1700
  %v1709 = vrot.slane %v1617, 4
  %v1711 = vmul.f32 %v1706, %v1709
  %1713 = vrot.lane.b32.xlu0 %v1707, 64
  %v1714 = vpop.permute.xlu0 %1713
  %v1716 = vmul.f32 %v1706, %v1714
  %1718 = vrot.lane.b32.xlu0 %v1716, 32
  %v1719 = vpop.permute.xlu0 %1718
  %v1721 = vadd.f32 %v1711, %v1719
  %v1722 = vtanh.pop %v1721
  %1724 = vrot.lane.b32.xlu0 %v1722, 64
  %v1725 = vpop.permute.xlu0 %1724
  %v1727 = vmul.f32 %v1706, %v1725
  %1729 = vrot.lane.b32.xlu0 %v1727, 32
  %v1730 = vpop.permute.xlu0 %1729
  %v1731 = vsel %vm159, %v1730, 0
  %1733 = vmatprep.subr.mxu0 0.0
  %1734 = vmatpush1.msra.mxu0 %v155
  %1735 = vmatprep.subr.mxu0 0.0
  %1736 = vmatpush1.msra.mxu0 %v156
  %1737 = vmatprep.subr.mxu0 0.0
  %1738 = vmatpush1.msra.mxu0 %v157
  %1739 = vmatprep.subr.mxu0 0.0
  %1740 = vmatpush1.msra.mxu0 %v158
  %1741 = vmatprep.subr.mxu0 0.0
  %1742 = vmatpush1.msra.mxu0 0.0
  %1743 = vmatprep.subr.mxu0 0.0
  %1744 = vmatpush1.msra.mxu0 0.0
  %1745 = vmatprep.subr.mxu0 0.0
  %1746 = vmatpush1.msra.mxu0 0.0
  %1747 = vmatprep.subr.mxu0 0.0
  %1748 = vmatpush1.msra.mxu0 0.0
  %1749 = vmatprep.subr.mxu0 0.0
  %1750 = vmatpush1.msra.mxu0 0.0
  %1751 = vmatprep.subr.mxu0 0.0
  %1752 = vmatpush1.msra.mxu0 0.0
  %1753 = vmatprep.subr.mxu0 0.0
  %1754 = vmatpush1.msra.mxu0 0.0
  %1755 = vmatprep.subr.mxu0 0.0
  %1756 = vmatpush1.msra.mxu0 0.0
  %1757 = vmatprep.subr.mxu0 0.0
  %1758 = vmatpush1.msra.mxu0 0.0
  %1759 = vmatprep.subr.mxu0 0.0
  %1760 = vmatpush1.msra.mxu0 0.0
  %1761 = vmatprep.subr.mxu0 0.0
  %1762 = vmatpush1.msra.mxu0 0.0
  %1763 = vmatprep.subr.mxu0 0.0
  %1764 = vmatpush1.msra.mxu0 0.0
  %1765 = vmatprep.subr.mxu0 0.0
  %1766 = vmatpush1.msra.mxu0 0.0
  %1767 = vmatprep.subr.mxu0 0.0
  %1768 = vmatpush1.msra.mxu0 0.0
  %1769 = vmatprep.subr.mxu0 0.0
  %1770 = vmatpush1.msra.mxu0 0.0
  %1771 = vmatprep.subr.mxu0 0.0
  %1772 = vmatpush1.msra.mxu0 0.0
  %1773 = vmatprep.subr.mxu0 0.0
  %1774 = vmatpush1.msra.mxu0 0.0
  %1775 = vmatprep.subr.mxu0 0.0
  %1776 = vmatpush1.msra.mxu0 0.0
  %1777 = vmatprep.subr.mxu0 0.0
  %1778 = vmatpush1.msra.mxu0 0.0
  %1779 = vmatprep.subr.mxu0 0.0
  %1780 = vmatpush1.msra.mxu0 0.0
  %1781 = vmatprep.subr.mxu0 0.0
  %1782 = vmatpush1.msra.mxu0 0.0
  %1783 = vmatprep.subr.mxu0 0.0
  %1784 = vmatpush1.msra.mxu0 0.0
  %1785 = vmatprep.subr.mxu0 0.0
  %1786 = vmatpush1.msra.mxu0 0.0
  %1787 = vmatprep.subr.mxu0 0.0
  %1788 = vmatpush1.msra.mxu0 0.0
  %1789 = vmatprep.subr.mxu0 0.0
  %1790 = vmatpush1.msra.mxu0 0.0
  %1791 = vmatprep.subr.mxu0 0.0
  %1792 = vmatpush1.msra.mxu0 0.0
  %1793 = vmatprep.subr.mxu0 0.0
  %1794 = vmatpush1.msra.mxu0 0.0
  %1795 = vmatprep.subr.mxu0 0.0
  %1796 = vmatpush1.msra.mxu0 0.0
  %1797 = vmatprep.mubr.f32.mxu0 0.0
  %1798 = vmatmul.mubr.f32.gmra.mrb[0].mxu0 %v1731
  %v1799 = vpop.f32.mrb[0].mxu0
  %v1800 = vadd.f32 0.0, %v1799
  %v1801 = vpop.f32.mrb[0].mxu0
  %1802 = vdwg.mxu0
  %v1804 = vrot.slane %v1800, 4
  %v1806 = vadd.f32 %v152, %v1804
  %v1807 = vxor.u32 %v1806, 2147483648
  %v1808 = vmul.f32 %v1807, 1.442695
  %v1809 = vpow.pop %v1808
  %v1810 = vadd.f32 %v1809, 1.0
  %v1811 = vrcp.pop %v1810
  %v1812 = vmul.f32 1.0, %v1811
  %v1813 = vtanh.pop %v1806
  %v1815 = vrot.slane %v1721, 4
  %v1817 = vmul.f32 %v1812, %v1815
  %1819 = vrot.lane.b32.xlu0 %v1813, 64
  %v1820 = vpop.permute.xlu0 %1819
  %v1822 = vmul.f32 %v1812, %v1820
  %1824 = vrot.lane.b32.xlu0 %v1822, 32
  %v1825 = vpop.permute.xlu0 %1824
  %v1827 = vadd.f32 %v1817, %v1825
  %v1828 = vtanh.pop %v1827
  %1830 = vrot.lane.b32.xlu0 %v1828, 64
  %v1831 = vpop.permute.xlu0 %1830
  %v1833 = vmul.f32 %v1812, %v1831
  %v1834 = vld [vmem:[%s1] sm:$0xff]
  %v1835 = vld [vmem:[%s1 + $0x8] sm:$0xff]
  %v1836 = vld [vmem:[%s1 + $0x10] sm:$0xff]
  %v1837 = vld [vmem:[%s1 + $0x18] sm:$0xff]
  %v1838 = vsel %vm159, %v1834, 0.0
  %1839 = vadd.xlane.f32.xlu0 %v1838
  %v1840 = vpop.xlane.xlu0 %1839
  %v1841 = vsel %vm159, %v1835, 0.0
  %1842 = vadd.xlane.f32.xlu0 %v1841
  %v1843 = vpop.xlane.xlu0 %1842
  %v1844 = vsel %vm159, %v1836, 0.0
  %1845 = vadd.xlane.f32.xlu0 %v1844
  %v1846 = vpop.xlane.xlu0 %1845
  %v1847 = vsel %vm159, %v1837, 0.0
  %1848 = vadd.xlane.f32.xlu0 %v1847
  %v1849 = vpop.xlane.xlu0 %1848
  %vm1850 = vcmp.gt.f32.partialorder %v1840, 0.0
  %vm1851 = vcmp.gt.f32.partialorder %v1843, 0.0
  %vm1852 = vcmp.gt.f32.partialorder %v1846, 0.0
  %vm1853 = vcmp.gt.f32.partialorder %v1849, 0.0
  %v1854 = vrsqrt.pop %v1840
  %v1855 = vrsqrt.pop %v1843
  %v1856 = vrsqrt.pop %v1846
  %v1857 = vrsqrt.pop %v1849
  %v1858 = vsel %vm1850, %v1854, 0.0
  %v1859 = vsel %vm1851, %v1855, 0.0
  %v1860 = vsel %vm1852, %v1856, 0.0
  %v1861 = vsel %vm1853, %v1857, 0.0
  %v1862 = vld [vmem:[%s1 + $0x20] sm:$0xff]
  %v1863 = vld [vmem:[%s1 + $0x28] sm:$0xff]
  %v1864 = vld [vmem:[%s1 + $0x30] sm:$0xff]
  %v1865 = vld [vmem:[%s1 + $0x38] sm:$0xff]
  %v1866 = vld [vmem:[%s0 + $0x90] sm:$0xff]
  %v1867 = vld [vmem:[%s0 + $0x98] sm:$0xff]
  %vm1868 = vcmask 130048
  %v1870 = vsel %vm1868, %v1862, 0
  %v1873 = vsel %vm1868, %v1863, 0
  %v1876 = vsel %vm1868, %v1864, 0
  %v1879 = vsel %vm1868, %v1865, 0
  %1881 = vmatprep.subr.mxu0 0.0
  %1882 = vmatpush1.msra.mxu0 %v1866
  %1883 = vmatprep.subr.mxu0 0.0
  %1884 = vmatpush1.msra.mxu0 %v1867
  %1885 = vmatprep.subr.mxu0 0.0
  %1886 = vmatpush1.msra.mxu0 0.0
  %1887 = vmatprep.subr.mxu0 0.0
  %1888 = vmatpush1.msra.mxu0 0.0
  %1889 = vmatprep.subr.mxu0 0.0
  %1890 = vmatpush1.msra.mxu0 0.0
  %1891 = vmatprep.subr.mxu0 0.0
  %1892 = vmatpush1.msra.mxu0 0.0
  %1893 = vmatprep.subr.mxu0 0.0
  %1894 = vmatpush1.msra.mxu0 0.0
  %1895 = vmatprep.subr.mxu0 0.0
  %1896 = vmatpush1.msra.mxu0 0.0
  %1897 = vmatprep.subr.mxu0 0.0
  %1898 = vmatpush1.msra.mxu0 0.0
  %1899 = vmatprep.subr.mxu0 0.0
  %1900 = vmatpush1.msra.mxu0 0.0
  %1901 = vmatprep.subr.mxu0 0.0
  %1902 = vmatpush1.msra.mxu0 0.0
  %1903 = vmatprep.subr.mxu0 0.0
  %1904 = vmatpush1.msra.mxu0 0.0
  %1905 = vmatprep.subr.mxu0 0.0
  %1906 = vmatpush1.msra.mxu0 0.0
  %1907 = vmatprep.subr.mxu0 0.0
  %1908 = vmatpush1.msra.mxu0 0.0
  %1909 = vmatprep.subr.mxu0 0.0
  %1910 = vmatpush1.msra.mxu0 0.0
  %1911 = vmatprep.subr.mxu0 0.0
  %1912 = vmatpush1.msra.mxu0 0.0
  %1913 = vmatprep.subr.mxu0 0.0
  %1914 = vmatpush1.msra.mxu0 0.0
  %1915 = vmatprep.subr.mxu0 0.0
  %1916 = vmatpush1.msra.mxu0 0.0
  %1917 = vmatprep.subr.mxu0 0.0
  %1918 = vmatpush1.msra.mxu0 0.0
  %1919 = vmatprep.subr.mxu0 0.0
  %1920 = vmatpush1.msra.mxu0 0.0
  %1921 = vmatprep.subr.mxu0 0.0
  %1922 = vmatpush1.msra.mxu0 0.0
  %1923 = vmatprep.subr.mxu0 0.0
  %1924 = vmatpush1.msra.mxu0 0.0
  %1925 = vmatprep.subr.mxu0 0.0
  %1926 = vmatpush1.msra.mxu0 0.0
  %1927 = vmatprep.subr.mxu0 0.0
  %1928 = vmatpush1.msra.mxu0 0.0
  %1929 = vmatprep.subr.mxu0 0.0
  %1930 = vmatpush1.msra.mxu0 0.0
  %1931 = vmatprep.subr.mxu0 0.0
  %1932 = vmatpush1.msra.mxu0 0.0
  %1933 = vmatprep.subr.mxu0 0.0
  %1934 = vmatpush1.msra.mxu0 0.0
  %1935 = vmatprep.subr.mxu0 0.0
  %1936 = vmatpush1.msra.mxu0 0.0
  %1937 = vmatprep.subr.mxu0 0.0
  %1938 = vmatpush1.msra.mxu0 0.0
  %1939 = vmatprep.subr.mxu0 0.0
  %1940 = vmatpush1.msra.mxu0 0.0
  %1941 = vmatprep.subr.mxu0 0.0
  %1942 = vmatpush1.msra.mxu0 0.0
  %1943 = vmatprep.subr.mxu0 0.0
  %1944 = vmatpush1.msra.mxu0 0.0
  %1945 = vmatprep.mubr.f32.mxu0 0.0
  %1946 = vmatmul.mubr.f32.gmra.mrb[0].mxu0 %v1870
  %v1947 = vpop.f32.mrb[0].mxu0
  %v1948 = vadd.f32 0.0, %v1947
  %v1949 = vpop.f32.mrb[0].mxu0
  %1950 = vmatprep.mubr.f32.mxu0 0.0
  %1951 = vmatmul.mubr.f32.gmra.mrb[0].mxu0 %v1873
  %v1952 = vpop.f32.mrb[0].mxu0
  %v1953 = vadd.f32 0.0, %v1952
  %v1954 = vpop.f32.mrb[0].mxu0
  %1955 = vmatprep.mubr.f32.mxu0 0.0
  %1956 = vmatmul.mubr.f32.gmra.mrb[0].mxu0 %v1876
  %v1957 = vpop.f32.mrb[0].mxu0
  %v1958 = vadd.f32 0.0, %v1957
  %v1959 = vpop.f32.mrb[0].mxu0
  %1960 = vmatprep.mubr.f32.mxu0 0.0
  %1961 = vmatmul.mubr.f32.gmra.mrb[0].mxu0 %v1879
  %v1962 = vpop.f32.mrb[0].mxu0
  %v1963 = vadd.f32 0.0, %v1962
  %v1964 = vpop.f32.mrb[0].mxu0
  %1965 = vdwg.mxu0
  %v1966 = vmul.f32 %v1858, %v1948
  %v1967 = vmul.f32 %v1859, %v1953
  %v1968 = vmul.f32 %v1860, %v1958
  %v1969 = vmul.f32 %v1861, %v1963
  %v1971 = vsel %vm159, %v1834, 0
  %v1974 = vsel %vm159, %v1835, 0
  %v1977 = vsel %vm159, %v1836, 0
  %v1980 = vsel %vm159, %v1837, 0
  %1982 = vmatprep.subr.mxu0 0.0
  %1983 = vmatpush1.msra.mxu0 %v1966
  %1984 = vmatprep.subr.mxu0 0.0
  %1985 = vmatpush1.msra.mxu0 %v1967
  %1986 = vmatprep.subr.mxu0 0.0
  %1987 = vmatpush1.msra.mxu0 %v1968
  %1988 = vmatprep.subr.mxu0 0.0
  %1989 = vmatpush1.msra.mxu0 %v1969
  %1990 = vmatprep.subr.mxu0 0.0
  %1991 = vmatpush1.msra.mxu0 0.0
  %1992 = vmatprep.subr.mxu0 0.0
  %1993 = vmatpush1.msra.mxu0 0.0
  %1994 = vmatprep.subr.mxu0 0.0
  %1995 = vmatpush1.msra.mxu0 0.0
  %1996 = vmatprep.subr.mxu0 0.0
  %1997 = vmatpush1.msra.mxu0 0.0
  %1998 = vmatprep.subr.mxu0 0.0
  %1999 = vmatpush1.msra.mxu0 0.0
  %2000 = vmatprep.subr.mxu0 0.0
  %2001 = vmatpush1.msra.mxu0 0.0
  %2002 = vmatprep.subr.mxu0 0.0
  %2003 = vmatpush1.msra.mxu0 0.0
  %2004 = vmatprep.subr.mxu0 0.0
  %2005 = vmatpush1.msra.mxu0 0.0
  %2006 = vmatprep.subr.mxu0 0.0
  %2007 = vmatpush1.msra.mxu0 0.0
  %2008 = vmatprep.subr.mxu0 0.0
  %2009 = vmatpush1.msra.mxu0 0.0
  %2010 = vmatprep.subr.mxu0 0.0
  %2011 = vmatpush1.msra.mxu0 0.0
  %2012 = vmatprep.subr.mxu0 0.0
  %2013 = vmatpush1.msra.mxu0 0.0
  %2014 = vmatprep.subr.mxu0 0.0
  %2015 = vmatpush1.msra.mxu0 0.0
  %2016 = vmatprep.subr.mxu0 0.0
  %2017 = vmatpush1.msra.mxu0 0.0
  %2018 = vmatprep.subr.mxu0 0.0
  %2019 = vmatpush1.msra.mxu0 0.0
  %2020 = vmatprep.subr.mxu0 0.0
  %2021 = vmatpush1.msra.mxu0 0.0
  %2022 = vmatprep.subr.mxu0 0.0
  %2023 = vmatpush1.msra.mxu0 0.0
  %2024 = vmatprep.subr.mxu0 0.0
  %2025 = vmatpush1.msra.mxu0 0.0
  %2026 = vmatprep.subr.mxu0 0.0
  %2027 = vmatpush1.msra.mxu0 0.0
  %2028 = vmatprep.subr.mxu0 0.0
  %2029 = vmatpush1.msra.mxu0 0.0
  %2030 = vmatprep.subr.mxu0 0.0
  %2031 = vmatpush1.msra.mxu0 0.0
  %2032 = vmatprep.subr.mxu0 0.0
  %2033 = vmatpush1.msra.mxu0 0.0
  %2034 = vmatprep.subr.mxu0 0.0
  %2035 = vmatpush1.msra.mxu0 0.0
  %2036 = vmatprep.subr.mxu0 0.0
  %2037 = vmatpush1.msra.mxu0 0.0
  %2038 = vmatprep.subr.mxu0 0.0
  %2039 = vmatpush1.msra.mxu0 0.0
  %2040 = vmatprep.subr.mxu0 0.0
  %2041 = vmatpush1.msra.mxu0 0.0
  %2042 = vmatprep.subr.mxu0 0.0
  %2043 = vmatpush1.msra.mxu0 0.0
  %2044 = vmatprep.subr.mxu0 0.0
  %2045 = vmatpush1.msra.mxu0 0.0
  %2046 = vmatprep.mubr.f32.mxu0 0.0
  %2047 = vmatmul.mubr.f32.gmra.mrb[0].mxu0 %v1971
  %v2048 = vpop.f32.mrb[0].mxu0
  %v2049 = vadd.f32 0.0, %v2048
  %v2050 = vpop.f32.mrb[0].mxu0
  %2051 = vmatprep.mubr.f32.mxu0 0.0
  %2052 = vmatmul.mubr.f32.gmra.mrb[0].mxu0 %v1974
  %v2053 = vpop.f32.mrb[0].mxu0
  %v2054 = vadd.f32 0.0, %v2053
  %v2055 = vpop.f32.mrb[0].mxu0
  %2056 = vmatprep.mubr.f32.mxu0 0.0
  %2057 = vmatmul.mubr.f32.gmra.mrb[0].mxu0 %v1977
  %v2058 = vpop.f32.mrb[0].mxu0
  %v2059 = vadd.f32 0.0, %v2058
  %v2060 = vpop.f32.mrb[0].mxu0
  %2061 = vmatprep.mubr.f32.mxu0 0.0
  %2062 = vmatmul.mubr.f32.gmra.mrb[0].mxu0 %v1980
  %v2063 = vpop.f32.mrb[0].mxu0
  %v2064 = vadd.f32 0.0, %v2063
  %v2065 = vpop.f32.mrb[0].mxu0
  %2066 = vdwg.mxu0
  %v2067 = vmul.f32 %v1858, %v2049
  %v2068 = vmul.f32 %v1859, %v2054
  %v2069 = vmul.f32 %v1860, %v2059
  %v2070 = vmul.f32 %v1861, %v2064
  %v2071 = vlaneseq
  %v2072 = vshrl.u32 %v2071, 7
  %v2073 = vsub.s32 2, %v2072
  %v2074 = vrot.slane %v11, %v2073
  %v2075 = vadd.f32 %v2067, %v2074
  %v2076 = vadd.f32 %v2068, %v2074
  %v2077 = vadd.f32 %v2069, %v2074
  %v2078 = vadd.f32 %v2070, %v2074
  %v2079 = vmax.f32 %v2075, 0.0
  %v2080 = vmax.f32 %v2076, 0.0
  %v2081 = vmax.f32 %v2077, 0.0
  %v2082 = vmax.f32 %v2078, 0.0
  %v2083 = vld [vmem:[%s0 + $0xa0] sm:$0xff]
  %v2084 = vld [vmem:[%s0 + $0xa8] sm:$0xff]
  %v2086 = vsel %vm1868, %v2079, 0
  %v2089 = vsel %vm1868, %v2080, 0
  %v2092 = vsel %vm1868, %v2081, 0
  %v2095 = vsel %vm1868, %v2082, 0
  %2097 = vmatprep.subr.mxu0 0.0
  %2098 = vmatpush1.msra.mxu0 %v2083
  %2099 = vmatprep.subr.mxu0 0.0
  %2100 = vmatpush1.msra.mxu0 %v2084
  %2101 = vmatprep.subr.mxu0 0.0
  %2102 = vmatpush1.msra.mxu0 0.0
  %2103 = vmatprep.subr.mxu0 0.0
  %2104 = vmatpush1.msra.mxu0 0.0
  %2105 = vmatprep.subr.mxu0 0.0
  %2106 = vmatpush1.msra.mxu0 0.0
  %2107 = vmatprep.subr.mxu0 0.0
  %2108 = vmatpush1.msra.mxu0 0.0
  %2109 = vmatprep.subr.mxu0 0.0
  %2110 = vmatpush1.msra.mxu0 0.0
  %2111 = vmatprep.subr.mxu0 0.0
  %2112 = vmatpush1.msra.mxu0 0.0
  %2113 = vmatprep.subr.mxu0 0.0
  %2114 = vmatpush1.msra.mxu0 0.0
  %2115 = vmatprep.subr.mxu0 0.0
  %2116 = vmatpush1.msra.mxu0 0.0
  %2117 = vmatprep.subr.mxu0 0.0
  %2118 = vmatpush1.msra.mxu0 0.0
  %2119 = vmatprep.subr.mxu0 0.0
  %2120 = vmatpush1.msra.mxu0 0.0
  %2121 = vmatprep.subr.mxu0 0.0
  %2122 = vmatpush1.msra.mxu0 0.0
  %2123 = vmatprep.subr.mxu0 0.0
  %2124 = vmatpush1.msra.mxu0 0.0
  %2125 = vmatprep.subr.mxu0 0.0
  %2126 = vmatpush1.msra.mxu0 0.0
  %2127 = vmatprep.subr.mxu0 0.0
  %2128 = vmatpush1.msra.mxu0 0.0
  %2129 = vmatprep.subr.mxu0 0.0
  %2130 = vmatpush1.msra.mxu0 0.0
  %2131 = vmatprep.subr.mxu0 0.0
  %2132 = vmatpush1.msra.mxu0 0.0
  %2133 = vmatprep.subr.mxu0 0.0
  %2134 = vmatpush1.msra.mxu0 0.0
  %2135 = vmatprep.subr.mxu0 0.0
  %2136 = vmatpush1.msra.mxu0 0.0
  %2137 = vmatprep.subr.mxu0 0.0
  %2138 = vmatpush1.msra.mxu0 0.0
  %2139 = vmatprep.subr.mxu0 0.0
  %2140 = vmatpush1.msra.mxu0 0.0
  %2141 = vmatprep.subr.mxu0 0.0
  %2142 = vmatpush1.msra.mxu0 0.0
  %2143 = vmatprep.subr.mxu0 0.0
  %2144 = vmatpush1.msra.mxu0 0.0
  %2145 = vmatprep.subr.mxu0 0.0
  %2146 = vmatpush1.msra.mxu0 0.0
  %2147 = vmatprep.subr.mxu0 0.0
  %2148 = vmatpush1.msra.mxu0 0.0
  %2149 = vmatprep.subr.mxu0 0.0
  %2150 = vmatpush1.msra.mxu0 0.0
  %2151 = vmatprep.subr.mxu0 0.0
  %2152 = vmatpush1.msra.mxu0 0.0
  %2153 = vmatprep.subr.mxu0 0.0
  %2154 = vmatpush1.msra.mxu0 0.0
  %2155 = vmatprep.subr.mxu0 0.0
  %2156 = vmatpush1.msra.mxu0 0.0
  %2157 = vmatprep.subr.mxu0 0.0
  %2158 = vmatpush1.msra.mxu0 0.0
  %2159 = vmatprep.subr.mxu0 0.0
  %2160 = vmatpush1.msra.mxu0 0.0
  %2161 = vmatprep.mubr.f32.mxu0 0.0
  %2162 = vmatmul.mubr.f32.gmra.mrb[0].mxu0 %v2086
  %v2163 = vpop.f32.mrb[0].mxu0
  %v2164 = vadd.f32 0.0, %v2163
  %v2165 = vpop.f32.mrb[0].mxu0
  %2166 = vmatprep.mubr.f32.mxu0 0.0
  %2167 = vmatmul.mubr.f32.gmra.mrb[0].mxu0 %v2089
  %v2168 = vpop.f32.mrb[0].mxu0
  %v2169 = vadd.f32 0.0, %v2168
  %v2170 = vpop.f32.mrb[0].mxu0
  %2171 = vmatprep.mubr.f32.mxu0 0.0
  %2172 = vmatmul.mubr.f32.gmra.mrb[0].mxu0 %v2092
  %v2173 = vpop.f32.mrb[0].mxu0
  %v2174 = vadd.f32 0.0, %v2173
  %v2175 = vpop.f32.mrb[0].mxu0
  %2176 = vmatprep.mubr.f32.mxu0 0.0
  %2177 = vmatmul.mubr.f32.gmra.mrb[0].mxu0 %v2095
  %v2178 = vpop.f32.mrb[0].mxu0
  %v2179 = vadd.f32 0.0, %v2178
  %v2180 = vpop.f32.mrb[0].mxu0
  %2181 = vdwg.mxu0
  %v2182 = vmul.f32 %v1858, %v2164
  %v2183 = vmul.f32 %v1859, %v2169
  %v2184 = vmul.f32 %v1860, %v2174
  %v2185 = vmul.f32 %v1861, %v2179
  %2186 = vmatprep.subr.mxu0 0.0
  %2187 = vmatpush1.msra.mxu0 %v2182
  %2188 = vmatprep.subr.mxu0 0.0
  %2189 = vmatpush1.msra.mxu0 %v2183
  %2190 = vmatprep.subr.mxu0 0.0
  %2191 = vmatpush1.msra.mxu0 %v2184
  %2192 = vmatprep.subr.mxu0 0.0
  %2193 = vmatpush1.msra.mxu0 %v2185
  %2194 = vmatprep.subr.mxu0 0.0
  %2195 = vmatpush1.msra.mxu0 0.0
  %2196 = vmatprep.subr.mxu0 0.0
  %2197 = vmatpush1.msra.mxu0 0.0
  %2198 = vmatprep.subr.mxu0 0.0
  %2199 = vmatpush1.msra.mxu0 0.0
  %2200 = vmatprep.subr.mxu0 0.0
  %2201 = vmatpush1.msra.mxu0 0.0
  %2202 = vmatprep.subr.mxu0 0.0
  %2203 = vmatpush1.msra.mxu0 0.0
  %2204 = vmatprep.subr.mxu0 0.0
  %2205 = vmatpush1.msra.mxu0 0.0
  %2206 = vmatprep.subr.mxu0 0.0
  %2207 = vmatpush1.msra.mxu0 0.0
  %2208 = vmatprep.subr.mxu0 0.0
  %2209 = vmatpush1.msra.mxu0 0.0
  %2210 = vmatprep.subr.mxu0 0.0
  %2211 = vmatpush1.msra.mxu0 0.0
  %2212 = vmatprep.subr.mxu0 0.0
  %2213 = vmatpush1.msra.mxu0 0.0
  %2214 = vmatprep.subr.mxu0 0.0
  %2215 = vmatpush1.msra.mxu0 0.0
  %2216 = vmatprep.subr.mxu0 0.0
  %2217 = vmatpush1.msra.mxu0 0.0
  %2218 = vmatprep.subr.mxu0 0.0
  %2219 = vmatpush1.msra.mxu0 0.0
  %2220 = vmatprep.subr.mxu0 0.0
  %2221 = vmatpush1.msra.mxu0 0.0
  %2222 = vmatprep.subr.mxu0 0.0
  %2223 = vmatpush1.msra.mxu0 0.0
  %2224 = vmatprep.subr.mxu0 0.0
  %2225 = vmatpush1.msra.mxu0 0.0
  %2226 = vmatprep.subr.mxu0 0.0
  %2227 = vmatpush1.msra.mxu0 0.0
  %2228 = vmatprep.subr.mxu0 0.0
  %2229 = vmatpush1.msra.mxu0 0.0
  %2230 = vmatprep.subr.mxu0 0.0
  %2231 = vmatpush1.msra.mxu0 0.0
  %2232 = vmatprep.subr.mxu0 0.0
  %2233 = vmatpush1.msra.mxu0 0.0
  %2234 = vmatprep.subr.mxu0 0.0
  %2235 = vmatpush1.msra.mxu0 0.0
  %2236 = vmatprep.subr.mxu0 0.0
  %2237 = vmatpush1.msra.mxu0 0.0
  %2238 = vmatprep.subr.mxu0 0.0
  %2239 = vmatpush1.msra.mxu0 0.0
  %2240 = vmatprep.subr.mxu0 0.0
  %2241 = vmatpush1.msra.mxu0 0.0
  %2242 = vmatprep.subr.mxu0 0.0
  %2243 = vmatpush1.msra.mxu0 0.0
  %2244 = vmatprep.subr.mxu0 0.0
  %2245 = vmatpush1.msra.mxu0 0.0
  %2246 = vmatprep.subr.mxu0 0.0
  %2247 = vmatpush1.msra.mxu0 0.0
  %2248 = vmatprep.subr.mxu0 0.0
  %2249 = vmatpush1.msra.mxu0 0.0
  %2250 = vmatprep.mubr.f32.mxu0 0.0
  %2251 = vmatmul.mubr.f32.gmra.mrb[0].mxu0 %v1971
  %v2252 = vpop.f32.mrb[0].mxu0
  %v2253 = vadd.f32 0.0, %v2252
  %v2254 = vpop.f32.mrb[0].mxu0
  %2255 = vmatprep.mubr.f32.mxu0 0.0
  %2256 = vmatmul.mubr.f32.gmra.mrb[0].mxu0 %v1974
  %v2257 = vpop.f32.mrb[0].mxu0
  %v2258 = vadd.f32 0.0, %v2257
  %v2259 = vpop.f32.mrb[0].mxu0
  %2260 = vmatprep.mubr.f32.mxu0 0.0
  %2261 = vmatmul.mubr.f32.gmra.mrb[0].mxu0 %v1977
  %v2262 = vpop.f32.mrb[0].mxu0
  %v2263 = vadd.f32 0.0, %v2262
  %v2264 = vpop.f32.mrb[0].mxu0
  %2265 = vmatprep.mubr.f32.mxu0 0.0
  %2266 = vmatmul.mubr.f32.gmra.mrb[0].mxu0 %v1980
  %v2267 = vpop.f32.mrb[0].mxu0
  %v2268 = vadd.f32 0.0, %v2267
  %v2269 = vpop.f32.mrb[0].mxu0
  %2270 = vdwg.mxu0
  %v2271 = vmul.f32 %v1858, %v2253
  %v2272 = vmul.f32 %v1859, %v2258
  %v2273 = vmul.f32 %v1860, %v2263
  %v2274 = vmul.f32 %v1861, %v2268
  %v2275 = vlaneseq
  %v2276 = vshrl.u32 %v2275, 7
  %v2277 = vsub.s32 3, %v2276
  %v2278 = vrot.slane %v11, %v2277
  %v2279 = vadd.f32 %v2271, %v2278
  %v2280 = vadd.f32 %v2272, %v2278
  %v2281 = vadd.f32 %v2273, %v2278
  %v2282 = vadd.f32 %v2274, %v2278
  %v2283 = vmax.f32 %v2279, 0.0
  %v2284 = vmax.f32 %v2280, 0.0
  %v2285 = vmax.f32 %v2281, 0.0
  %v2286 = vmax.f32 %v2282, 0.0
  %v2287 = vld [vmem:[%s1 + $0x80] sm:$0xf]
  %v2289 = vsel %vm159, %v2287, 0
  %2291 = vmatprep.subr.mxu0 0.0
  %2292 = vmatpush1.msra.mxu0 %v2283
  %2293 = vmatprep.subr.mxu0 0.0
  %2294 = vmatpush1.msra.mxu0 %v2284
  %2295 = vmatprep.subr.mxu0 0.0
  %2296 = vmatpush1.msra.mxu0 %v2285
  %2297 = vmatprep.subr.mxu0 0.0
  %2298 = vmatpush1.msra.mxu0 %v2286
  %2299 = vmatprep.subr.mxu0 0.0
  %2300 = vmatpush1.msra.mxu0 0.0
  %2301 = vmatprep.subr.mxu0 0.0
  %2302 = vmatpush1.msra.mxu0 0.0
  %2303 = vmatprep.subr.mxu0 0.0
  %2304 = vmatpush1.msra.mxu0 0.0
  %2305 = vmatprep.subr.mxu0 0.0
  %2306 = vmatpush1.msra.mxu0 0.0
  %2307 = vmatprep.subr.mxu0 0.0
  %2308 = vmatpush1.msra.mxu0 0.0
  %2309 = vmatprep.subr.mxu0 0.0
  %2310 = vmatpush1.msra.mxu0 0.0
  %2311 = vmatprep.subr.mxu0 0.0
  %2312 = vmatpush1.msra.mxu0 0.0
  %2313 = vmatprep.subr.mxu0 0.0
  %2314 = vmatpush1.msra.mxu0 0.0
  %2315 = vmatprep.subr.mxu0 0.0
  %2316 = vmatpush1.msra.mxu0 0.0
  %2317 = vmatprep.subr.mxu0 0.0
  %2318 = vmatpush1.msra.mxu0 0.0
  %2319 = vmatprep.subr.mxu0 0.0
  %2320 = vmatpush1.msra.mxu0 0.0
  %2321 = vmatprep.subr.mxu0 0.0
  %2322 = vmatpush1.msra.mxu0 0.0
  %2323 = vmatprep.subr.mxu0 0.0
  %2324 = vmatpush1.msra.mxu0 0.0
  %2325 = vmatprep.subr.mxu0 0.0
  %2326 = vmatpush1.msra.mxu0 0.0
  %2327 = vmatprep.subr.mxu0 0.0
  %2328 = vmatpush1.msra.mxu0 0.0
  %2329 = vmatprep.subr.mxu0 0.0
  %2330 = vmatpush1.msra.mxu0 0.0
  %2331 = vmatprep.subr.mxu0 0.0
  %2332 = vmatpush1.msra.mxu0 0.0
  %2333 = vmatprep.subr.mxu0 0.0
  %2334 = vmatpush1.msra.mxu0 0.0
  %2335 = vmatprep.subr.mxu0 0.0
  %2336 = vmatpush1.msra.mxu0 0.0
  %2337 = vmatprep.subr.mxu0 0.0
  %2338 = vmatpush1.msra.mxu0 0.0
  %2339 = vmatprep.subr.mxu0 0.0
  %2340 = vmatpush1.msra.mxu0 0.0
  %2341 = vmatprep.subr.mxu0 0.0
  %2342 = vmatpush1.msra.mxu0 0.0
  %2343 = vmatprep.subr.mxu0 0.0
  %2344 = vmatpush1.msra.mxu0 0.0
  %2345 = vmatprep.subr.mxu0 0.0
  %2346 = vmatpush1.msra.mxu0 0.0
  %2347 = vmatprep.subr.mxu0 0.0
  %2348 = vmatpush1.msra.mxu0 0.0
  %2349 = vmatprep.subr.mxu0 0.0
  %2350 = vmatpush1.msra.mxu0 0.0
  %2351 = vmatprep.subr.mxu0 0.0
  %2352 = vmatpush1.msra.mxu0 0.0
  %2353 = vmatprep.subr.mxu0 0.0
  %2354 = vmatpush1.msra.mxu0 0.0
  %2355 = vmatprep.mubr.f32.mxu0 0.0
  %2356 = vmatmul.mubr.f32.gmra.mrb[0].mxu0 %v2289
  %v2357 = vpop.f32.mrb[0].mxu0
  %v2358 = vadd.f32 0.0, %v2357
  %v2359 = vpop.f32.mrb[0].mxu0
  %2360 = vdwg.mxu0
  %v2361 = vld [vmem:[%s0 + $0xb0] sm:$0xff]
  %v2362 = vld [vmem:[%s0 + $0xb8] sm:$0xff]
  %v2363 = vld [vmem:[%s0 + $0xc0] sm:$0xff]
  %v2364 = vld [vmem:[%s0 + $0xc8] sm:$0xff]
  %v2365 = vld [vmem:[%s0 + $0xd0] sm:$0xff]
  %v2366 = vld [vmem:[%s0 + $0xd8] sm:$0xff]
  %v2368 = vsel %vm1868, %v2358, 0
  %2370 = vmatprep.subr.mxu0 0.0
  %2371 = vmatpush1.msra.mxu0 %v2365
  %2372 = vmatprep.subr.mxu0 0.0
  %2373 = vmatpush1.msra.mxu0 %v2366
  %2374 = vmatprep.subr.mxu0 0.0
  %2375 = vmatpush1.msra.mxu0 0.0
  %2376 = vmatprep.subr.mxu0 0.0
  %2377 = vmatpush1.msra.mxu0 0.0
  %2378 = vmatprep.subr.mxu0 0.0
  %2379 = vmatpush1.msra.mxu0 0.0
  %2380 = vmatprep.subr.mxu0 0.0
  %2381 = vmatpush1.msra.mxu0 0.0
  %2382 = vmatprep.subr.mxu0 0.0
  %2383 = vmatpush1.msra.mxu0 0.0
  %2384 = vmatprep.subr.mxu0 0.0
  %2385 = vmatpush1.msra.mxu0 0.0
  %2386 = vmatprep.subr.mxu0 0.0
  %2387 = vmatpush1.msra.mxu0 0.0
  %2388 = vmatprep.subr.mxu0 0.0
  %2389 = vmatpush1.msra.mxu0 0.0
  %2390 = vmatprep.subr.mxu0 0.0
  %2391 = vmatpush1.msra.mxu0 0.0
  %2392 = vmatprep.subr.mxu0 0.0
  %2393 = vmatpush1.msra.mxu0 0.0
  %2394 = vmatprep.subr.mxu0 0.0
  %2395 = vmatpush1.msra.mxu0 0.0
  %2396 = vmatprep.subr.mxu0 0.0
  %2397 = vmatpush1.msra.mxu0 0.0
  %2398 = vmatprep.subr.mxu0 0.0
  %2399 = vmatpush1.msra.mxu0 0.0
  %2400 = vmatprep.subr.mxu0 0.0
  %2401 = vmatpush1.msra.mxu0 0.0
  %2402 = vmatprep.subr.mxu0 0.0
  %2403 = vmatpush1.msra.mxu0 0.0
  %2404 = vmatprep.subr.mxu0 0.0
  %2405 = vmatpush1.msra.mxu0 0.0
  %2406 = vmatprep.subr.mxu0 0.0
  %2407 = vmatpush1.msra.mxu0 0.0
  %2408 = vmatprep.subr.mxu0 0.0
  %2409 = vmatpush1.msra.mxu0 0.0
  %2410 = vmatprep.subr.mxu0 0.0
  %2411 = vmatpush1.msra.mxu0 0.0
  %2412 = vmatprep.subr.mxu0 0.0
  %2413 = vmatpush1.msra.mxu0 0.0
  %2414 = vmatprep.subr.mxu0 0.0
  %2415 = vmatpush1.msra.mxu0 0.0
  %2416 = vmatprep.subr.mxu0 0.0
  %2417 = vmatpush1.msra.mxu0 0.0
  %2418 = vmatprep.subr.mxu0 0.0
  %2419 = vmatpush1.msra.mxu0 0.0
  %2420 = vmatprep.subr.mxu0 0.0
  %2421 = vmatpush1.msra.mxu0 0.0
  %2422 = vmatprep.subr.mxu0 0.0
  %2423 = vmatpush1.msra.mxu0 0.0
  %2424 = vmatprep.subr.mxu0 0.0
  %2425 = vmatpush1.msra.mxu0 0.0
  %2426 = vmatprep.subr.mxu0 0.0
  %2427 = vmatpush1.msra.mxu0 0.0
  %2428 = vmatprep.subr.mxu0 0.0
  %2429 = vmatpush1.msra.mxu0 0.0
  %2430 = vmatprep.subr.mxu0 0.0
  %2431 = vmatpush1.msra.mxu0 0.0
  %2432 = vmatprep.subr.mxu0 0.0
  %2433 = vmatpush1.msra.mxu0 0.0
  %2434 = vmatprep.mubr.f32.mxu0 0.0
  %2435 = vmatmul.mubr.f32.gmra.mrb[0].mxu0 %v2368
  %v2436 = vpop.f32.mrb[0].mxu0
  %v2437 = vadd.f32 0.0, %v2436
  %v2438 = vpop.f32.mrb[0].mxu0
  %2439 = vdwg.mxu0
  %v2441 = vrot.slane %v1833, 4
  %2442 = vrot.lane.b32.xlu0 %v2441, 32
  %v2443 = vpop.permute.xlu0 %2442
  %v2444 = vsel %vm159, %v2443, 0
  %2446 = vmatprep.subr.mxu0 0.0
  %2447 = vmatpush1.msra.mxu0 %v2361
  %2448 = vmatprep.subr.mxu0 0.0
  %2449 = vmatpush1.msra.mxu0 %v2362
  %2450 = vmatprep.subr.mxu0 0.0
  %2451 = vmatpush1.msra.mxu0 %v2363
  %2452 = vmatprep.subr.mxu0 0.0
  %2453 = vmatpush1.msra.mxu0 %v2364
  %2454 = vmatprep.subr.mxu0 0.0
  %2455 = vmatpush1.msra.mxu0 0.0
  %2456 = vmatprep.subr.mxu0 0.0
  %2457 = vmatpush1.msra.mxu0 0.0
  %2458 = vmatprep.subr.mxu0 0.0
  %2459 = vmatpush1.msra.mxu0 0.0
  %2460 = vmatprep.subr.mxu0 0.0
  %2461 = vmatpush1.msra.mxu0 0.0
  %2462 = vmatprep.subr.mxu0 0.0
  %2463 = vmatpush1.msra.mxu0 0.0
  %2464 = vmatprep.subr.mxu0 0.0
  %2465 = vmatpush1.msra.mxu0 0.0
  %2466 = vmatprep.subr.mxu0 0.0
  %2467 = vmatpush1.msra.mxu0 0.0
  %2468 = vmatprep.subr.mxu0 0.0
  %2469 = vmatpush1.msra.mxu0 0.0
  %2470 = vmatprep.subr.mxu0 0.0
  %2471 = vmatpush1.msra.mxu0 0.0
  %2472 = vmatprep.subr.mxu0 0.0
  %2473 = vmatpush1.msra.mxu0 0.0
  %2474 = vmatprep.subr.mxu0 0.0
  %2475 = vmatpush1.msra.mxu0 0.0
  %2476 = vmatprep.subr.mxu0 0.0
  %2477 = vmatpush1.msra.mxu0 0.0
  %2478 = vmatprep.subr.mxu0 0.0
  %2479 = vmatpush1.msra.mxu0 0.0
  %2480 = vmatprep.subr.mxu0 0.0
  %2481 = vmatpush1.msra.mxu0 0.0
  %2482 = vmatprep.subr.mxu0 0.0
  %2483 = vmatpush1.msra.mxu0 0.0
  %2484 = vmatprep.subr.mxu0 0.0
  %2485 = vmatpush1.msra.mxu0 0.0
  %2486 = vmatprep.subr.mxu0 0.0
  %2487 = vmatpush1.msra.mxu0 0.0
  %2488 = vmatprep.subr.mxu0 0.0
  %2489 = vmatpush1.msra.mxu0 0.0
  %2490 = vmatprep.subr.mxu0 0.0
  %2491 = vmatpush1.msra.mxu0 0.0
  %2492 = vmatprep.subr.mxu0 0.0
  %2493 = vmatpush1.msra.mxu0 0.0
  %2494 = vmatprep.subr.mxu0 0.0
  %2495 = vmatpush1.msra.mxu0 0.0
  %2496 = vmatprep.subr.mxu0 0.0
  %2497 = vmatpush1.msra.mxu0 0.0
  %2498 = vmatprep.subr.mxu0 0.0
  %2499 = vmatpush1.msra.mxu0 0.0
  %2500 = vmatprep.subr.mxu0 0.0
  %2501 = vmatpush1.msra.mxu0 0.0
  %2502 = vmatprep.subr.mxu0 0.0
  %2503 = vmatpush1.msra.mxu0 0.0
  %2504 = vmatprep.subr.mxu0 0.0
  %2505 = vmatpush1.msra.mxu0 0.0
  %2506 = vmatprep.subr.mxu0 0.0
  %2507 = vmatpush1.msra.mxu0 0.0
  %2508 = vmatprep.subr.mxu0 0.0
  %2509 = vmatpush1.msra.mxu0 0.0
  %2510 = vmatprep.mubr.f32.mxu0 0.0
  %2511 = vmatmul.mubr.f32.gmra.mrb[0].mxu0 %v2444
  %v2512 = vpop.f32.mrb[0].mxu0
  %v2513 = vadd.f32 %v2437, %v2512
  %v2514 = vpop.f32.mrb[0].mxu0
  %2515 = vdwg.mxu0
  %v2516 = vlaneseq
  %v2517 = vshrl.u32 %v2516, 7
  %v2518 = vsub.s32 4, %v2517
  %v2519 = vrot.slane %v11, %v2518
  %v2520 = vadd.f32 %v2513, %v2519
  %v2521 = vmax.f32 %v2520, 0.0
  %v2522 = vld [vmem:[%s0 + $0x28] sm:$0xff]
  %v2523 = vld [vmem:[%s0 + $0x30] sm:$0xff]
  %v2524 = vld [vmem:[%s0 + $0x38] sm:$0xff]
  %v2525 = vld [vmem:[%s0 + $0x40] sm:$0xff]
  %v2526 = vlaneseq
  %v2527 = vshrl.u32 %v2526, 7
  %v2528 = vsub.s32 1, %v2527
  %v2529 = vrot.slane %v11, %v2528
  %v2531 = vsel %vm159, %v2521, 0
  %2533 = vmatprep.subr.mxu0 0.0
  %2534 = vmatpush1.msra.mxu0 %v2522
  %2535 = vmatprep.subr.mxu0 0.0
  %2536 = vmatpush1.msra.mxu0 %v2523
  %2537 = vmatprep.subr.mxu0 0.0
  %2538 = vmatpush1.msra.mxu0 %v2524
  %2539 = vmatprep.subr.mxu0 0.0
  %2540 = vmatpush1.msra.mxu0 %v2525
  %2541 = vmatprep.subr.mxu0 0.0
  %2542 = vmatpush1.msra.mxu0 0.0
  %2543 = vmatprep.subr.mxu0 0.0
  %2544 = vmatpush1.msra.mxu0 0.0
  %2545 = vmatprep.subr.mxu0 0.0
  %2546 = vmatpush1.msra.mxu0 0.0
  %2547 = vmatprep.subr.mxu0 0.0
  %2548 = vmatpush1.msra.mxu0 0.0
  %2549 = vmatprep.subr.mxu0 0.0
  %2550 = vmatpush1.msra.mxu0 0.0
  %2551 = vmatprep.subr.mxu0 0.0
  %2552 = vmatpush1.msra.mxu0 0.0
  %2553 = vmatprep.subr.mxu0 0.0
  %2554 = vmatpush1.msra.mxu0 0.0
  %2555 = vmatprep.subr.mxu0 0.0
  %2556 = vmatpush1.msra.mxu0 0.0
  %2557 = vmatprep.subr.mxu0 0.0
  %2558 = vmatpush1.msra.mxu0 0.0
  %2559 = vmatprep.subr.mxu0 0.0
  %2560 = vmatpush1.msra.mxu0 0.0
  %2561 = vmatprep.subr.mxu0 0.0
  %2562 = vmatpush1.msra.mxu0 0.0
  %2563 = vmatprep.subr.mxu0 0.0
  %2564 = vmatpush1.msra.mxu0 0.0
  %2565 = vmatprep.subr.mxu0 0.0
  %2566 = vmatpush1.msra.mxu0 0.0
  %2567 = vmatprep.subr.mxu0 0.0
  %2568 = vmatpush1.msra.mxu0 0.0
  %2569 = vmatprep.subr.mxu0 0.0
  %2570 = vmatpush1.msra.mxu0 0.0
  %2571 = vmatprep.subr.mxu0 0.0
  %2572 = vmatpush1.msra.mxu0 0.0
  %2573 = vmatprep.subr.mxu0 0.0
  %2574 = vmatpush1.msra.mxu0 0.0
  %2575 = vmatprep.subr.mxu0 0.0
  %2576 = vmatpush1.msra.mxu0 0.0
  %2577 = vmatprep.subr.mxu0 0.0
  %2578 = vmatpush1.msra.mxu0 0.0
  %2579 = vmatprep.subr.mxu0 0.0
  %2580 = vmatpush1.msra.mxu0 0.0
  %2581 = vmatprep.subr.mxu0 0.0
  %2582 = vmatpush1.msra.mxu0 0.0
  %2583 = vmatprep.subr.mxu0 0.0
  %2584 = vmatpush1.msra.mxu0 0.0
  %2585 = vmatprep.subr.mxu0 0.0
  %2586 = vmatpush1.msra.mxu0 0.0
  %2587 = vmatprep.subr.mxu0 0.0
  %2588 = vmatpush1.msra.mxu0 0.0
  %2589 = vmatprep.subr.mxu0 0.0
  %2590 = vmatpush1.msra.mxu0 0.0
  %2591 = vmatprep.subr.mxu0 0.0
  %2592 = vmatpush1.msra.mxu0 0.0
  %2593 = vmatprep.subr.mxu0 0.0
  %2594 = vmatpush1.msra.mxu0 0.0
  %2595 = vmatprep.subr.mxu0 0.0
  %2596 = vmatpush1.msra.mxu0 0.0
  %2597 = vmatprep.mubr.f32.mxu0 0.0
  %2598 = vmatmul.mubr.f32.gmra.mrb[0].mxu0 %v2531
  %v2599 = vpop.f32.mrb[0].mxu0
  %v2600 = vadd.f32 %v2529, %v2599
  %v2601 = vpop.f32.mrb[0].mxu0
  %2602 = vdwg.mxu0
  %v2603 = vld [vmem:[%s0 + $0x48] sm:$0xff]
  %v2604 = vld [vmem:[%s0 + $0x50] sm:$0xff]
  %v2605 = vld [vmem:[%s0 + $0x58] sm:$0xff]
  %v2606 = vld [vmem:[%s0 + $0x60] sm:$0xff]
  %2607 = vmatprep.subr.mxu0 0.0
  %2608 = vmatpush1.msra.mxu0 %v2603
  %2609 = vmatprep.subr.mxu0 0.0
  %2610 = vmatpush1.msra.mxu0 %v2604
  %2611 = vmatprep.subr.mxu0 0.0
  %2612 = vmatpush1.msra.mxu0 %v2605
  %2613 = vmatprep.subr.mxu0 0.0
  %2614 = vmatpush1.msra.mxu0 %v2606
  %2615 = vmatprep.subr.mxu0 0.0
  %2616 = vmatpush1.msra.mxu0 0.0
  %2617 = vmatprep.subr.mxu0 0.0
  %2618 = vmatpush1.msra.mxu0 0.0
  %2619 = vmatprep.subr.mxu0 0.0
  %2620 = vmatpush1.msra.mxu0 0.0
  %2621 = vmatprep.subr.mxu0 0.0
  %2622 = vmatpush1.msra.mxu0 0.0
  %2623 = vmatprep.subr.mxu0 0.0
  %2624 = vmatpush1.msra.mxu0 0.0
  %2625 = vmatprep.subr.mxu0 0.0
  %2626 = vmatpush1.msra.mxu0 0.0
  %2627 = vmatprep.subr.mxu0 0.0
  %2628 = vmatpush1.msra.mxu0 0.0
  %2629 = vmatprep.subr.mxu0 0.0
  %2630 = vmatpush1.msra.mxu0 0.0
  %2631 = vmatprep.subr.mxu0 0.0
  %2632 = vmatpush1.msra.mxu0 0.0
  %2633 = vmatprep.subr.mxu0 0.0
  %2634 = vmatpush1.msra.mxu0 0.0
  %2635 = vmatprep.subr.mxu0 0.0
  %2636 = vmatpush1.msra.mxu0 0.0
  %2637 = vmatprep.subr.mxu0 0.0
  %2638 = vmatpush1.msra.mxu0 0.0
  %2639 = vmatprep.subr.mxu0 0.0
  %2640 = vmatpush1.msra.mxu0 0.0
  %2641 = vmatprep.subr.mxu0 0.0
  %2642 = vmatpush1.msra.mxu0 0.0
  %2643 = vmatprep.subr.mxu0 0.0
  %2644 = vmatpush1.msra.mxu0 0.0
  %2645 = vmatprep.subr.mxu0 0.0
  %2646 = vmatpush1.msra.mxu0 0.0
  %2647 = vmatprep.subr.mxu0 0.0
  %2648 = vmatpush1.msra.mxu0 0.0
  %2649 = vmatprep.subr.mxu0 0.0
  %2650 = vmatpush1.msra.mxu0 0.0
  %2651 = vmatprep.subr.mxu0 0.0
  %2652 = vmatpush1.msra.mxu0 0.0
  %2653 = vmatprep.subr.mxu0 0.0
  %2654 = vmatpush1.msra.mxu0 0.0
  %2655 = vmatprep.subr.mxu0 0.0
  %2656 = vmatpush1.msra.mxu0 0.0
  %2657 = vmatprep.subr.mxu0 0.0
  %2658 = vmatpush1.msra.mxu0 0.0
  %2659 = vmatprep.subr.mxu0 0.0
  %2660 = vmatpush1.msra.mxu0 0.0
  %2661 = vmatprep.subr.mxu0 0.0
  %2662 = vmatpush1.msra.mxu0 0.0
  %2663 = vmatprep.subr.mxu0 0.0
  %2664 = vmatpush1.msra.mxu0 0.0
  %2665 = vmatprep.subr.mxu0 0.0
  %2666 = vmatpush1.msra.mxu0 0.0
  %2667 = vmatprep.subr.mxu0 0.0
  %2668 = vmatpush1.msra.mxu0 0.0
  %2669 = vmatprep.subr.mxu0 0.0
  %2670 = vmatpush1.msra.mxu0 0.0
  %2671 = vmatprep.mubr.f32.mxu0 0.0
  %2672 = vmatmul.mubr.f32.gmra.mrb[0].mxu0 %v161
  %v2673 = vpop.f32.mrb[0].mxu0
  %v2674 = vadd.f32 0.0, %v2673
  %v2675 = vpop.f32.mrb[0].mxu0
  %2676 = vdwg.mxu0
  %v2677 = vadd.f32 %v2600, %v2674
  %v2678 = vxor.u32 %v2677, 2147483648
  %v2679 = vmul.f32 %v2678, 1.442695
  %v2680 = vpow.pop %v2679
  %v2681 = vadd.f32 %v2680, 1.0
  %v2682 = vrcp.pop %v2681
  %v2683 = vmul.f32 1.0, %v2682
  %v2684 = vtanh.pop %v2677
  %v2685 = vmul.f32 %v2683, 0.0
  %2687 = vrot.lane.b32.xlu0 %v2684, 64
  %v2688 = vpop.permute.xlu0 %2687
  %v2690 = vmul.f32 %v2683, %v2688
  %2692 = vrot.lane.b32.xlu0 %v2690, 32
  %v2693 = vpop.permute.xlu0 %2692
  %v2695 = vadd.f32 %v2685, %v2693
  %v2696 = vtanh.pop %v2695
  %2698 = vrot.lane.b32.xlu0 %v2696, 64
  %v2699 = vpop.permute.xlu0 %2698
  %v2701 = vmul.f32 %v2683, %v2699
  %2703 = vrot.lane.b32.xlu0 %v2701, 32
  %v2704 = vpop.permute.xlu0 %2703
  %v2705 = vsel %vm159, %v2704, 0
  %2707 = vmatprep.subr.mxu0 0.0
  %2708 = vmatpush1.msra.mxu0 %v2603
  %2709 = vmatprep.subr.mxu0 0.0
  %2710 = vmatpush1.msra.mxu0 %v2604
  %2711 = vmatprep.subr.mxu0 0.0
  %2712 = vmatpush1.msra.mxu0 %v2605
  %2713 = vmatprep.subr.mxu0 0.0
  %2714 = vmatpush1.msra.mxu0 %v2606
  %2715 = vmatprep.subr.mxu0 0.0
  %2716 = vmatpush1.msra.mxu0 0.0
  %2717 = vmatprep.subr.mxu0 0.0
  %2718 = vmatpush1.msra.mxu0 0.0
  %2719 = vmatprep.subr.mxu0 0.0
  %2720 = vmatpush1.msra.mxu0 0.0
  %2721 = vmatprep.subr.mxu0 0.0
  %2722 = vmatpush1.msra.mxu0 0.0
  %2723 = vmatprep.subr.mxu0 0.0
  %2724 = vmatpush1.msra.mxu0 0.0
  %2725 = vmatprep.subr.mxu0 0.0
  %2726 = vmatpush1.msra.mxu0 0.0
  %2727 = vmatprep.subr.mxu0 0.0
  %2728 = vmatpush1.msra.mxu0 0.0
  %2729 = vmatprep.subr.mxu0 0.0
  %2730 = vmatpush1.msra.mxu0 0.0
  %2731 = vmatprep.subr.mxu0 0.0
  %2732 = vmatpush1.msra.mxu0 0.0
  %2733 = vmatprep.subr.mxu0 0.0
  %2734 = vmatpush1.msra.mxu0 0.0
  %2735 = vmatprep.subr.mxu0 0.0
  %2736 = vmatpush1.msra.mxu0 0.0
  %2737 = vmatprep.subr.mxu0 0.0
  %2738 = vmatpush1.msra.mxu0 0.0
  %2739 = vmatprep.subr.mxu0 0.0
  %2740 = vmatpush1.msra.mxu0 0.0
  %2741 = vmatprep.subr.mxu0 0.0
  %2742 = vmatpush1.msra.mxu0 0.0
  %2743 = vmatprep.subr.mxu0 0.0
  %2744 = vmatpush1.msra.mxu0 0.0
  %2745 = vmatprep.subr.mxu0 0.0
  %2746 = vmatpush1.msra.mxu0 0.0
  %2747 = vmatprep.subr.mxu0 0.0
  %2748 = vmatpush1.msra.mxu0 0.0
  %2749 = vmatprep.subr.mxu0 0.0
  %2750 = vmatpush1.msra.mxu0 0.0
  %2751 = vmatprep.subr.mxu0 0.0
  %2752 = vmatpush1.msra.mxu0 0.0
  %2753 = vmatprep.subr.mxu0 0.0
  %2754 = vmatpush1.msra.mxu0 0.0
  %2755 = vmatprep.subr.mxu0 0.0
  %2756 = vmatpush1.msra.mxu0 0.0
  %2757 = vmatprep.subr.mxu0 0.0
  %2758 = vmatpush1.msra.mxu0 0.0
  %2759 = vmatprep.subr.mxu0 0.0
  %2760 = vmatpush1.msra.mxu0 0.0
  %2761 = vmatprep.subr.mxu0 0.0
  %2762 = vmatpush1.msra.mxu0 0.0
  %2763 = vmatprep.subr.mxu0 0.0
  %2764 = vmatpush1.msra.mxu0 0.0
  %2765 = vmatprep.subr.mxu0 0.0
  %2766 = vmatpush1.msra.mxu0 0.0
  %2767 = vmatprep.subr.mxu0 0.0
  %2768 = vmatpush1.msra.mxu0 0.0
  %2769 = vmatprep.subr.mxu0 0.0
  %2770 = vmatpush1.msra.mxu0 0.0
  %2771 = vmatprep.mubr.f32.mxu0 0.0
  %2772 = vmatmul.mubr.f32.gmra.mrb[0].mxu0 %v2705
  %v2773 = vpop.f32.mrb[0].mxu0
  %v2774 = vadd.f32 0.0, %v2773
  %v2775 = vpop.f32.mrb[0].mxu0
  %2776 = vdwg.mxu0
  %v2778 = vrot.slane %v2774, 7
  %v2780 = vadd.f32 %v2600, %v2778
  %v2781 = vxor.u32 %v2780, 2147483648
  %v2782 = vmul.f32 %v2781, 1.442695
  %v2783 = vpow.pop %v2782
  %v2784 = vadd.f32 %v2783, 1.0
  %v2785 = vrcp.pop %v2784
  %v2786 = vmul.f32 1.0, %v2785
  %v2787 = vtanh.pop %v2780
  %v2789 = vrot.slane %v2695, 7
  %v2791 = vmul.f32 %v2786, %v2789
  %2793 = vrot.lane.b32.xlu0 %v2787, 64
  %v2794 = vpop.permute.xlu0 %2793
  %v2796 = vmul.f32 %v2786, %v2794
  %2798 = vrot.lane.b32.xlu0 %v2796, 32
  %v2799 = vpop.permute.xlu0 %2798
  %v2801 = vadd.f32 %v2791, %v2799
  %v2802 = vtanh.pop %v2801
  %2804 = vrot.lane.b32.xlu0 %v2802, 64
  %v2805 = vpop.permute.xlu0 %2804
  %v2807 = vmul.f32 %v2786, %v2805
  %v2809 = vrot.slane %v2807, 1
  %2810 = vrot.lane.b32.xlu0 %v2809, 32
  %v2811 = vpop.permute.xlu0 %2810
  %v2812 = vsel %vm159, %v2811, 0
  %2814 = vmatprep.subr.mxu0 0.0
  %2815 = vmatpush1.msra.mxu0 %v2603
  %2816 = vmatprep.subr.mxu0 0.0
  %2817 = vmatpush1.msra.mxu0 %v2604
  %2818 = vmatprep.subr.mxu0 0.0
  %2819 = vmatpush1.msra.mxu0 %v2605
  %2820 = vmatprep.subr.mxu0 0.0
  %2821 = vmatpush1.msra.mxu0 %v2606
  %2822 = vmatprep.subr.mxu0 0.0
  %2823 = vmatpush1.msra.mxu0 0.0
  %2824 = vmatprep.subr.mxu0 0.0
  %2825 = vmatpush1.msra.mxu0 0.0
  %2826 = vmatprep.subr.mxu0 0.0
  %2827 = vmatpush1.msra.mxu0 0.0
  %2828 = vmatprep.subr.mxu0 0.0
  %2829 = vmatpush1.msra.mxu0 0.0
  %2830 = vmatprep.subr.mxu0 0.0
  %2831 = vmatpush1.msra.mxu0 0.0
  %2832 = vmatprep.subr.mxu0 0.0
  %2833 = vmatpush1.msra.mxu0 0.0
  %2834 = vmatprep.subr.mxu0 0.0
  %2835 = vmatpush1.msra.mxu0 0.0
  %2836 = vmatprep.subr.mxu0 0.0
  %2837 = vmatpush1.msra.mxu0 0.0
  %2838 = vmatprep.subr.mxu0 0.0
  %2839 = vmatpush1.msra.mxu0 0.0
  %2840 = vmatprep.subr.mxu0 0.0
  %2841 = vmatpush1.msra.mxu0 0.0
  %2842 = vmatprep.subr.mxu0 0.0
  %2843 = vmatpush1.msra.mxu0 0.0
  %2844 = vmatprep.subr.mxu0 0.0
  %2845 = vmatpush1.msra.mxu0 0.0
  %2846 = vmatprep.subr.mxu0 0.0
  %2847 = vmatpush1.msra.mxu0 0.0
  %2848 = vmatprep.subr.mxu0 0.0
  %2849 = vmatpush1.msra.mxu0 0.0
  %2850 = vmatprep.subr.mxu0 0.0
  %2851 = vmatpush1.msra.mxu0 0.0
  %2852 = vmatprep.subr.mxu0 0.0
  %2853 = vmatpush1.msra.mxu0 0.0
  %2854 = vmatprep.subr.mxu0 0.0
  %2855 = vmatpush1.msra.mxu0 0.0
  %2856 = vmatprep.subr.mxu0 0.0
  %2857 = vmatpush1.msra.mxu0 0.0
  %2858 = vmatprep.subr.mxu0 0.0
  %2859 = vmatpush1.msra.mxu0 0.0
  %2860 = vmatprep.subr.mxu0 0.0
  %2861 = vmatpush1.msra.mxu0 0.0
  %2862 = vmatprep.subr.mxu0 0.0
  %2863 = vmatpush1.msra.mxu0 0.0
  %2864 = vmatprep.subr.mxu0 0.0
  %2865 = vmatpush1.msra.mxu0 0.0
  %2866 = vmatprep.subr.mxu0 0.0
  %2867 = vmatpush1.msra.mxu0 0.0
  %2868 = vmatprep.subr.mxu0 0.0
  %2869 = vmatpush1.msra.mxu0 0.0
  %2870 = vmatprep.subr.mxu0 0.0
  %2871 = vmatpush1.msra.mxu0 0.0
  %2872 = vmatprep.subr.mxu0 0.0
  %2873 = vmatpush1.msra.mxu0 0.0
  %2874 = vmatprep.subr.mxu0 0.0
  %2875 = vmatpush1.msra.mxu0 0.0
  %2876 = vmatprep.subr.mxu0 0.0
  %2877 = vmatpush1.msra.mxu0 0.0
  %2878 = vmatprep.mubr.f32.mxu0 0.0
  %2879 = vmatmul.mubr.f32.gmra.mrb[0].mxu0 %v2812
  %v2880 = vpop.f32.mrb[0].mxu0
  %v2881 = vadd.f32 0.0, %v2880
  %v2882 = vpop.f32.mrb[0].mxu0
  %2883 = vdwg.mxu0
  %v2885 = vrot.slane %v2881, 6
  %v2887 = vadd.f32 %v2600, %v2885
  %v2888 = vxor.u32 %v2887, 2147483648
  %v2889 = vmul.f32 %v2888, 1.442695
  %v2890 = vpow.pop %v2889
  %v2891 = vadd.f32 %v2890, 1.0
  %v2892 = vrcp.pop %v2891
  %v2893 = vmul.f32 1.0, %v2892
  %v2894 = vtanh.pop %v2887
  %v2896 = vrot.slane %v2801, 7
  %v2898 = vmul.f32 %v2893, %v2896
  %2900 = vrot.lane.b32.xlu0 %v2894, 64
  %v2901 = vpop.permute.xlu0 %2900
  %v2903 = vmul.f32 %v2893, %v2901
  %2905 = vrot.lane.b32.xlu0 %v2903, 32
  %v2906 = vpop.permute.xlu0 %2905
  %v2908 = vadd.f32 %v2898, %v2906
  %v2909 = vtanh.pop %v2908
  %2911 = vrot.lane.b32.xlu0 %v2909, 64
  %v2912 = vpop.permute.xlu0 %2911
  %v2914 = vmul.f32 %v2893, %v2912
  %v2916 = vrot.slane %v2914, 2
  %2917 = vrot.lane.b32.xlu0 %v2916, 32
  %v2918 = vpop.permute.xlu0 %2917
  %v2919 = vsel %vm159, %v2918, 0
  %2921 = vmatprep.subr.mxu0 0.0
  %2922 = vmatpush1.msra.mxu0 %v2603
  %2923 = vmatprep.subr.mxu0 0.0
  %2924 = vmatpush1.msra.mxu0 %v2604
  %2925 = vmatprep.subr.mxu0 0.0
  %2926 = vmatpush1.msra.mxu0 %v2605
  %2927 = vmatprep.subr.mxu0 0.0
  %2928 = vmatpush1.msra.mxu0 %v2606
  %2929 = vmatprep.subr.mxu0 0.0
  %2930 = vmatpush1.msra.mxu0 0.0
  %2931 = vmatprep.subr.mxu0 0.0
  %2932 = vmatpush1.msra.mxu0 0.0
  %2933 = vmatprep.subr.mxu0 0.0
  %2934 = vmatpush1.msra.mxu0 0.0
  %2935 = vmatprep.subr.mxu0 0.0
  %2936 = vmatpush1.msra.mxu0 0.0
  %2937 = vmatprep.subr.mxu0 0.0
  %2938 = vmatpush1.msra.mxu0 0.0
  %2939 = vmatprep.subr.mxu0 0.0
  %2940 = vmatpush1.msra.mxu0 0.0
  %2941 = vmatprep.subr.mxu0 0.0
  %2942 = vmatpush1.msra.mxu0 0.0
  %2943 = vmatprep.subr.mxu0 0.0
  %2944 = vmatpush1.msra.mxu0 0.0
  %2945 = vmatprep.subr.mxu0 0.0
  %2946 = vmatpush1.msra.mxu0 0.0
  %2947 = vmatprep.subr.mxu0 0.0
  %2948 = vmatpush1.msra.mxu0 0.0
  %2949 = vmatprep.subr.mxu0 0.0
  %2950 = vmatpush1.msra.mxu0 0.0
  %2951 = vmatprep.subr.mxu0 0.0
  %2952 = vmatpush1.msra.mxu0 0.0
  %2953 = vmatprep.subr.mxu0 0.0
  %2954 = vmatpush1.msra.mxu0 0.0
  %2955 = vmatprep.subr.mxu0 0.0
  %2956 = vmatpush1.msra.mxu0 0.0
  %2957 = vmatprep.subr.mxu0 0.0
  %2958 = vmatpush1.msra.mxu0 0.0
  %2959 = vmatprep.subr.mxu0 0.0
  %2960 = vmatpush1.msra.mxu0 0.0
  %2961 = vmatprep.subr.mxu0 0.0
  %2962 = vmatpush1.msra.mxu0 0.0
  %2963 = vmatprep.subr.mxu0 0.0
  %2964 = vmatpush1.msra.mxu0 0.0
  %2965 = vmatprep.subr.mxu0 0.0
  %2966 = vmatpush1.msra.mxu0 0.0
  %2967 = vmatprep.subr.mxu0 0.0
  %2968 = vmatpush1.msra.mxu0 0.0
  %2969 = vmatprep.subr.mxu0 0.0
  %2970 = vmatpush1.msra.mxu0 0.0
  %2971 = vmatprep.subr.mxu0 0.0
  %2972 = vmatpush1.msra.mxu0 0.0
  %2973 = vmatprep.subr.mxu0 0.0
  %2974 = vmatpush1.msra.mxu0 0.0
  %2975 = vmatprep.subr.mxu0 0.0
  %2976 = vmatpush1.msra.mxu0 0.0
  %2977 = vmatprep.subr.mxu0 0.0
  %2978 = vmatpush1.msra.mxu0 0.0
  %2979 = vmatprep.subr.mxu0 0.0
  %2980 = vmatpush1.msra.mxu0 0.0
  %2981 = vmatprep.subr.mxu0 0.0
  %2982 = vmatpush1.msra.mxu0 0.0
  %2983 = vmatprep.subr.mxu0 0.0
  %2984 = vmatpush1.msra.mxu0 0.0
  %2985 = vmatprep.mubr.f32.mxu0 0.0
  %2986 = vmatmul.mubr.f32.gmra.mrb[0].mxu0 %v2919
  %v2987 = vpop.f32.mrb[0].mxu0
  %v2988 = vadd.f32 0.0, %v2987
  %v2989 = vpop.f32.mrb[0].mxu0
  %2990 = vdwg.mxu0
  %v2992 = vrot.slane %v2988, 5
  %v2994 = vadd.f32 %v2600, %v2992
  %v2995 = vxor.u32 %v2994, 2147483648
  %v2996 = vmul.f32 %v2995, 1.442695
  %v2997 = vpow.pop %v2996
  %v2998 = vadd.f32 %v2997, 1.0
  %v2999 = vrcp.pop %v2998
  %v3000 = vmul.f32 1.0, %v2999
  %v3001 = vtanh.pop %v2994
  %v3003 = vrot.slane %v2908, 7
  %v3005 = vmul.f32 %v3000, %v3003
  %3007 = vrot.lane.b32.xlu0 %v3001, 64
  %v3008 = vpop.permute.xlu0 %3007
  %v3010 = vmul.f32 %v3000, %v3008
  %3012 = vrot.lane.b32.xlu0 %v3010, 32
  %v3013 = vpop.permute.xlu0 %3012
  %v3015 = vadd.f32 %v3005, %v3013
  %v3016 = vtanh.pop %v3015
  %3018 = vrot.lane.b32.xlu0 %v3016, 64
  %v3019 = vpop.permute.xlu0 %3018
  %v3021 = vmul.f32 %v3000, %v3019
  %v3022 = vld [vmem:[%s0 + $0x68] sm:$0xff]
  %v3023 = vld [vmem:[%s0 + $0x70] sm:$0xff]
  %v3024 = vld [vmem:[%s0 + $0x78] sm:$0xff]
  %v3025 = vld [vmem:[%s0 + $0x80] sm:$0xff]
  %v3027 = vrot.slane %v3021, 3
  %3028 = vrot.lane.b32.xlu0 %v3027, 32
  %v3029 = vpop.permute.xlu0 %3028
  %v3031 = vrot.slane %v11, 5
  %v3033 = vsel %vm159, %v3029, 0
  %3035 = vmatprep.subr.mxu0 0.0
  %3036 = vmatpush1.msra.mxu0 %v3022
  %3037 = vmatprep.subr.mxu0 0.0
  %3038 = vmatpush1.msra.mxu0 %v3023
  %3039 = vmatprep.subr.mxu0 0.0
  %3040 = vmatpush1.msra.mxu0 %v3024
  %3041 = vmatprep.subr.mxu0 0.0
  %3042 = vmatpush1.msra.mxu0 %v3025
  %3043 = vmatprep.subr.mxu0 0.0
  %3044 = vmatpush1.msra.mxu0 0.0
  %3045 = vmatprep.subr.mxu0 0.0
  %3046 = vmatpush1.msra.mxu0 0.0
  %3047 = vmatprep.subr.mxu0 0.0
  %3048 = vmatpush1.msra.mxu0 0.0
  %3049 = vmatprep.subr.mxu0 0.0
  %3050 = vmatpush1.msra.mxu0 0.0
  %3051 = vmatprep.subr.mxu0 0.0
  %3052 = vmatpush1.msra.mxu0 0.0
  %3053 = vmatprep.subr.mxu0 0.0
  %3054 = vmatpush1.msra.mxu0 0.0
  %3055 = vmatprep.subr.mxu0 0.0
  %3056 = vmatpush1.msra.mxu0 0.0
  %3057 = vmatprep.subr.mxu0 0.0
  %3058 = vmatpush1.msra.mxu0 0.0
  %3059 = vmatprep.subr.mxu0 0.0
  %3060 = vmatpush1.msra.mxu0 0.0
  %3061 = vmatprep.subr.mxu0 0.0
  %3062 = vmatpush1.msra.mxu0 0.0
  %3063 = vmatprep.subr.mxu0 0.0
  %3064 = vmatpush1.msra.mxu0 0.0
  %3065 = vmatprep.subr.mxu0 0.0
  %3066 = vmatpush1.msra.mxu0 0.0
  %3067 = vmatprep.subr.mxu0 0.0
  %3068 = vmatpush1.msra.mxu0 0.0
  %3069 = vmatprep.subr.mxu0 0.0
  %3070 = vmatpush1.msra.mxu0 0.0
  %3071 = vmatprep.subr.mxu0 0.0
  %3072 = vmatpush1.msra.mxu0 0.0
  %3073 = vmatprep.subr.mxu0 0.0
  %3074 = vmatpush1.msra.mxu0 0.0
  %3075 = vmatprep.subr.mxu0 0.0
  %3076 = vmatpush1.msra.mxu0 0.0
  %3077 = vmatprep.subr.mxu0 0.0
  %3078 = vmatpush1.msra.mxu0 0.0
  %3079 = vmatprep.subr.mxu0 0.0
  %3080 = vmatpush1.msra.mxu0 0.0
  %3081 = vmatprep.subr.mxu0 0.0
  %3082 = vmatpush1.msra.mxu0 0.0
  %3083 = vmatprep.subr.mxu0 0.0
  %3084 = vmatpush1.msra.mxu0 0.0
  %3085 = vmatprep.subr.mxu0 0.0
  %3086 = vmatpush1.msra.mxu0 0.0
  %3087 = vmatprep.subr.mxu0 0.0
  %3088 = vmatpush1.msra.mxu0 0.0
  %3089 = vmatprep.subr.mxu0 0.0
  %3090 = vmatpush1.msra.mxu0 0.0
  %3091 = vmatprep.subr.mxu0 0.0
  %3092 = vmatpush1.msra.mxu0 0.0
  %3093 = vmatprep.subr.mxu0 0.0
  %3094 = vmatpush1.msra.mxu0 0.0
  %3095 = vmatprep.subr.mxu0 0.0
  %3096 = vmatpush1.msra.mxu0 0.0
  %3097 = vmatprep.subr.mxu0 0.0
  %3098 = vmatpush1.msra.mxu0 0.0
  %3099 = vmatprep.mubr.f32.mxu0 0.0
  %3100 = vmatmul.mubr.f32.gmra.mrb[0].mxu0 %v3033
  %v3101 = vpop.f32.mrb[0].mxu0
  %v3102 = vadd.f32 %v3031, %v3101
  %v3103 = vpop.f32.mrb[0].mxu0
  %3104 = vdwg.mxu0
  %vm3105 = vcmask 1040384
  %v3106 = vsel %vm3105, %v3102, -inf
  %3107 = vmax.xlane.f32.xlu0 %v3106
  %v3108 = vpop.xlane.xlu0 %3107
  %v3109 = vsub.f32 %v3102, %v3108
  %v3110 = vmul.f32 %v3109, 1.442695
  %v3111 = vpow.pop %v3110
  %v3112 = vsel %vm3105, %v3111, 0.0
  %3113 = vadd.xlane.f32.xlu0 %v3112
  %v3114 = vpop.xlane.xlu0 %3113
  %v3115 = vlog2.pop %v3114
  %v3116 = vmul.f32 %v3115, 0.6931472
  %v3117 = vsub.f32 %v3109, %v3116
  %v3118 = vlaneseq
  %v3119 = vshrl.u32 %v3118, 7
  %v3120 = vsub.s32 0, %v3119
  %v3121 = vrot.slane %v3117, %v3120
  %3122 = vst [vmem:[%s2] sm:$0xff] %v3121
  // Predicated region
  $region10: #{mvts_forward_pallas.1} parent=0 // pred_check
    _
  $region11: #{mvts_forward_pallas.1} parent=0 // pred_check_branch
    %3124 = sbr.rel (0) target = $region13
  $region12: #{mvts_forward_pallas.1} parent=0 // pred_region
    _
  $region13: #{mvts_forward_pallas.1} parent=0 // pred_fallthru
    _
  // Predicated region
  $region14: #{mvts_forward_pallas.1} parent=0 // pred_check
    _
  $region15: #{mvts_forward_pallas.1} parent=0 // pred_check_branch
    %3126 = sbr.rel (0) target = $region17
  $region16: #{mvts_forward_pallas.1} parent=0 // pred_region
    _
  $region17: #{mvts_forward_pallas.1} parent=0 // pred_fallthru
    _

</llo_original>
